<compile_context>
chip_gen: v6e
topology: v6e:2x2x1
jax: 0.10.0
libtpu: 0.0.40
codegen_flags: <defaults>
</compile_context>

<pallas_src>
import math

import jax
import jax.numpy as jnp
from jax.experimental import pallas as pl
from jax.experimental.pallas import tpu as pltpu

# ---------------- scaled-down ViT config (google/vit topology, shrunk) -------
IMAGE_SIZE = 64
PATCH = 16
NUM_PATCHES = (IMAGE_SIZE // PATCH) ** 2          # 16
SEQ = NUM_PATCHES + 1                             # 17 (CLS + patches)
SEQ_PAD = 24                                      # pad to 3 sublane tiles
HIDDEN = 128                                      # lane-dense
HEADS = 4
HEAD_DIM = HIDDEN // HEADS                        # 32
INTERMEDIATE = 4 * HIDDEN                         # 512
LAYERS = 4                                        # scaled down from 12
NUM_KEYPOINTS = 4
OUT_W = NUM_KEYPOINTS * 2                         # 8
LN_EPS = 1e-12                                    # ViTConfig.layer_norm_eps
ATTN_SCALE = 1.0 / math.sqrt(HEAD_DIM)


def _layernorm(x, g, b):
    """LayerNorm over the last dim (f32 math), affine (1, D) params."""
    mean = jnp.mean(x, axis=-1, keepdims=True)
    xc = x - mean
    var = jnp.mean(xc * xc, axis=-1, keepdims=True)
    return xc * jax.lax.rsqrt(var + LN_EPS) * g + b


# --------------------------- fused ViT kernel --------------------------------
def fused_vit_kernel(patch_ref, wp_ref, posadj_ref,
                     ln1g_ref, ln1b_ref, wqkv_ref, bqkv_ref, wo_ref, bo_ref,
                     ln2g_ref, ln2b_ref, wfc1_ref, bfc1_ref, wfc2_ref, bfc2_ref,
                     lnfg_ref, lnfb_ref, whead_ref, bhead_ref,
                     out_ref, x_scr):
    l = pl.program_id(1)

    # ---- patch embedding + CLS + positional embedding (first layer only) ----
    # posadj folds: CLS embedding (row 0), pos embedding + patch bias
    # (rows 1..16), and zeros for pad rows (exact algebraic identity).
    @pl.when(l == 0)
    def _():
        emb = jnp.dot(patch_ref[...].astype(jnp.bfloat16), wp_ref[...],
                      preferred_element_type=jnp.float32)
        x_scr[...] = emb + posadj_ref[...]

    x = x_scr[...]                                         # (SEQ_PAD, HIDDEN) f32

    # ---- layernorm_before fused into the QKV projection ---------------------
    xn = _layernorm(x, ln1g_ref[...], ln1b_ref[...])
    qkv = jnp.dot(xn.astype(jnp.bfloat16), wqkv_ref[...],
                  preferred_element_type=jnp.float32) + bqkv_ref[...]

    # ---- multi-head self-attention: all heads in one grid step --------------
    col = jax.lax.broadcasted_iota(jnp.int32, (SEQ_PAD, SEQ_PAD), 1)
    kbias = jnp.where(col < SEQ, 0.0, -1e30)               # mask padded key rows
    attn = jnp.zeros((SEQ_PAD, HIDDEN), jnp.float32)
    for h in range(HEADS):                                 # static unroll
        lo = h * HEAD_DIM
        q = (qkv[:, lo:lo + HEAD_DIM] * ATTN_SCALE).astype(jnp.bfloat16)
        k = qkv[:, HIDDEN + lo:HIDDEN + lo + HEAD_DIM].astype(jnp.bfloat16)
        v = qkv[:, 2 * HIDDEN + lo:2 * HIDDEN + lo + HEAD_DIM].astype(jnp.bfloat16)
        s = jax.lax.dot_general(q, k, (((1,), (1,)), ((), ())),
                                preferred_element_type=jnp.float32) + kbias
        m = jnp.max(s, axis=-1, keepdims=True)
        p = jnp.exp(s - m)
        rinv = pl.reciprocal(jnp.sum(p, axis=-1, keepdims=True), approx=True)
        ctx = jnp.dot(p.astype(jnp.bfloat16), v,
                      preferred_element_type=jnp.float32) * rinv
        # ctx_all @ W_o  ==  sum_h ctx_h @ W_o[h*dh:(h+1)*dh, :]  (lane-dense)
        attn = attn + jnp.dot(ctx.astype(jnp.bfloat16),
                              wo_ref[lo:lo + HEAD_DIM, :],
                              preferred_element_type=jnp.float32)
    x = x + attn + bo_ref[...]                             # first residual

    # ---- layernorm_after fused into MLP fc1; fc2 fused with residual --------
    xn2 = _layernorm(x, ln2g_ref[...], ln2b_ref[...])
    h1 = jnp.dot(xn2.astype(jnp.bfloat16), wfc1_ref[...],
                 preferred_element_type=jnp.float32) + bfc1_ref[...]
    # TODO(synk): HF ViT uses exact erf-GELU; tanh approximation used here.
    h1 = jax.nn.gelu(h1, approximate=True)
    x = x + jnp.dot(h1.astype(jnp.bfloat16), wfc2_ref[...],
                    preferred_element_type=jnp.float32) + bfc2_ref[...]
    x_scr[...] = x

    # ---- final LayerNorm + keypoint head + sigmoid*224 (last layer only) ----
    @pl.when(l == LAYERS - 1)
    def _():
        cls = _layernorm(x[0:1, :], lnfg_ref[...], lnfb_ref[...])
        logits = jnp.dot(cls.astype(jnp.bfloat16), whead_ref[...],
                         preferred_element_type=jnp.float32) + bhead_ref[...]
        out_ref[...] = (jax.nn.sigmoid(logits) * 224.0).astype(out_ref.dtype)


# ------------------------------ model glue -----------------------------------
def vit_forward(params, x_nchw):
    b, c = x_nchw.shape[0], x_nchw.shape[1]
    hp = IMAGE_SIZE // PATCH
    x_nchw = x_nchw.astype(jnp.float32)

    # Patch extraction (pure layout); Conv2d(C, HIDDEN, P, stride=P) runs as a
    # GEMM inside the fused kernel.
    p = x_nchw.reshape(b, c, hp, PATCH, hp, PATCH)
    p = p.transpose(0, 2, 4, 1, 3, 5).reshape(b, NUM_PATCHES, c * PATCH * PATCH)

    # Fold the 1->3 channel repeat of the PyTorch forward into the patch
    # weight (all three channel slices see identical pixels -> exact).
    w_patch = params["w_patch"]
    if c == 1:
        w_patch = w_patch.reshape(3, PATCH * PATCH, HIDDEN).sum(axis=0)
    w_patch = w_patch.astype(jnp.bfloat16)
    patch_k = p.shape[-1]

    # Token rows padded to SEQ_PAD: row 0 = CLS slot, rows SEQ.. = pad (zeros).
    patches = jnp.pad(p, ((0, 0), (1, SEQ_PAD - SEQ + 1), (0, 0)))

    # Fold CLS embedding, positional embedding, patch bias and pad-row zeroing
    # into one additive per-row term (applied in the GEMM epilogue).
    pos = params["pos"][0]                                  # (SEQ, HIDDEN)
    pos_adj = jnp.concatenate([
        params["cls"][0] + pos[0:1],                        # CLS + pos[0]
        pos[1:] + params["b_patch"],                        # pos + patch bias
        jnp.zeros((SEQ_PAD - SEQ, HIDDEN), jnp.float32),    # pad rows stay 0
    ], axis=0)

    layer_w = lambda shape: pl.BlockSpec((None,) + shape,
                                         lambda bb, ll: (ll, 0, 0))
    const_w = lambda shape: pl.BlockSpec(shape,
                                         lambda bb, ll: (0,) * len(shape))

    out = pl.pallas_call(
        fused_vit_kernel,
        out_shape=jax.ShapeDtypeStruct((b, 1, OUT_W), jnp.float32),
        grid=(b, LAYERS),
        in_specs=[
            pl.BlockSpec((None, SEQ_PAD, patch_k), lambda bb, ll: (bb, 0, 0)),
            const_w((patch_k, HIDDEN)),                     # w_patch
            const_w((SEQ_PAD, HIDDEN)),                     # pos_adj
            layer_w((1, HIDDEN)),                           # ln1_g
            layer_w((1, HIDDEN)),                           # ln1_b
            layer_w((HIDDEN, 3 * HIDDEN)),                  # w_qkv
            layer_w((1, 3 * HIDDEN)),                       # b_qkv
            layer_w((HIDDEN, HIDDEN)),                      # w_o
            layer_w((1, HIDDEN)),                           # b_o
            layer_w((1, HIDDEN)),                           # ln2_g
            layer_w((1, HIDDEN)),                           # ln2_b
            layer_w((HIDDEN, INTERMEDIATE)),                # w_fc1
            layer_w((1, INTERMEDIATE)),                     # b_fc1
            layer_w((INTERMEDIATE, HIDDEN)),                # w_fc2
            layer_w((1, HIDDEN)),                           # b_fc2
            const_w((1, HIDDEN)),                           # lnf_g
            const_w((1, HIDDEN)),                           # lnf_b
            const_w((HIDDEN, OUT_W)),                       # w_head
            const_w((1, OUT_W)),                            # b_head
        ],
        out_specs=pl.BlockSpec((None, 1, OUT_W), lambda bb, ll: (bb, 0, 0)),
        scratch_shapes=[pltpu.VMEM((SEQ_PAD, HIDDEN), jnp.float32)],
        compiler_params=pltpu.CompilerParams(
            dimension_semantics=("parallel", "arbitrary")),
    )(patches, w_patch, pos_adj,
      params["ln1_g"], params["ln1_b"], params["w_qkv"], params["b_qkv"],
      params["w_o"], params["b_o"], params["ln2_g"], params["ln2_b"],
      params["w_fc1"], params["b_fc1"], params["w_fc2"], params["b_fc2"],
      params["lnf_g"], params["lnf_b"], params["w_head"], params["b_head"])

    return out.reshape(b, NUM_KEYPOINTS, 2)                 # x.view(B, -1, 2)


# ------------------------------ parameters -----------------------------------
def init_params(key):
    # TODO(synk): pretrained google/vit-base weights are not loaded; random
    # init follows the pretrained=False (ViTConfig) topology at scaled sizes.
    # TODO(synk): dropout layers use eval-mode (identity) semantics.
    std = 0.02
    kp, kc, kpos, kh, kqkv, ko, k1, k2 = jax.random.split(key, 8)

    def nrm(k, shape, dtype=jnp.float32):
        return (std * jax.random.normal(k, shape, jnp.float32)).astype(dtype)

    return {
        # patch projection (Conv2d(3, HIDDEN, PATCH, stride=PATCH) as a GEMM)
        "w_patch": nrm(kp, (3 * PATCH * PATCH, HIDDEN)),
        "b_patch": jnp.zeros((1, HIDDEN), jnp.float32),
        "cls": nrm(kc, (1, 1, HIDDEN)),
        "pos": nrm(kpos, (1, SEQ, HIDDEN)),
        # stacked per-layer encoder weights (leading LAYERS dim -> grid axis)
        "ln1_g": jnp.ones((LAYERS, 1, HIDDEN), jnp.float32),
        "ln1_b": jnp.zeros((LAYERS, 1, HIDDEN), jnp.float32),
        "w_qkv": nrm(kqkv, (LAYERS, HIDDEN, 3 * HIDDEN), jnp.bfloat16),
        "b_qkv": jnp.zeros((LAYERS, 1, 3 * HIDDEN), jnp.float32),
        "w_o": nrm(ko, (LAYERS, HIDDEN, HIDDEN), jnp.bfloat16),
        "b_o": jnp.zeros((LAYERS, 1, HIDDEN), jnp.float32),
        "ln2_g": jnp.ones((LAYERS, 1, HIDDEN), jnp.float32),
        "ln2_b": jnp.zeros((LAYERS, 1, HIDDEN), jnp.float32),
        "w_fc1": nrm(k1, (LAYERS, HIDDEN, INTERMEDIATE), jnp.bfloat16),
        "b_fc1": jnp.zeros((LAYERS, 1, INTERMEDIATE), jnp.float32),
        "w_fc2": nrm(k2, (LAYERS, INTERMEDIATE, HIDDEN), jnp.bfloat16),
        "b_fc2": jnp.zeros((LAYERS, 1, HIDDEN), jnp.float32),
        # final encoder LayerNorm + keypoint head
        "lnf_g": jnp.ones((1, HIDDEN), jnp.float32),
        "lnf_b": jnp.zeros((1, HIDDEN), jnp.float32),
        "w_head": nrm(kh, (HIDDEN, OUT_W), jnp.bfloat16),
        "b_head": jnp.zeros((1, OUT_W), jnp.float32),
    }


if __name__ == "__main__":
    key = jax.random.PRNGKey(0)
    kx, kparams = jax.random.split(key)
    x = jax.random.normal(kx, (2, 1, IMAGE_SIZE, IMAGE_SIZE), jnp.float32)
    params = init_params(kparams)

    fwd = jax.jit(vit_forward)
    out = jax.block_until_ready(fwd(params, x))

    assert out.shape == (2, NUM_KEYPOINTS, 2), out.shape
    assert bool(jnp.all(jnp.isfinite(out)))
    assert bool(jnp.all((out >= 0.0) & (out <= 224.0)))
    print("KERNEL_OK")
</pallas_src>

<mosaic_0001>
module attributes {stable_mosaic.version = 11 : i64} {
  func.func @fused_vit_kernel(%arg0: i32, %arg1: i32, %arg2: memref<1x24x256xf32, #tpu.memory_space<vmem>>, %arg3: memref<256x128xbf16, #tpu.memory_space<vmem>>, %arg4: memref<24x128xf32, #tpu.memory_space<vmem>>, %arg5: memref<1x1x128xf32, #tpu.memory_space<vmem>>, %arg6: memref<1x1x128xf32, #tpu.memory_space<vmem>>, %arg7: memref<1x128x384xbf16, #tpu.memory_space<vmem>>, %arg8: memref<1x1x384xf32, #tpu.memory_space<vmem>>, %arg9: memref<1x128x128xbf16, #tpu.memory_space<vmem>>, %arg10: memref<1x1x128xf32, #tpu.memory_space<vmem>>, %arg11: memref<1x1x128xf32, #tpu.memory_space<vmem>>, %arg12: memref<1x1x128xf32, #tpu.memory_space<vmem>>, %arg13: memref<1x128x512xbf16, #tpu.memory_space<vmem>>, %arg14: memref<1x1x512xf32, #tpu.memory_space<vmem>>, %arg15: memref<1x512x128xbf16, #tpu.memory_space<vmem>>, %arg16: memref<1x1x128xf32, #tpu.memory_space<vmem>>, %arg17: memref<1x128xf32, #tpu.memory_space<vmem>>, %arg18: memref<1x128xf32, #tpu.memory_space<vmem>>, %arg19: memref<128x8xbf16, #tpu.memory_space<vmem>>, %arg20: memref<1x8xf32, #tpu.memory_space<vmem>>, %arg21: memref<1x1x8xf32, #tpu.memory_space<vmem>>, %arg22: memref<24x128xf32, #tpu.memory_space<vmem>>) attributes {dimension_semantics = [#tpu.dimension_semantics<parallel>, #tpu.dimension_semantics<arbitrary>], iteration_bounds = array<i64: 2, 4>, scalar_prefetch = 0 : i64, scratch_operands = 1 : i64, tpu.core_type = #tpu.core_type<tc>, window_params = [{transform_indices = @transform_0, window_bounds = array<i64: 1, 24, 256>}, {pipeline_mode = #tpu.pipeline_mode<synchronous>, transform_indices = @transform_1, window_bounds = array<i64: 256, 128>}, {pipeline_mode = #tpu.pipeline_mode<synchronous>, transform_indices = @transform_2, window_bounds = array<i64: 24, 128>}, {transform_indices = @transform_3, window_bounds = array<i64: 1, 1, 128>}, {transform_indices = @transform_4, window_bounds = array<i64: 1, 1, 128>}, {transform_indices = @transform_5, window_bounds = array<i64: 1, 128, 384>}, {transform_indices = @transform_6, window_bounds = array<i64: 1, 1, 384>}, {transform_indices = @transform_7, window_bounds = array<i64: 1, 128, 128>}, {transform_indices = @transform_8, window_bounds = array<i64: 1, 1, 128>}, {transform_indices = @transform_9, window_bounds = array<i64: 1, 1, 128>}, {transform_indices = @transform_10, window_bounds = array<i64: 1, 1, 128>}, {transform_indices = @transform_11, window_bounds = array<i64: 1, 128, 512>}, {transform_indices = @transform_12, window_bounds = array<i64: 1, 1, 512>}, {transform_indices = @transform_13, window_bounds = array<i64: 1, 512, 128>}, {transform_indices = @transform_14, window_bounds = array<i64: 1, 1, 128>}, {pipeline_mode = #tpu.pipeline_mode<synchronous>, transform_indices = @transform_15, window_bounds = array<i64: 1, 128>}, {pipeline_mode = #tpu.pipeline_mode<synchronous>, transform_indices = @transform_16, window_bounds = array<i64: 1, 128>}, {pipeline_mode = #tpu.pipeline_mode<synchronous>, transform_indices = @transform_17, window_bounds = array<i64: 128, 8>}, {pipeline_mode = #tpu.pipeline_mode<synchronous>, transform_indices = @transform_18, window_bounds = array<i64: 1, 8>}, {transform_indices = @transform_19, window_bounds = array<i64: 1, 1, 8>}]} {
    %c0_i32 = arith.constant 0 : i32
    %0 = arith.cmpi eq, %arg1, %c0_i32 : i32
    %1 = arith.extui %0 : i1 to i32
    %c0_i32_0 = arith.constant 0 : i32
    %2 = arith.cmpi ne, %1, %c0_i32_0 : i32
    scf.if %2 {
      %c0_90 = arith.constant 0 : index
      %c0_91 = arith.constant 0 : index
      %c0_92 = arith.constant 0 : index
      %214 = vector.load %arg2[%c0_90, %c0_91, %c0_92] : memref<1x24x256xf32, #tpu.memory_space<vmem>>, vector<1x24x256xf32>
      %215 = vector.shape_cast %214 : vector<1x24x256xf32> to vector<24x256xf32>
      %216 = arith.truncf %215 : vector<24x256xf32> to vector<24x256xbf16>
      %c0_93 = arith.constant 0 : index
      %c0_94 = arith.constant 0 : index
      %217 = vector.load %arg3[%c0_93, %c0_94] : memref<256x128xbf16, #tpu.memory_space<vmem>>, vector<256x128xbf16>
      %cst_95 = arith.constant dense<0.000000e+00> : vector<24x128xf32>
      %218 = tpu.matmul %216, %217, %cst_95 {dimension_numbers = #tpu.dot_dimension_numbers<[1], [0], [0], [1], [0, 0, 1, 1], [], []>} : vector<24x256xbf16>, vector<256x128xbf16>, vector<24x128xf32> -> vector<24x128xf32>
      %c0_96 = arith.constant 0 : index
      %c0_97 = arith.constant 0 : index
      %219 = vector.load %arg4[%c0_96, %c0_97] : memref<24x128xf32, #tpu.memory_space<vmem>>, vector<24x128xf32>
      %220 = arith.addf %218, %219 : vector<24x128xf32>
      %c0_98 = arith.constant 0 : index
      %c0_99 = arith.constant 0 : index
      %221 = vector.load %arg22[%c0_98, %c0_99] : memref<24x128xf32, #tpu.memory_space<vmem>>, vector<24x128xf32>
      tpu.vector_store %arg22[%c0_98, %c0_99], %220 {strides = array<i32>} : memref<24x128xf32, #tpu.memory_space<vmem>>, vector<24x128xf32>,
    } else {
    }
    %c0 = arith.constant 0 : index
    %c0_1 = arith.constant 0 : index
    %3 = vector.load %arg22[%c0, %c0_1] : memref<24x128xf32, #tpu.memory_space<vmem>>, vector<24x128xf32>
    %c0_2 = arith.constant 0 : index
    %c0_3 = arith.constant 0 : index
    %c0_4 = arith.constant 0 : index
    %4 = vector.load %arg5[%c0_2, %c0_3, %c0_4] : memref<1x1x128xf32, #tpu.memory_space<vmem>>, vector<1x1x128xf32>
    %5 = vector.shape_cast %4 : vector<1x1x128xf32> to vector<1x128xf32>
    %c0_5 = arith.constant 0 : index
    %c0_6 = arith.constant 0 : index
    %c0_7 = arith.constant 0 : index
    %6 = vector.load %arg6[%c0_5, %c0_6, %c0_7] : memref<1x1x128xf32, #tpu.memory_space<vmem>>, vector<1x1x128xf32>
    %7 = vector.shape_cast %6 : vector<1x1x128xf32> to vector<1x128xf32>
    %cst = arith.constant dense<0.000000e+00> : vector<24xf32>
    %8 = vector.multi_reduction <add>, %3, %cst [1] : vector<24x128xf32> to vector<24xf32>
    %9 = vector.shape_cast %8 : vector<24xf32> to vector<24x1xf32>
    %cst_8 = arith.constant 1.280000e+02 : f32
    %10 = vector.broadcast %cst_8 : f32 to vector<24x1xf32>
    %11 = arith.divf %9, %10 : vector<24x1xf32>
    %12 = vector.broadcast %11 : vector<24x1xf32> to vector<24x128xf32>
    %13 = arith.subf %3, %12 : vector<24x128xf32>
    %14 = arith.mulf %13, %13 : vector<24x128xf32>
    %cst_9 = arith.constant dense<0.000000e+00> : vector<24xf32>
    %15 = vector.multi_reduction <add>, %14, %cst_9 [1] : vector<24x128xf32> to vector<24xf32>
    %16 = vector.shape_cast %15 : vector<24xf32> to vector<24x1xf32>
    %cst_10 = arith.constant 1.280000e+02 : f32
    %17 = vector.broadcast %cst_10 : f32 to vector<24x1xf32>
    %18 = arith.divf %16, %17 : vector<24x1xf32>
    %cst_11 = arith.constant 9.99999996E-13 : f32
    %19 = vector.broadcast %cst_11 : f32 to vector<24x1xf32>
    %20 = arith.addf %18, %19 : vector<24x1xf32>
    %21 = math.rsqrt %20 : vector<24x1xf32>
    %22 = vector.broadcast %21 : vector<24x1xf32> to vector<24x128xf32>
    %23 = arith.mulf %13, %22 : vector<24x128xf32>
    %24 = vector.broadcast %5 : vector<1x128xf32> to vector<24x128xf32>
    %25 = arith.mulf %23, %24 : vector<24x128xf32>
    %26 = vector.broadcast %7 : vector<1x128xf32> to vector<24x128xf32>
    %27 = arith.addf %25, %26 : vector<24x128xf32>
    %28 = arith.truncf %27 : vector<24x128xf32> to vector<24x128xbf16>
    %c0_12 = arith.constant 0 : index
    %c0_13 = arith.constant 0 : index
    %c0_14 = arith.constant 0 : index
    %29 = vector.load %arg7[%c0_12, %c0_13, %c0_14] : memref<1x128x384xbf16, #tpu.memory_space<vmem>>, vector<1x128x384xbf16>
    %30 = vector.shape_cast %29 : vector<1x128x384xbf16> to vector<128x384xbf16>
    %cst_15 = arith.constant dense<0.000000e+00> : vector<24x384xf32>
    %31 = tpu.matmul %28, %30, %cst_15 {dimension_numbers = #tpu.dot_dimension_numbers<[1], [0], [0], [1], [0, 0, 1, 1], [], []>} : vector<24x128xbf16>, vector<128x384xbf16>, vector<24x384xf32> -> vector<24x384xf32>
    %c0_16 = arith.constant 0 : index
    %c0_17 = arith.constant 0 : index
    %c0_18 = arith.constant 0 : index
    %32 = vector.load %arg8[%c0_16, %c0_17, %c0_18] : memref<1x1x384xf32, #tpu.memory_space<vmem>>, vector<1x1x384xf32>
    %33 = vector.shape_cast %32 : vector<1x1x384xf32> to vector<1x384xf32>
    %34 = vector.broadcast %33 : vector<1x384xf32> to vector<24x384xf32>
    %35 = arith.addf %31, %34 : vector<24x384xf32>
    %36 = tpu.iota {dimensions = array<i32: 1>} : vector<24x24xi32>
    %c17_i32 = arith.constant 17 : i32
    %37 = vector.broadcast %c17_i32 : i32 to vector<24x24xi32>
    %38 = arith.cmpi slt, %36, %37 : vector<24x24xi32>
    %cst_19 = arith.constant 0.000000e+00 : f32
    %cst_20 = arith.constant -1.000000e+30 : f32
    %39 = vector.broadcast %cst_19 : f32 to vector<24x24xf32>
    %40 = vector.broadcast %cst_20 : f32 to vector<24x24xf32>
    %41 = arith.select %38, %39, %40 : vector<24x24xi1>, vector<24x24xf32>
    %cst_21 = arith.constant 0.000000e+00 : f32
    %42 = vector.broadcast %cst_21 : f32 to vector<24x128xf32>
    %43 = vector.extract_strided_slice %35 {offsets = [0, 0], sizes = [24, 32], strides = [1, 1]} : vector<24x384xf32> to vector<24x32xf32>
    %cst_22 = arith.constant 0.176776692 : f32
    %44 = vector.broadcast %cst_22 : f32 to vector<24x32xf32>
    %45 = arith.mulf %43, %44 : vector<24x32xf32>
    %46 = arith.truncf %45 : vector<24x32xf32> to vector<24x32xbf16>
    %47 = vector.extract_strided_slice %35 {offsets = [0, 128], sizes = [24, 32], strides = [1, 1]} : vector<24x384xf32> to vector<24x32xf32>
    %48 = arith.truncf %47 : vector<24x32xf32> to vector<24x32xbf16>
    %49 = vector.extract_strided_slice %35 {offsets = [0, 256], sizes = [24, 32], strides = [1, 1]} : vector<24x384xf32> to vector<24x32xf32>
    %50 = arith.truncf %49 : vector<24x32xf32> to vector<24x32xbf16>
    %cst_23 = arith.constant dense<0.000000e+00> : vector<24x24xf32>
    %51 = tpu.matmul %46, %48, %cst_23 {dimension_numbers = #tpu.dot_dimension_numbers<[1], [1], [0], [0], [0, 0, 1, 0], [], []>} : vector<24x32xbf16>, vector<24x32xbf16>, vector<24x24xf32> -> vector<24x24xf32>
    %52 = arith.addf %51, %41 : vector<24x24xf32>
    %cst_24 = arith.constant dense<0xFF800000> : vector<24xf32>
    %53 = vector.multi_reduction <maximumf>, %52, %cst_24 [1] : vector<24x24xf32> to vector<24xf32>
    %54 = vector.shape_cast %53 : vector<24xf32> to vector<24x1xf32>
    %55 = vector.broadcast %54 : vector<24x1xf32> to vector<24x24xf32>
    %56 = arith.subf %52, %55 : vector<24x24xf32>
    %57 = math.exp %56 : vector<24x24xf32>
    %cst_25 = arith.constant dense<0.000000e+00> : vector<24xf32>
    %58 = vector.multi_reduction <add>, %57, %cst_25 [1] : vector<24x24xf32> to vector<24xf32>
    %59 = vector.shape_cast %58 : vector<24xf32> to vector<24x1xf32>
    %60 = tpu.reciprocal %59 {approx = true} : vector<24x1xf32> -> vector<24x1xf32>
    %61 = arith.truncf %57 : vector<24x24xf32> to vector<24x24xbf16>
    %cst_26 = arith.constant dense<0.000000e+00> : vector<24x32xf32>
    %62 = tpu.matmul %61, %50, %cst_26 {dimension_numbers = #tpu.dot_dimension_numbers<[1], [0], [0], [1], [0, 0, 1, 1], [], []>} : vector<24x24xbf16>, vector<24x32xbf16>, vector<24x32xf32> -> vector<24x32xf32>
    %63 = vector.broadcast %60 : vector<24x1xf32> to vector<24x32xf32>
    %64 = arith.mulf %62, %63 : vector<24x32xf32>
    %65 = arith.truncf %64 : vector<24x32xf32> to vector<24x32xbf16>
    %c0_27 = arith.constant 0 : index
    %c0_28 = arith.constant 0 : index
    %c0_29 = arith.constant 0 : index
    %66 = vector.load %arg9[%c0_27, %c0_28, %c0_29] : memref<1x128x128xbf16, #tpu.memory_space<vmem>>, vector<1x32x128xbf16>
    %67 = vector.shape_cast %66 : vector<1x32x128xbf16> to vector<32x128xbf16>
    %cst_30 = arith.constant dense<0.000000e+00> : vector<24x128xf32>
    %68 = tpu.matmul %65, %67, %cst_30 {dimension_numbers = #tpu.dot_dimension_numbers<[1], [0], [0], [1], [0, 0, 1, 1], [], []>} : vector<24x32xbf16>, vector<32x128xbf16>, vector<24x128xf32> -> vector<24x128xf32>
    %69 = arith.addf %42, %68 : vector<24x128xf32>
    %70 = vector.extract_strided_slice %35 {offsets = [0, 32], sizes = [24, 32], strides = [1, 1]} : vector<24x384xf32> to vector<24x32xf32>
    %cst_31 = arith.constant 0.176776692 : f32
    %71 = vector.broadcast %cst_31 : f32 to vector<24x32xf32>
    %72 = arith.mulf %70, %71 : vector<24x32xf32>
    %73 = arith.truncf %72 : vector<24x32xf32> to vector<24x32xbf16>
    %74 = vector.extract_strided_slice %35 {offsets = [0, 160], sizes = [24, 32], strides = [1, 1]} : vector<24x384xf32> to vector<24x32xf32>
    %75 = arith.truncf %74 : vector<24x32xf32> to vector<24x32xbf16>
    %76 = vector.extract_strided_slice %35 {offsets = [0, 288], sizes = [24, 32], strides = [1, 1]} : vector<24x384xf32> to vector<24x32xf32>
    %77 = arith.truncf %76 : vector<24x32xf32> to vector<24x32xbf16>
    %cst_32 = arith.constant dense<0.000000e+00> : vector<24x24xf32>
    %78 = tpu.matmul %73, %75, %cst_32 {dimension_numbers = #tpu.dot_dimension_numbers<[1], [1], [0], [0], [0, 0, 1, 0], [], []>} : vector<24x32xbf16>, vector<24x32xbf16>, vector<24x24xf32> -> vector<24x24xf32>
    %79 = arith.addf %78, %41 : vector<24x24xf32>
    %cst_33 = arith.constant dense<0xFF800000> : vector<24xf32>
    %80 = vector.multi_reduction <maximumf>, %79, %cst_33 [1] : vector<24x24xf32> to vector<24xf32>
    %81 = vector.shape_cast %80 : vector<24xf32> to vector<24x1xf32>
    %82 = vector.broadcast %81 : vector<24x1xf32> to vector<24x24xf32>
    %83 = arith.subf %79, %82 : vector<24x24xf32>
    %84 = math.exp %83 : vector<24x24xf32>
    %cst_34 = arith.constant dense<0.000000e+00> : vector<24xf32>
    %85 = vector.multi_reduction <add>, %84, %cst_34 [1] : vector<24x24xf32> to vector<24xf32>
    %86 = vector.shape_cast %85 : vector<24xf32> to vector<24x1xf32>
    %87 = tpu.reciprocal %86 {approx = true} : vector<24x1xf32> -> vector<24x1xf32>
    %88 = arith.truncf %84 : vector<24x24xf32> to vector<24x24xbf16>
    %cst_35 = arith.constant dense<0.000000e+00> : vector<24x32xf32>
    %89 = tpu.matmul %88, %77, %cst_35 {dimension_numbers = #tpu.dot_dimension_numbers<[1], [0], [0], [1], [0, 0, 1, 1], [], []>} : vector<24x24xbf16>, vector<24x32xbf16>, vector<24x32xf32> -> vector<24x32xf32>
    %90 = vector.broadcast %87 : vector<24x1xf32> to vector<24x32xf32>
    %91 = arith.mulf %89, %90 : vector<24x32xf32>
    %92 = arith.truncf %91 : vector<24x32xf32> to vector<24x32xbf16>
    %c0_36 = arith.constant 0 : index
    %c32 = arith.constant 32 : index
    %c0_37 = arith.constant 0 : index
    %93 = vector.load %arg9[%c0_36, %c32, %c0_37] : memref<1x128x128xbf16, #tpu.memory_space<vmem>>, vector<1x32x128xbf16>
    %94 = vector.shape_cast %93 : vector<1x32x128xbf16> to vector<32x128xbf16>
    %cst_38 = arith.constant dense<0.000000e+00> : vector<24x128xf32>
    %95 = tpu.matmul %92, %94, %cst_38 {dimension_numbers = #tpu.dot_dimension_numbers<[1], [0], [0], [1], [0, 0, 1, 1], [], []>} : vector<24x32xbf16>, vector<32x128xbf16>, vector<24x128xf32> -> vector<24x128xf32>
    %96 = arith.addf %69, %95 : vector<24x128xf32>
    %97 = vector.extract_strided_slice %35 {offsets = [0, 64], sizes = [24, 32], strides = [1, 1]} : vector<24x384xf32> to vector<24x32xf32>
    %cst_39 = arith.constant 0.176776692 : f32
    %98 = vector.broadcast %cst_39 : f32 to vector<24x32xf32>
    %99 = arith.mulf %97, %98 : vector<24x32xf32>
    %100 = arith.truncf %99 : vector<24x32xf32> to vector<24x32xbf16>
    %101 = vector.extract_strided_slice %35 {offsets = [0, 192], sizes = [24, 32], strides = [1, 1]} : vector<24x384xf32> to vector<24x32xf32>
    %102 = arith.truncf %101 : vector<24x32xf32> to vector<24x32xbf16>
    %103 = vector.extract_strided_slice %35 {offsets = [0, 320], sizes = [24, 32], strides = [1, 1]} : vector<24x384xf32> to vector<24x32xf32>
    %104 = arith.truncf %103 : vector<24x32xf32> to vector<24x32xbf16>
    %cst_40 = arith.constant dense<0.000000e+00> : vector<24x24xf32>
    %105 = tpu.matmul %100, %102, %cst_40 {dimension_numbers = #tpu.dot_dimension_numbers<[1], [1], [0], [0], [0, 0, 1, 0], [], []>} : vector<24x32xbf16>, vector<24x32xbf16>, vector<24x24xf32> -> vector<24x24xf32>
    %106 = arith.addf %105, %41 : vector<24x24xf32>
    %cst_41 = arith.constant dense<0xFF800000> : vector<24xf32>
    %107 = vector.multi_reduction <maximumf>, %106, %cst_41 [1] : vector<24x24xf32> to vector<24xf32>
    %108 = vector.shape_cast %107 : vector<24xf32> to vector<24x1xf32>
    %109 = vector.broadcast %108 : vector<24x1xf32> to vector<24x24xf32>
    %110 = arith.subf %106, %109 : vector<24x24xf32>
    %111 = math.exp %110 : vector<24x24xf32>
    %cst_42 = arith.constant dense<0.000000e+00> : vector<24xf32>
    %112 = vector.multi_reduction <add>, %111, %cst_42 [1] : vector<24x24xf32> to vector<24xf32>
    %113 = vector.shape_cast %112 : vector<24xf32> to vector<24x1xf32>
    %114 = tpu.reciprocal %113 {approx = true} : vector<24x1xf32> -> vector<24x1xf32>
    %115 = arith.truncf %111 : vector<24x24xf32> to vector<24x24xbf16>
    %cst_43 = arith.constant dense<0.000000e+00> : vector<24x32xf32>
    %116 = tpu.matmul %115, %104, %cst_43 {dimension_numbers = #tpu.dot_dimension_numbers<[1], [0], [0], [1], [0, 0, 1, 1], [], []>} : vector<24x24xbf16>, vector<24x32xbf16>, vector<24x32xf32> -> vector<24x32xf32>
    %117 = vector.broadcast %114 : vector<24x1xf32> to vector<24x32xf32>
    %118 = arith.mulf %116, %117 : vector<24x32xf32>
    %119 = arith.truncf %118 : vector<24x32xf32> to vector<24x32xbf16>
    %c0_44 = arith.constant 0 : index
    %c64 = arith.constant 64 : index
    %c0_45 = arith.constant 0 : index
    %120 = vector.load %arg9[%c0_44, %c64, %c0_45] : memref<1x128x128xbf16, #tpu.memory_space<vmem>>, vector<1x32x128xbf16>
    %121 = vector.shape_cast %120 : vector<1x32x128xbf16> to vector<32x128xbf16>
    %cst_46 = arith.constant dense<0.000000e+00> : vector<24x128xf32>
    %122 = tpu.matmul %119, %121, %cst_46 {dimension_numbers = #tpu.dot_dimension_numbers<[1], [0], [0], [1], [0, 0, 1, 1], [], []>} : vector<24x32xbf16>, vector<32x128xbf16>, vector<24x128xf32> -> vector<24x128xf32>
    %123 = arith.addf %96, %122 : vector<24x128xf32>
    %124 = vector.extract_strided_slice %35 {offsets = [0, 96], sizes = [24, 32], strides = [1, 1]} : vector<24x384xf32> to vector<24x32xf32>
    %cst_47 = arith.constant 0.176776692 : f32
    %125 = vector.broadcast %cst_47 : f32 to vector<24x32xf32>
    %126 = arith.mulf %124, %125 : vector<24x32xf32>
    %127 = arith.truncf %126 : vector<24x32xf32> to vector<24x32xbf16>
    %128 = vector.extract_strided_slice %35 {offsets = [0, 224], sizes = [24, 32], strides = [1, 1]} : vector<24x384xf32> to vector<24x32xf32>
    %129 = arith.truncf %128 : vector<24x32xf32> to vector<24x32xbf16>
    %130 = vector.extract_strided_slice %35 {offsets = [0, 352], sizes = [24, 32], strides = [1, 1]} : vector<24x384xf32> to vector<24x32xf32>
    %131 = arith.truncf %130 : vector<24x32xf32> to vector<24x32xbf16>
    %cst_48 = arith.constant dense<0.000000e+00> : vector<24x24xf32>
    %132 = tpu.matmul %127, %129, %cst_48 {dimension_numbers = #tpu.dot_dimension_numbers<[1], [1], [0], [0], [0, 0, 1, 0], [], []>} : vector<24x32xbf16>, vector<24x32xbf16>, vector<24x24xf32> -> vector<24x24xf32>
    %133 = arith.addf %132, %41 : vector<24x24xf32>
    %cst_49 = arith.constant dense<0xFF800000> : vector<24xf32>
    %134 = vector.multi_reduction <maximumf>, %133, %cst_49 [1] : vector<24x24xf32> to vector<24xf32>
    %135 = vector.shape_cast %134 : vector<24xf32> to vector<24x1xf32>
    %136 = vector.broadcast %135 : vector<24x1xf32> to vector<24x24xf32>
    %137 = arith.subf %133, %136 : vector<24x24xf32>
    %138 = math.exp %137 : vector<24x24xf32>
    %cst_50 = arith.constant dense<0.000000e+00> : vector<24xf32>
    %139 = vector.multi_reduction <add>, %138, %cst_50 [1] : vector<24x24xf32> to vector<24xf32>
    %140 = vector.shape_cast %139 : vector<24xf32> to vector<24x1xf32>
    %141 = tpu.reciprocal %140 {approx = true} : vector<24x1xf32> -> vector<24x1xf32>
    %142 = arith.truncf %138 : vector<24x24xf32> to vector<24x24xbf16>
    %cst_51 = arith.constant dense<0.000000e+00> : vector<24x32xf32>
    %143 = tpu.matmul %142, %131, %cst_51 {dimension_numbers = #tpu.dot_dimension_numbers<[1], [0], [0], [1], [0, 0, 1, 1], [], []>} : vector<24x24xbf16>, vector<24x32xbf16>, vector<24x32xf32> -> vector<24x32xf32>
    %144 = vector.broadcast %141 : vector<24x1xf32> to vector<24x32xf32>
    %145 = arith.mulf %143, %144 : vector<24x32xf32>
    %146 = arith.truncf %145 : vector<24x32xf32> to vector<24x32xbf16>
    %c0_52 = arith.constant 0 : index
    %c96 = arith.constant 96 : index
    %c0_53 = arith.constant 0 : index
    %147 = vector.load %arg9[%c0_52, %c96, %c0_53] : memref<1x128x128xbf16, #tpu.memory_space<vmem>>, vector<1x32x128xbf16>
    %148 = vector.shape_cast %147 : vector<1x32x128xbf16> to vector<32x128xbf16>
    %cst_54 = arith.constant dense<0.000000e+00> : vector<24x128xf32>
    %149 = tpu.matmul %146, %148, %cst_54 {dimension_numbers = #tpu.dot_dimension_numbers<[1], [0], [0], [1], [0, 0, 1, 1], [], []>} : vector<24x32xbf16>, vector<32x128xbf16>, vector<24x128xf32> -> vector<24x128xf32>
    %150 = arith.addf %123, %149 : vector<24x128xf32>
    %151 = arith.addf %3, %150 : vector<24x128xf32>
    %c0_55 = arith.constant 0 : index
    %c0_56 = arith.constant 0 : index
    %c0_57 = arith.constant 0 : index
    %152 = vector.load %arg10[%c0_55, %c0_56, %c0_57] : memref<1x1x128xf32, #tpu.memory_space<vmem>>, vector<1x1x128xf32>
    %153 = vector.shape_cast %152 : vector<1x1x128xf32> to vector<1x128xf32>
    %154 = vector.broadcast %153 : vector<1x128xf32> to vector<24x128xf32>
    %155 = arith.addf %151, %154 : vector<24x128xf32>
    %c0_58 = arith.constant 0 : index
    %c0_59 = arith.constant 0 : index
    %c0_60 = arith.constant 0 : index
    %156 = vector.load %arg11[%c0_58, %c0_59, %c0_60] : memref<1x1x128xf32, #tpu.memory_space<vmem>>, vector<1x1x128xf32>
    %157 = vector.shape_cast %156 : vector<1x1x128xf32> to vector<1x128xf32>
    %c0_61 = arith.constant 0 : index
    %c0_62 = arith.constant 0 : index
    %c0_63 = arith.constant 0 : index
    %158 = vector.load %arg12[%c0_61, %c0_62, %c0_63] : memref<1x1x128xf32, #tpu.memory_space<vmem>>, vector<1x1x128xf32>
    %159 = vector.shape_cast %158 : vector<1x1x128xf32> to vector<1x128xf32>
    %cst_64 = arith.constant dense<0.000000e+00> : vector<24xf32>
    %160 = vector.multi_reduction <add>, %155, %cst_64 [1] : vector<24x128xf32> to vector<24xf32>
    %161 = vector.shape_cast %160 : vector<24xf32> to vector<24x1xf32>
    %cst_65 = arith.constant 1.280000e+02 : f32
    %162 = vector.broadcast %cst_65 : f32 to vector<24x1xf32>
    %163 = arith.divf %161, %162 : vector<24x1xf32>
    %164 = vector.broadcast %163 : vector<24x1xf32> to vector<24x128xf32>
    %165 = arith.subf %155, %164 : vector<24x128xf32>
    %166 = arith.mulf %165, %165 : vector<24x128xf32>
    %cst_66 = arith.constant dense<0.000000e+00> : vector<24xf32>
    %167 = vector.multi_reduction <add>, %166, %cst_66 [1] : vector<24x128xf32> to vector<24xf32>
    %168 = vector.shape_cast %167 : vector<24xf32> to vector<24x1xf32>
    %cst_67 = arith.constant 1.280000e+02 : f32
    %169 = vector.broadcast %cst_67 : f32 to vector<24x1xf32>
    %170 = arith.divf %168, %169 : vector<24x1xf32>
    %cst_68 = arith.constant 9.99999996E-13 : f32
    %171 = vector.broadcast %cst_68 : f32 to vector<24x1xf32>
    %172 = arith.addf %170, %171 : vector<24x1xf32>
    %173 = math.rsqrt %172 : vector<24x1xf32>
    %174 = vector.broadcast %173 : vector<24x1xf32> to vector<24x128xf32>
    %175 = arith.mulf %165, %174 : vector<24x128xf32>
    %176 = vector.broadcast %157 : vector<1x128xf32> to vector<24x128xf32>
    %177 = arith.mulf %175, %176 : vector<24x128xf32>
    %178 = vector.broadcast %159 : vector<1x128xf32> to vector<24x128xf32>
    %179 = arith.addf %177, %178 : vector<24x128xf32>
    %180 = arith.truncf %179 : vector<24x128xf32> to vector<24x128xbf16>
    %c0_69 = arith.constant 0 : index
    %c0_70 = arith.constant 0 : index
    %c0_71 = arith.constant 0 : index
    %181 = vector.load %arg13[%c0_69, %c0_70, %c0_71] : memref<1x128x512xbf16, #tpu.memory_space<vmem>>, vector<1x128x512xbf16>
    %182 = vector.shape_cast %181 : vector<1x128x512xbf16> to vector<128x512xbf16>
    %cst_72 = arith.constant dense<0.000000e+00> : vector<24x512xf32>
    %183 = tpu.matmul %180, %182, %cst_72 {dimension_numbers = #tpu.dot_dimension_numbers<[1], [0], [0], [1], [0, 0, 1, 1], [], []>} : vector<24x128xbf16>, vector<128x512xbf16>, vector<24x512xf32> -> vector<24x512xf32>
    %c0_73 = arith.constant 0 : index
    %c0_74 = arith.constant 0 : index
    %c0_75 = arith.constant 0 : index
    %184 = vector.load %arg14[%c0_73, %c0_74, %c0_75] : memref<1x1x512xf32, #tpu.memory_space<vmem>>, vector<1x1x512xf32>
    %185 = vector.shape_cast %184 : vector<1x1x512xf32> to vector<1x512xf32>
    %186 = vector.broadcast %185 : vector<1x512xf32> to vector<24x512xf32>
    %187 = arith.addf %183, %186 : vector<24x512xf32>
    %188 = arith.mulf %187, %187 : vector<24x512xf32>
    %189 = arith.mulf %187, %188 : vector<24x512xf32>
    %cst_76 = arith.constant 4.471500e-02 : f32
    %190 = vector.broadcast %cst_76 : f32 to vector<24x512xf32>
    %191 = arith.mulf %190, %189 : vector<24x512xf32>
    %192 = arith.addf %187, %191 : vector<24x512xf32>
    %cst_77 = arith.constant 0.797884583 : f32
    %193 = vector.broadcast %cst_77 : f32 to vector<24x512xf32>
    %194 = arith.mulf %193, %192 : vector<24x512xf32>
    %195 = math.tanh %194 : vector<24x512xf32>
    %cst_78 = arith.constant 1.000000e+00 : f32
    %196 = vector.broadcast %cst_78 : f32 to vector<24x512xf32>
    %197 = arith.addf %196, %195 : vector<24x512xf32>
    %cst_79 = arith.constant 5.000000e-01 : f32
    %198 = vector.broadcast %cst_79 : f32 to vector<24x512xf32>
    %199 = arith.mulf %198, %197 : vector<24x512xf32>
    %200 = arith.mulf %187, %199 : vector<24x512xf32>
    %201 = arith.truncf %200 : vector<24x512xf32> to vector<24x512xbf16>
    %c0_80 = arith.constant 0 : index
    %c0_81 = arith.constant 0 : index
    %c0_82 = arith.constant 0 : index
    %202 = vector.load %arg15[%c0_80, %c0_81, %c0_82] : memref<1x512x128xbf16, #tpu.memory_space<vmem>>, vector<1x512x128xbf16>
    %203 = vector.shape_cast %202 : vector<1x512x128xbf16> to vector<512x128xbf16>
    %cst_83 = arith.constant dense<0.000000e+00> : vector<24x128xf32>
    %204 = tpu.matmul %201, %203, %cst_83 {dimension_numbers = #tpu.dot_dimension_numbers<[1], [0], [0], [1], [0, 0, 1, 1], [], []>} : vector<24x512xbf16>, vector<512x128xbf16>, vector<24x128xf32> -> vector<24x128xf32>
    %205 = arith.addf %155, %204 : vector<24x128xf32>
    %c0_84 = arith.constant 0 : index
    %c0_85 = arith.constant 0 : index
    %c0_86 = arith.constant 0 : index
    %206 = vector.load %arg16[%c0_84, %c0_85, %c0_86] : memref<1x1x128xf32, #tpu.memory_space<vmem>>, vector<1x1x128xf32>
    %207 = vector.shape_cast %206 : vector<1x1x128xf32> to vector<1x128xf32>
    %208 = vector.broadcast %207 : vector<1x128xf32> to vector<24x128xf32>
    %209 = arith.addf %205, %208 : vector<24x128xf32>
    %c0_87 = arith.constant 0 : index
    %c0_88 = arith.constant 0 : index
    %210 = vector.load %arg22[%c0_87, %c0_88] : memref<24x128xf32, #tpu.memory_space<vmem>>, vector<24x128xf32>
    tpu.vector_store %arg22[%c0_87, %c0_88], %209 {strides = array<i32>} : memref<24x128xf32, #tpu.memory_space<vmem>>, vector<24x128xf32>,
    %c3_i32 = arith.constant 3 : i32
    %211 = arith.cmpi eq, %arg1, %c3_i32 : i32
    %212 = arith.extui %211 : i1 to i32
    %c0_i32_89 = arith.constant 0 : i32
    %213 = arith.cmpi ne, %212, %c0_i32_89 : i32
    scf.if %213 {
      %214 = vector.extract_strided_slice %209 {offsets = [0, 0], sizes = [1, 128], strides = [1, 1]} : vector<24x128xf32> to vector<1x128xf32>
      %c0_90 = arith.constant 0 : index
      %c0_91 = arith.constant 0 : index
      %215 = vector.load %arg17[%c0_90, %c0_91] : memref<1x128xf32, #tpu.memory_space<vmem>>, vector<1x128xf32>
      %c0_92 = arith.constant 0 : index
      %c0_93 = arith.constant 0 : index
      %216 = vector.load %arg18[%c0_92, %c0_93] : memref<1x128xf32, #tpu.memory_space<vmem>>, vector<1x128xf32>
      %cst_94 = arith.constant dense<0.000000e+00> : vector<1xf32>
      %217 = vector.multi_reduction <add>, %214, %cst_94 [1] : vector<1x128xf32> to vector<1xf32>
      %218 = vector.shape_cast %217 : vector<1xf32> to vector<1x1xf32>
      %cst_95 = arith.constant 1.280000e+02 : f32
      %219 = vector.broadcast %cst_95 : f32 to vector<1x1xf32>
      %220 = arith.divf %218, %219 : vector<1x1xf32>
      %221 = vector.broadcast %220 : vector<1x1xf32> to vector<1x128xf32>
      %222 = arith.subf %214, %221 : vector<1x128xf32>
      %223 = arith.mulf %222, %222 : vector<1x128xf32>
      %cst_96 = arith.constant dense<0.000000e+00> : vector<1xf32>
      %224 = vector.multi_reduction <add>, %223, %cst_96 [1] : vector<1x128xf32> to vector<1xf32>
      %225 = vector.shape_cast %224 : vector<1xf32> to vector<1x1xf32>
      %cst_97 = arith.constant 1.280000e+02 : f32
      %226 = vector.broadcast %cst_97 : f32 to vector<1x1xf32>
      %227 = arith.divf %225, %226 : vector<1x1xf32>
      %cst_98 = arith.constant 9.99999996E-13 : f32
      %228 = vector.broadcast %cst_98 : f32 to vector<1x1xf32>
      %229 = arith.addf %227, %228 : vector<1x1xf32>
      %230 = math.rsqrt %229 : vector<1x1xf32>
      %231 = vector.broadcast %230 : vector<1x1xf32> to vector<1x128xf32>
      %232 = arith.mulf %222, %231 : vector<1x128xf32>
      %233 = arith.mulf %232, %215 : vector<1x128xf32>
      %234 = arith.addf %233, %216 : vector<1x128xf32>
      %235 = arith.truncf %234 : vector<1x128xf32> to vector<1x128xbf16>
      %c0_99 = arith.constant 0 : index
      %c0_100 = arith.constant 0 : index
      %236 = vector.load %arg19[%c0_99, %c0_100] : memref<128x8xbf16, #tpu.memory_space<vmem>>, vector<128x8xbf16>
      %cst_101 = arith.constant dense<0.000000e+00> : vector<1x8xf32>
      %237 = tpu.matmul %235, %236, %cst_101 {dimension_numbers = #tpu.dot_dimension_numbers<[1], [0], [0], [1], [0, 0, 1, 1], [], []>} : vector<1x128xbf16>, vector<128x8xbf16>, vector<1x8xf32> -> vector<1x8xf32>
      %c0_102 = arith.constant 0 : index
      %c0_103 = arith.constant 0 : index
      %238 = vector.load %arg20[%c0_102, %c0_103] : memref<1x8xf32, #tpu.memory_space<vmem>>, vector<1x8xf32>
      %239 = arith.addf %237, %238 : vector<1x8xf32>
      %240 = arith.negf %239 : vector<1x8xf32>
      %241 = math.exp %240 : vector<1x8xf32>
      %cst_104 = arith.constant 1.000000e+00 : f32
      %242 = vector.broadcast %cst_104 : f32 to vector<1x8xf32>
      %243 = arith.addf %242, %241 : vector<1x8xf32>
      %244 = arith.divf %242, %243 : vector<1x8xf32>
      %cst_105 = arith.constant 2.240000e+02 : f32
      %245 = vector.broadcast %cst_105 : f32 to vector<1x8xf32>
      %246 = arith.mulf %244, %245 : vector<1x8xf32>
      %c0_106 = arith.constant 0 : index
      %c0_107 = arith.constant 0 : index
      %c0_108 = arith.constant 0 : index
      %247 = vector.load %arg21[%c0_106, %c0_107, %c0_108] : memref<1x1x8xf32, #tpu.memory_space<vmem>>, vector<1x1x8xf32>
      %248 = vector.shape_cast %247 : vector<1x1x8xf32> to vector<1x8xf32>
      %249 = vector.shape_cast %246 : vector<1x8xf32> to vector<1x1x8xf32>
      tpu.vector_store %arg21[%c0_106, %c0_107, %c0_108], %249 {strides = array<i32>} : memref<1x1x8xf32, #tpu.memory_space<vmem>>, vector<1x1x8xf32>,
    } else {
    }
    return
  }
  func.func @transform_0(%arg0: i32, %arg1: i32) -> (i32, i32, i32) {
    %c0_i32 = arith.constant 0 : i32
    %c0_i32_0 = arith.constant 0 : i32
    %c0_i32_1 = arith.constant 0 : i32
    return %arg0, %c0_i32, %c0_i32_0 : i32, i32, i32
  }
  func.func @transform_1(%arg0: i32, %arg1: i32) -> (i32, i32) {
    %c0_i32 = arith.constant 0 : i32
    %c0_i32_0 = arith.constant 0 : i32
    %c0_i32_1 = arith.constant 0 : i32
    return %c0_i32, %c0_i32_0 : i32, i32
  }
  func.func @transform_2(%arg0: i32, %arg1: i32) -> (i32, i32) {
    %c0_i32 = arith.constant 0 : i32
    %c0_i32_0 = arith.constant 0 : i32
    %c0_i32_1 = arith.constant 0 : i32
    return %c0_i32, %c0_i32_0 : i32, i32
  }
  func.func @transform_3(%arg0: i32, %arg1: i32) -> (i32, i32, i32) {
    %c0_i32 = arith.constant 0 : i32
    %c0_i32_0 = arith.constant 0 : i32
    %c0_i32_1 = arith.constant 0 : i32
    return %arg1, %c0_i32, %c0_i32_0 : i32, i32, i32
  }
  func.func @transform_4(%arg0: i32, %arg1: i32) -> (i32, i32, i32) {
    %c0_i32 = arith.constant 0 : i32
    %c0_i32_0 = arith.constant 0 : i32
    %c0_i32_1 = arith.constant 0 : i32
    return %arg1, %c0_i32, %c0_i32_0 : i32, i32, i32
  }
  func.func @transform_5(%arg0: i32, %arg1: i32) -> (i32, i32, i32) {
    %c0_i32 = arith.constant 0 : i32
    %c0_i32_0 = arith.constant 0 : i32
    %c0_i32_1 = arith.constant 0 : i32
    return %arg1, %c0_i32, %c0_i32_0 : i32, i32, i32
  }
  func.func @transform_6(%arg0: i32, %arg1: i32) -> (i32, i32, i32) {
    %c0_i32 = arith.constant 0 : i32
    %c0_i32_0 = arith.constant 0 : i32
    %c0_i32_1 = arith.constant 0 : i32
    return %arg1, %c0_i32, %c0_i32_0 : i32, i32, i32
  }
  func.func @transform_7(%arg0: i32, %arg1: i32) -> (i32, i32, i32) {
    %c0_i32 = arith.constant 0 : i32
    %c0_i32_0 = arith.constant 0 : i32
    %c0_i32_1 = arith.constant 0 : i32
    return %arg1, %c0_i32, %c0_i32_0 : i32, i32, i32
  }
  func.func @transform_8(%arg0: i32, %arg1: i32) -> (i32, i32, i32) {
    %c0_i32 = arith.constant 0 : i32
    %c0_i32_0 = arith.constant 0 : i32
    %c0_i32_1 = arith.constant 0 : i32
    return %arg1, %c0_i32, %c0_i32_0 : i32, i32, i32
  }
  func.func @transform_9(%arg0: i32, %arg1: i32) -> (i32, i32, i32) {
    %c0_i32 = arith.constant 0 : i32
    %c0_i32_0 = arith.constant 0 : i32
    %c0_i32_1 = arith.constant 0 : i32
    return %arg1, %c0_i32, %c0_i32_0 : i32, i32, i32
  }
  func.func @transform_10(%arg0: i32, %arg1: i32) -> (i32, i32, i32) {
    %c0_i32 = arith.constant 0 : i32
    %c0_i32_0 = arith.constant 0 : i32
    %c0_i32_1 = arith.constant 0 : i32
    return %arg1, %c0_i32, %c0_i32_0 : i32, i32, i32
  }
  func.func @transform_11(%arg0: i32, %arg1: i32) -> (i32, i32, i32) {
    %c0_i32 = arith.constant 0 : i32
    %c0_i32_0 = arith.constant 0 : i32
    %c0_i32_1 = arith.constant 0 : i32
    return %arg1, %c0_i32, %c0_i32_0 : i32, i32, i32
  }
  func.func @transform_12(%arg0: i32, %arg1: i32) -> (i32, i32, i32) {
    %c0_i32 = arith.constant 0 : i32
    %c0_i32_0 = arith.constant 0 : i32
    %c0_i32_1 = arith.constant 0 : i32
    return %arg1, %c0_i32, %c0_i32_0 : i32, i32, i32
  }
  func.func @transform_13(%arg0: i32, %arg1: i32) -> (i32, i32, i32) {
    %c0_i32 = arith.constant 0 : i32
    %c0_i32_0 = arith.constant 0 : i32
    %c0_i32_1 = arith.constant 0 : i32
    return %arg1, %c0_i32, %c0_i32_0 : i32, i32, i32
  }
  func.func @transform_14(%arg0: i32, %arg1: i32) -> (i32, i32, i32) {
    %c0_i32 = arith.constant 0 : i32
    %c0_i32_0 = arith.constant 0 : i32
    %c0_i32_1 = arith.constant 0 : i32
    return %arg1, %c0_i32, %c0_i32_0 : i32, i32, i32
  }
  func.func @transform_15(%arg0: i32, %arg1: i32) -> (i32, i32) {
    %c0_i32 = arith.constant 0 : i32
    %c0_i32_0 = arith.constant 0 : i32
    %c0_i32_1 = arith.constant 0 : i32
    return %c0_i32, %c0_i32_0 : i32, i32
  }
  func.func @transform_16(%arg0: i32, %arg1: i32) -> (i32, i32) {
    %c0_i32 = arith.constant 0 : i32
    %c0_i32_0 = arith.constant 0 : i32
    %c0_i32_1 = arith.constant 0 : i32
    return %c0_i32, %c0_i32_0 : i32, i32
  }
  func.func @transform_17(%arg0: i32, %arg1: i32) -> (i32, i32) {
    %c0_i32 = arith.constant 0 : i32
    %c0_i32_0 = arith.constant 0 : i32
    %c0_i32_1 = arith.constant 0 : i32
    return %c0_i32, %c0_i32_0 : i32, i32
  }
  func.func @transform_18(%arg0: i32, %arg1: i32) -> (i32, i32) {
    %c0_i32 = arith.constant 0 : i32
    %c0_i32_0 = arith.constant 0 : i32
    %c0_i32_1 = arith.constant 0 : i32
    return %c0_i32, %c0_i32_0 : i32, i32
  }
  func.func @transform_19(%arg0: i32, %arg1: i32) -> (i32, i32, i32) {
    %c0_i32 = arith.constant 0 : i32
    %c0_i32_0 = arith.constant 0 : i32
    %c0_i32_1 = arith.constant 0 : i32
    return %arg0, %c0_i32, %c0_i32_0 : i32, i32, i32
  }
}

</mosaic_0001>

<llo_original>
// kernel: vit_forward.1
$region0: #{vit_forward.1}
  #allocation0 [shape = 'u32[]', space=smem, size = 0x4, offset = 0x4, fixed_abs, tag = 'smem constant byte address 0x4 - core index']
  #allocation1 [shape = 'u32[144,128]{1,0:T(1,128)}', space=vmem, size = 0x12000, scoped, tag = 'internal scratch']
  #allocation2 [shape = 'f32[24,128]{1,0:T(8,128)}', space=vmem, size = 0x3000, scoped, tag = 'scratch operand']
  %s0 = inlined_call_operand.vmem [shape: f32[2,25,256], index: 0, kind: input, shape index: {}]
  %s1 = inlined_call_operand.vmem [shape: bf16[256,128], index: 1, kind: input, shape index: {}]
  %s2 = inlined_call_operand.vmem [shape: f32[24,128], index: 2, kind: input, shape index: {}]
  %s3 = inlined_call_operand.vmem [shape: f32[4,1,128], index: 3, kind: input, shape index: {}]
  %s4 = inlined_call_operand.vmem [shape: f32[4,1,128], index: 4, kind: input, shape index: {}]
  %s5 = inlined_call_operand.vmem [shape: bf16[4,128,384], index: 5, kind: input, shape index: {}]
  %s6 = inlined_call_operand.vmem [shape: f32[4,1,384], index: 6, kind: input, shape index: {}]
  %s7 = inlined_call_operand.vmem [shape: bf16[4,128,128], index: 7, kind: input, shape index: {}]
  %s8 = inlined_call_operand.vmem [shape: f32[4,1,128], index: 8, kind: input, shape index: {}]
  %s9 = inlined_call_operand.vmem [shape: f32[4,1,128], index: 9, kind: input, shape index: {}]
  %s10 = inlined_call_operand.vmem [shape: f32[4,1,128], index: 10, kind: input, shape index: {}]
  %s11 = inlined_call_operand.vmem [shape: bf16[4,128,512], index: 11, kind: input, shape index: {}]
  %s12 = inlined_call_operand.vmem [shape: f32[4,1,512], index: 12, kind: input, shape index: {}]
  %s13 = inlined_call_operand.vmem [shape: bf16[4,512,128], index: 13, kind: input, shape index: {}]
  %s14 = inlined_call_operand.vmem [shape: f32[4,1,128], index: 14, kind: input, shape index: {}]
  %s15 = inlined_call_operand.vmem [shape: f32[1,128], index: 15, kind: input, shape index: {}]
  %s16 = inlined_call_operand.vmem [shape: f32[1,128], index: 16, kind: input, shape index: {}]
  %s17 = inlined_call_operand.vmem [shape: bf16[128,8], index: 17, kind: input, shape index: {}]
  %s18 = inlined_call_operand.vmem [shape: f32[1,8], index: 18, kind: input, shape index: {}]
  %s19 = inlined_call_operand.vmem [shape: f32[2,1,8], index: 19, kind: output, shape index: {}]
  %s20 = sld [smem:[#allocation0]]
  $region117: #{vit_forward.1} parent=0
    _
  %s22 = ssub.s32 1, %s20
  %s23 = scalar_select 0, %s22, %s20
  loop: start=0, step=1, limit=10
  $region2: #{vit_forward.1} parent=0 // loop_pre_header
    _
  $region3: #{vit_forward.1} parent=0 // loop_header
    %s25 = sphi 0, %s29
    %p26 = scmp.ge.s32.totalorder %s25, 10
    %s32 = sphi 0, %s44
    %s33 = sphi 0, %s40
    %s34 = sphi 0, %s32
    %s35 = sphi 0, %s33
    %s36 = sphi 0, %s34
    %s37 = sphi 0, %s35
    %s47 = sphi 0, %s49
    %s50 = sphi 0, %s47
    %s51 = sphi 0, %s50
    %s67 = sphi 0, %s51
    %s71 = sphi 0, %s71
    %s73 = sphi 0, %s71
    %s74 = sphi 0, %s73
    %s88 = sphi 0, %s74
    %s92 = sphi 0, %s92
    %s94 = sphi 0, %s92
    %s95 = sphi 0, %s94
    %s109 = sphi 0, %s95
    %s115 = sphi 0, %s117
    %s118 = sphi 0, %s115
    %s119 = sphi 0, %s118
    %s135 = sphi 0, %s119
    %s141 = sphi 0, %s143
    %s144 = sphi 0, %s141
    %s145 = sphi 0, %s144
    %s161 = sphi 0, %s145
    %s167 = sphi 0, %s169
    %s170 = sphi 0, %s167
    %s171 = sphi 0, %s170
    %s187 = sphi 0, %s171
    %s193 = sphi 0, %s195
    %s196 = sphi 0, %s193
    %s197 = sphi 0, %s196
    %s213 = sphi 0, %s197
    %s219 = sphi 0, %s221
    %s222 = sphi 0, %s219
    %s223 = sphi 0, %s222
    %s239 = sphi 0, %s223
    %s245 = sphi 0, %s247
    %s248 = sphi 0, %s245
    %s249 = sphi 0, %s248
    %s265 = sphi 0, %s249
    %s271 = sphi 0, %s273
    %s274 = sphi 0, %s271
    %s275 = sphi 0, %s274
    %s291 = sphi 0, %s275
    %s297 = sphi 0, %s299
    %s300 = sphi 0, %s297
    %s301 = sphi 0, %s300
    %s317 = sphi 0, %s301
    %s323 = sphi 0, %s325
    %s326 = sphi 0, %s323
    %s327 = sphi 0, %s326
    %s343 = sphi 0, %s327
    %s349 = sphi 0, %s351
    %s352 = sphi 0, %s349
    %s353 = sphi 0, %s352
    %s369 = sphi 0, %s353
    %s375 = sphi 0, %s377
    %s378 = sphi 0, %s375
    %s379 = sphi 0, %s378
    %s395 = sphi 0, %s379
    %s401 = sphi 0, %s403
    %s404 = sphi 0, %s401
    %s405 = sphi 0, %s404
    %s421 = sphi 0, %s405
    %s425 = sphi 0, %s425
    %s427 = sphi 0, %s425
    %s428 = sphi 0, %s427
    %s442 = sphi 0, %s428
    %s446 = sphi 0, %s446
    %s448 = sphi 0, %s446
    %s449 = sphi 0, %s448
    %s463 = sphi 0, %s449
    %s467 = sphi 0, %s467
    %s469 = sphi 0, %s467
    %s470 = sphi 0, %s469
    %s484 = sphi 0, %s470
    %s488 = sphi 0, %s488
    %s490 = sphi 0, %s488
    %s491 = sphi 0, %s490
    %s505 = sphi 0, %s491
    %s511 = sphi 0, %s513
    %s514 = sphi 0, %s511
    %s515 = sphi 0, %s514
    %s531 = sphi 0, %s515
  $region4: #{vit_forward.1} parent=0 // loop_header_branch
    %28 = sbr.rel (%p26) target = $region8
  $region5: #{vit_forward.1} parent=0 // loop_body
    %s30 = ssub.s32 %s25, 1
    %s31 = ssub.s32 %s25, 2
    %s38 = sadd.s32 1, %s33
    %p39 = scmp.ge.s32.totalorder %s38, 4
    %s40 = scalar_select %p39, 0, %s38
    %s41 = sadd.s32 1, %s32
    %s42 = scalar_select %p39, %s41, %s32
    %p43 = scmp.ge.s32.totalorder %s42, 2
    %s44 = scalar_select %p43, 0, %s42
    %s45 = ssub.s32 %s32, %s44
    %p46 = scmp.eq.s32.totalorder %s45, 0
    %s48 = sadd.s32 %s47, 1
    %s49 = scalar_select %p46, %s47, %s48
    %p52 = pneg %p46
    %p53 = scmp.eq.s32.totalorder %s25, 7
    %p54 = por %p52, %p53
    %p55 = scmp.ne.s32.totalorder %s47, %s50
    %p56 = scmp.eq.s32.totalorder %s25, 0
    %p57 = por %p55, %p56
    %p58 = scmp.ne.s32.totalorder %s47, %s50
    %p59 = scmp.eq.s32.totalorder %s30, 7
    %p60 = por %p58, %p59
    %p61 = scmp.ne.s32.totalorder %s50, %s51
    %p62 = scmp.eq.s32.totalorder %s30, 0
    %p63 = por %p61, %p62
    %p64 = scmp.ne.s32.totalorder %s50, %s51
    %p65 = scmp.eq.s32.totalorder %s31, 7
    %p66 = por %p64, %p65
    %p68 = scmp.ne.s32.totalorder %s51, %s67
    %p69 = scmp.eq.s32.totalorder %s31, 0
    %p70 = por %p68, %p69
    %s72 = sadd.s32 %s71, 1
    %p75 = scmp.eq.s32.totalorder %s25, 7
    %p76 = scmp.ne.s32.totalorder %s71, %s73
    %p77 = scmp.eq.s32.totalorder %s25, 0
    %p78 = por %p76, %p77
    %p79 = scmp.ne.s32.totalorder %s71, %s73
    %p80 = scmp.eq.s32.totalorder %s30, 7
    %p81 = por %p79, %p80
    %p82 = scmp.ne.s32.totalorder %s73, %s74
    %p83 = scmp.eq.s32.totalorder %s30, 0
    %p84 = por %p82, %p83
    %p85 = scmp.ne.s32.totalorder %s73, %s74
    %p86 = scmp.eq.s32.totalorder %s31, 7
    %p87 = por %p85, %p86
    %p89 = scmp.ne.s32.totalorder %s74, %s88
    %p90 = scmp.eq.s32.totalorder %s31, 0
    %p91 = por %p89, %p90
    %s93 = sadd.s32 %s92, 1
    %p96 = scmp.eq.s32.totalorder %s25, 7
    %p97 = scmp.ne.s32.totalorder %s92, %s94
    %p98 = scmp.eq.s32.totalorder %s25, 0
    %p99 = por %p97, %p98
    %p100 = scmp.ne.s32.totalorder %s92, %s94
    %p101 = scmp.eq.s32.totalorder %s30, 7
    %p102 = por %p100, %p101
    %p103 = scmp.ne.s32.totalorder %s94, %s95
    %p104 = scmp.eq.s32.totalorder %s30, 0
    %p105 = por %p103, %p104
    %p106 = scmp.ne.s32.totalorder %s94, %s95
    %p107 = scmp.eq.s32.totalorder %s31, 7
    %p108 = por %p106, %p107
    %p110 = scmp.ne.s32.totalorder %s95, %s109
    %p111 = scmp.eq.s32.totalorder %s31, 0
    %p112 = por %p110, %p111
    %s113 = ssub.s32 %s33, %s40
    %p114 = scmp.eq.s32.totalorder %s113, 0
    %s116 = sadd.s32 %s115, 1
    %s117 = scalar_select %p114, %s115, %s116
    %p120 = pneg %p114
    %p121 = scmp.eq.s32.totalorder %s25, 7
    %p122 = por %p120, %p121
    %p123 = scmp.ne.s32.totalorder %s115, %s118
    %p124 = scmp.eq.s32.totalorder %s25, 0
    %p125 = por %p123, %p124
    %p126 = scmp.ne.s32.totalorder %s115, %s118
    %p127 = scmp.eq.s32.totalorder %s30, 7
    %p128 = por %p126, %p127
    %p129 = scmp.ne.s32.totalorder %s118, %s119
    %p130 = scmp.eq.s32.totalorder %s30, 0
    %p131 = por %p129, %p130
    %p132 = scmp.ne.s32.totalorder %s118, %s119
    %p133 = scmp.eq.s32.totalorder %s31, 7
    %p134 = por %p132, %p133
    %p136 = scmp.ne.s32.totalorder %s119, %s135
    %p137 = scmp.eq.s32.totalorder %s31, 0
    %p138 = por %p136, %p137
    %s139 = ssub.s32 %s33, %s40
    %p140 = scmp.eq.s32.totalorder %s139, 0
    %s142 = sadd.s32 %s141, 1
    %s143 = scalar_select %p140, %s141, %s142
    %p146 = pneg %p140
    %p147 = scmp.eq.s32.totalorder %s25, 7
    %p148 = por %p146, %p147
    %p149 = scmp.ne.s32.totalorder %s141, %s144
    %p150 = scmp.eq.s32.totalorder %s25, 0
    %p151 = por %p149, %p150
    %p152 = scmp.ne.s32.totalorder %s141, %s144
    %p153 = scmp.eq.s32.totalorder %s30, 7
    %p154 = por %p152, %p153
    %p155 = scmp.ne.s32.totalorder %s144, %s145
    %p156 = scmp.eq.s32.totalorder %s30, 0
    %p157 = por %p155, %p156
    %p158 = scmp.ne.s32.totalorder %s144, %s145
    %p159 = scmp.eq.s32.totalorder %s31, 7
    %p160 = por %p158, %p159
    %p162 = scmp.ne.s32.totalorder %s145, %s161
    %p163 = scmp.eq.s32.totalorder %s31, 0
    %p164 = por %p162, %p163
    %s165 = ssub.s32 %s33, %s40
    %p166 = scmp.eq.s32.totalorder %s165, 0
    %s168 = sadd.s32 %s167, 1
    %s169 = scalar_select %p166, %s167, %s168
    %p172 = pneg %p166
    %p173 = scmp.eq.s32.totalorder %s25, 7
    %p174 = por %p172, %p173
    %p175 = scmp.ne.s32.totalorder %s167, %s170
    %p176 = scmp.eq.s32.totalorder %s25, 0
    %p177 = por %p175, %p176
    %p178 = scmp.ne.s32.totalorder %s167, %s170
    %p179 = scmp.eq.s32.totalorder %s30, 7
    %p180 = por %p178, %p179
    %p181 = scmp.ne.s32.totalorder %s170, %s171
    %p182 = scmp.eq.s32.totalorder %s30, 0
    %p183 = por %p181, %p182
    %p184 = scmp.ne.s32.totalorder %s170, %s171
    %p185 = scmp.eq.s32.totalorder %s31, 7
    %p186 = por %p184, %p185
    %p188 = scmp.ne.s32.totalorder %s171, %s187
    %p189 = scmp.eq.s32.totalorder %s31, 0
    %p190 = por %p188, %p189
    %s191 = ssub.s32 %s33, %s40
    %p192 = scmp.eq.s32.totalorder %s191, 0
    %s194 = sadd.s32 %s193, 1
    %s195 = scalar_select %p192, %s193, %s194
    %p198 = pneg %p192
    %p199 = scmp.eq.s32.totalorder %s25, 7
    %p200 = por %p198, %p199
    %p201 = scmp.ne.s32.totalorder %s193, %s196
    %p202 = scmp.eq.s32.totalorder %s25, 0
    %p203 = por %p201, %p202
    %p204 = scmp.ne.s32.totalorder %s193, %s196
    %p205 = scmp.eq.s32.totalorder %s30, 7
    %p206 = por %p204, %p205
    %p207 = scmp.ne.s32.totalorder %s196, %s197
    %p208 = scmp.eq.s32.totalorder %s30, 0
    %p209 = por %p207, %p208
    %p210 = scmp.ne.s32.totalorder %s196, %s197
    %p211 = scmp.eq.s32.totalorder %s31, 7
    %p212 = por %p210, %p211
    %p214 = scmp.ne.s32.totalorder %s197, %s213
    %p215 = scmp.eq.s32.totalorder %s31, 0
    %p216 = por %p214, %p215
    %s217 = ssub.s32 %s33, %s40
    %p218 = scmp.eq.s32.totalorder %s217, 0
    %s220 = sadd.s32 %s219, 1
    %s221 = scalar_select %p218, %s219, %s220
    %p224 = pneg %p218
    %p225 = scmp.eq.s32.totalorder %s25, 7
    %p226 = por %p224, %p225
    %p227 = scmp.ne.s32.totalorder %s219, %s222
    %p228 = scmp.eq.s32.totalorder %s25, 0
    %p229 = por %p227, %p228
    %p230 = scmp.ne.s32.totalorder %s219, %s222
    %p231 = scmp.eq.s32.totalorder %s30, 7
    %p232 = por %p230, %p231
    %p233 = scmp.ne.s32.totalorder %s222, %s223
    %p234 = scmp.eq.s32.totalorder %s30, 0
    %p235 = por %p233, %p234
    %p236 = scmp.ne.s32.totalorder %s222, %s223
    %p237 = scmp.eq.s32.totalorder %s31, 7
    %p238 = por %p236, %p237
    %p240 = scmp.ne.s32.totalorder %s223, %s239
    %p241 = scmp.eq.s32.totalorder %s31, 0
    %p242 = por %p240, %p241
    %s243 = ssub.s32 %s33, %s40
    %p244 = scmp.eq.s32.totalorder %s243, 0
    %s246 = sadd.s32 %s245, 1
    %s247 = scalar_select %p244, %s245, %s246
    %p250 = pneg %p244
    %p251 = scmp.eq.s32.totalorder %s25, 7
    %p252 = por %p250, %p251
    %p253 = scmp.ne.s32.totalorder %s245, %s248
    %p254 = scmp.eq.s32.totalorder %s25, 0
    %p255 = por %p253, %p254
    %p256 = scmp.ne.s32.totalorder %s245, %s248
    %p257 = scmp.eq.s32.totalorder %s30, 7
    %p258 = por %p256, %p257
    %p259 = scmp.ne.s32.totalorder %s248, %s249
    %p260 = scmp.eq.s32.totalorder %s30, 0
    %p261 = por %p259, %p260
    %p262 = scmp.ne.s32.totalorder %s248, %s249
    %p263 = scmp.eq.s32.totalorder %s31, 7
    %p264 = por %p262, %p263
    %p266 = scmp.ne.s32.totalorder %s249, %s265
    %p267 = scmp.eq.s32.totalorder %s31, 0
    %p268 = por %p266, %p267
    %s269 = ssub.s32 %s33, %s40
    %p270 = scmp.eq.s32.totalorder %s269, 0
    %s272 = sadd.s32 %s271, 1
    %s273 = scalar_select %p270, %s271, %s272
    %p276 = pneg %p270
    %p277 = scmp.eq.s32.totalorder %s25, 7
    %p278 = por %p276, %p277
    %p279 = scmp.ne.s32.totalorder %s271, %s274
    %p280 = scmp.eq.s32.totalorder %s25, 0
    %p281 = por %p279, %p280
    %p282 = scmp.ne.s32.totalorder %s271, %s274
    %p283 = scmp.eq.s32.totalorder %s30, 7
    %p284 = por %p282, %p283
    %p285 = scmp.ne.s32.totalorder %s274, %s275
    %p286 = scmp.eq.s32.totalorder %s30, 0
    %p287 = por %p285, %p286
    %p288 = scmp.ne.s32.totalorder %s274, %s275
    %p289 = scmp.eq.s32.totalorder %s31, 7
    %p290 = por %p288, %p289
    %p292 = scmp.ne.s32.totalorder %s275, %s291
    %p293 = scmp.eq.s32.totalorder %s31, 0
    %p294 = por %p292, %p293
    %s295 = ssub.s32 %s33, %s40
    %p296 = scmp.eq.s32.totalorder %s295, 0
    %s298 = sadd.s32 %s297, 1
    %s299 = scalar_select %p296, %s297, %s298
    %p302 = pneg %p296
    %p303 = scmp.eq.s32.totalorder %s25, 7
    %p304 = por %p302, %p303
    %p305 = scmp.ne.s32.totalorder %s297, %s300
    %p306 = scmp.eq.s32.totalorder %s25, 0
    %p307 = por %p305, %p306
    %p308 = scmp.ne.s32.totalorder %s297, %s300
    %p309 = scmp.eq.s32.totalorder %s30, 7
    %p310 = por %p308, %p309
    %p311 = scmp.ne.s32.totalorder %s300, %s301
    %p312 = scmp.eq.s32.totalorder %s30, 0
    %p313 = por %p311, %p312
    %p314 = scmp.ne.s32.totalorder %s300, %s301
    %p315 = scmp.eq.s32.totalorder %s31, 7
    %p316 = por %p314, %p315
    %p318 = scmp.ne.s32.totalorder %s301, %s317
    %p319 = scmp.eq.s32.totalorder %s31, 0
    %p320 = por %p318, %p319
    %s321 = ssub.s32 %s33, %s40
    %p322 = scmp.eq.s32.totalorder %s321, 0
    %s324 = sadd.s32 %s323, 1
    %s325 = scalar_select %p322, %s323, %s324
    %p328 = pneg %p322
    %p329 = scmp.eq.s32.totalorder %s25, 7
    %p330 = por %p328, %p329
    %p331 = scmp.ne.s32.totalorder %s323, %s326
    %p332 = scmp.eq.s32.totalorder %s25, 0
    %p333 = por %p331, %p332
    %p334 = scmp.ne.s32.totalorder %s323, %s326
    %p335 = scmp.eq.s32.totalorder %s30, 7
    %p336 = por %p334, %p335
    %p337 = scmp.ne.s32.totalorder %s326, %s327
    %p338 = scmp.eq.s32.totalorder %s30, 0
    %p339 = por %p337, %p338
    %p340 = scmp.ne.s32.totalorder %s326, %s327
    %p341 = scmp.eq.s32.totalorder %s31, 7
    %p342 = por %p340, %p341
    %p344 = scmp.ne.s32.totalorder %s327, %s343
    %p345 = scmp.eq.s32.totalorder %s31, 0
    %p346 = por %p344, %p345
    %s347 = ssub.s32 %s33, %s40
    %p348 = scmp.eq.s32.totalorder %s347, 0
    %s350 = sadd.s32 %s349, 1
    %s351 = scalar_select %p348, %s349, %s350
    %p354 = pneg %p348
    %p355 = scmp.eq.s32.totalorder %s25, 7
    %p356 = por %p354, %p355
    %p357 = scmp.ne.s32.totalorder %s349, %s352
    %p358 = scmp.eq.s32.totalorder %s25, 0
    %p359 = por %p357, %p358
    %p360 = scmp.ne.s32.totalorder %s349, %s352
    %p361 = scmp.eq.s32.totalorder %s30, 7
    %p362 = por %p360, %p361
    %p363 = scmp.ne.s32.totalorder %s352, %s353
    %p364 = scmp.eq.s32.totalorder %s30, 0
    %p365 = por %p363, %p364
    %p366 = scmp.ne.s32.totalorder %s352, %s353
    %p367 = scmp.eq.s32.totalorder %s31, 7
    %p368 = por %p366, %p367
    %p370 = scmp.ne.s32.totalorder %s353, %s369
    %p371 = scmp.eq.s32.totalorder %s31, 0
    %p372 = por %p370, %p371
    %s373 = ssub.s32 %s33, %s40
    %p374 = scmp.eq.s32.totalorder %s373, 0
    %s376 = sadd.s32 %s375, 1
    %s377 = scalar_select %p374, %s375, %s376
    %p380 = pneg %p374
    %p381 = scmp.eq.s32.totalorder %s25, 7
    %p382 = por %p380, %p381
    %p383 = scmp.ne.s32.totalorder %s375, %s378
    %p384 = scmp.eq.s32.totalorder %s25, 0
    %p385 = por %p383, %p384
    %p386 = scmp.ne.s32.totalorder %s375, %s378
    %p387 = scmp.eq.s32.totalorder %s30, 7
    %p388 = por %p386, %p387
    %p389 = scmp.ne.s32.totalorder %s378, %s379
    %p390 = scmp.eq.s32.totalorder %s30, 0
    %p391 = por %p389, %p390
    %p392 = scmp.ne.s32.totalorder %s378, %s379
    %p393 = scmp.eq.s32.totalorder %s31, 7
    %p394 = por %p392, %p393
    %p396 = scmp.ne.s32.totalorder %s379, %s395
    %p397 = scmp.eq.s32.totalorder %s31, 0
    %p398 = por %p396, %p397
    %s399 = ssub.s32 %s33, %s40
    %p400 = scmp.eq.s32.totalorder %s399, 0
    %s402 = sadd.s32 %s401, 1
    %s403 = scalar_select %p400, %s401, %s402
    %p406 = pneg %p400
    %p407 = scmp.eq.s32.totalorder %s25, 7
    %p408 = por %p406, %p407
    %p409 = scmp.ne.s32.totalorder %s401, %s404
    %p410 = scmp.eq.s32.totalorder %s25, 0
    %p411 = por %p409, %p410
    %p412 = scmp.ne.s32.totalorder %s401, %s404
    %p413 = scmp.eq.s32.totalorder %s30, 7
    %p414 = por %p412, %p413
    %p415 = scmp.ne.s32.totalorder %s404, %s405
    %p416 = scmp.eq.s32.totalorder %s30, 0
    %p417 = por %p415, %p416
    %p418 = scmp.ne.s32.totalorder %s404, %s405
    %p419 = scmp.eq.s32.totalorder %s31, 7
    %p420 = por %p418, %p419
    %p422 = scmp.ne.s32.totalorder %s405, %s421
    %p423 = scmp.eq.s32.totalorder %s31, 0
    %p424 = por %p422, %p423
    %s426 = sadd.s32 %s425, 1
    %p429 = scmp.eq.s32.totalorder %s25, 7
    %p430 = scmp.ne.s32.totalorder %s425, %s427
    %p431 = scmp.eq.s32.totalorder %s25, 0
    %p432 = por %p430, %p431
    %p433 = scmp.ne.s32.totalorder %s425, %s427
    %p434 = scmp.eq.s32.totalorder %s30, 7
    %p435 = por %p433, %p434
    %p436 = scmp.ne.s32.totalorder %s427, %s428
    %p437 = scmp.eq.s32.totalorder %s30, 0
    %p438 = por %p436, %p437
    %p439 = scmp.ne.s32.totalorder %s427, %s428
    %p440 = scmp.eq.s32.totalorder %s31, 7
    %p441 = por %p439, %p440
    %p443 = scmp.ne.s32.totalorder %s428, %s442
    %p444 = scmp.eq.s32.totalorder %s31, 0
    %p445 = por %p443, %p444
    %s447 = sadd.s32 %s446, 1
    %p450 = scmp.eq.s32.totalorder %s25, 7
    %p451 = scmp.ne.s32.totalorder %s446, %s448
    %p452 = scmp.eq.s32.totalorder %s25, 0
    %p453 = por %p451, %p452
    %p454 = scmp.ne.s32.totalorder %s446, %s448
    %p455 = scmp.eq.s32.totalorder %s30, 7
    %p456 = por %p454, %p455
    %p457 = scmp.ne.s32.totalorder %s448, %s449
    %p458 = scmp.eq.s32.totalorder %s30, 0
    %p459 = por %p457, %p458
    %p460 = scmp.ne.s32.totalorder %s448, %s449
    %p461 = scmp.eq.s32.totalorder %s31, 7
    %p462 = por %p460, %p461
    %p464 = scmp.ne.s32.totalorder %s449, %s463
    %p465 = scmp.eq.s32.totalorder %s31, 0
    %p466 = por %p464, %p465
    %s468 = sadd.s32 %s467, 1
    %p471 = scmp.eq.s32.totalorder %s25, 7
    %p472 = scmp.ne.s32.totalorder %s467, %s469
    %p473 = scmp.eq.s32.totalorder %s25, 0
    %p474 = por %p472, %p473
    %p475 = scmp.ne.s32.totalorder %s467, %s469
    %p476 = scmp.eq.s32.totalorder %s30, 7
    %p477 = por %p475, %p476
    %p478 = scmp.ne.s32.totalorder %s469, %s470
    %p479 = scmp.eq.s32.totalorder %s30, 0
    %p480 = por %p478, %p479
    %p481 = scmp.ne.s32.totalorder %s469, %s470
    %p482 = scmp.eq.s32.totalorder %s31, 7
    %p483 = por %p481, %p482
    %p485 = scmp.ne.s32.totalorder %s470, %s484
    %p486 = scmp.eq.s32.totalorder %s31, 0
    %p487 = por %p485, %p486
    %s489 = sadd.s32 %s488, 1
    %p492 = scmp.eq.s32.totalorder %s25, 7
    %p493 = scmp.ne.s32.totalorder %s488, %s490
    %p494 = scmp.eq.s32.totalorder %s25, 0
    %p495 = por %p493, %p494
    %p496 = scmp.ne.s32.totalorder %s488, %s490
    %p497 = scmp.eq.s32.totalorder %s30, 7
    %p498 = por %p496, %p497
    %p499 = scmp.ne.s32.totalorder %s490, %s491
    %p500 = scmp.eq.s32.totalorder %s30, 0
    %p501 = por %p499, %p500
    %p502 = scmp.ne.s32.totalorder %s490, %s491
    %p503 = scmp.eq.s32.totalorder %s31, 7
    %p504 = por %p502, %p503
    %p506 = scmp.ne.s32.totalorder %s491, %s505
    %p507 = scmp.eq.s32.totalorder %s31, 0
    %p508 = por %p506, %p507
    %s509 = ssub.s32 %s32, %s44
    %p510 = scmp.eq.s32.totalorder %s509, 0
    %s512 = sadd.s32 %s511, 1
    %s513 = scalar_select %p510, %s511, %s512
    %p516 = pneg %p510
    %p517 = scmp.eq.s32.totalorder %s25, 7
    %p518 = por %p516, %p517
    %p519 = scmp.ne.s32.totalorder %s511, %s514
    %p520 = scmp.eq.s32.totalorder %s25, 0
    %p521 = por %p519, %p520
    %p522 = scmp.ne.s32.totalorder %s511, %s514
    %p523 = scmp.eq.s32.totalorder %s30, 7
    %p524 = por %p522, %p523
    %p525 = scmp.ne.s32.totalorder %s514, %s515
    %p526 = scmp.eq.s32.totalorder %s30, 0
    %p527 = por %p525, %p526
    %p528 = scmp.ne.s32.totalorder %s514, %s515
    %p529 = scmp.eq.s32.totalorder %s31, 7
    %p530 = por %p528, %p529
    %p532 = scmp.ne.s32.totalorder %s515, %s531
    %p533 = scmp.eq.s32.totalorder %s31, 0
    %p534 = por %p532, %p533
    %p535 = scmp.le.s32.totalorder 1, %s25
    %p536 = scmp.lt.s32.totalorder %s25, 9
    %p537 = pnand %p535, %p536
    %p538 = pneg %p537
    // Predicated region
    $region9: #{vit_forward.1} parent=5 // pred_check
      _
    $region10: #{vit_forward.1} parent=5 // pred_check_branch
      %540 = sbr.rel (%p537) target = $region12
    $region11: #{vit_forward.1} parent=5 // pred_region
      %s541 = ssub.s32 %s25, 1
      // Predicated region
      $region13: #{vit_forward.1} parent=11 // pred_check
        %p542 = pneg %p84
      $region14: #{vit_forward.1} parent=11 // pred_check_branch
        %544 = sbr.rel (%p542) target = $region16
      $region15: #{vit_forward.1} parent=11 // pred_region
        _
      $region16: #{vit_forward.1} parent=11 // pred_fallthru
        _
      // Predicated region
      $region17: #{vit_forward.1} parent=11 // pred_check
        %p545 = pneg %p105
      $region18: #{vit_forward.1} parent=11 // pred_check_branch
        %547 = sbr.rel (%p545) target = $region20
      $region19: #{vit_forward.1} parent=11 // pred_region
        _
      $region20: #{vit_forward.1} parent=11 // pred_fallthru
        _
      // Predicated region
      $region21: #{vit_forward.1} parent=11 // pred_check
        %p548 = pneg %p438
      $region22: #{vit_forward.1} parent=11 // pred_check_branch
        %550 = sbr.rel (%p548) target = $region24
      $region23: #{vit_forward.1} parent=11 // pred_region
        _
      $region24: #{vit_forward.1} parent=11 // pred_fallthru
        _
      // Predicated region
      $region25: #{vit_forward.1} parent=11 // pred_check
        %p551 = pneg %p459
      $region26: #{vit_forward.1} parent=11 // pred_check_branch
        %553 = sbr.rel (%p551) target = $region28
      $region27: #{vit_forward.1} parent=11 // pred_region
        _
      $region28: #{vit_forward.1} parent=11 // pred_fallthru
        _
      // Predicated region
      $region29: #{vit_forward.1} parent=11 // pred_check
        %p554 = pneg %p480
      $region30: #{vit_forward.1} parent=11 // pred_check_branch
        %556 = sbr.rel (%p554) target = $region32
      $region31: #{vit_forward.1} parent=11 // pred_region
        _
      $region32: #{vit_forward.1} parent=11 // pred_fallthru
        _
      // Predicated region
      $region33: #{vit_forward.1} parent=11 // pred_check
        %p557 = pneg %p501
      $region34: #{vit_forward.1} parent=11 // pred_check_branch
        %559 = sbr.rel (%p557) target = $region36
      $region35: #{vit_forward.1} parent=11 // pred_region
        _
      $region36: #{vit_forward.1} parent=11 // pred_fallthru
        _
    $region12: #{vit_forward.1} parent=5 // pred_fallthru
      _
    %p560 = scmp.lt.s32.totalorder %s25, 8
    // Predicated region
    $region37: #{vit_forward.1} parent=5 // pred_check
      %p561 = pneg %p560
    $region38: #{vit_forward.1} parent=5 // pred_check_branch
      %563 = sbr.rel (%p561) target = $region40
    $region39: #{vit_forward.1} parent=5 // pred_region
      // Predicated region
      $region41: #{vit_forward.1} parent=39 // pred_check
        %p564 = pneg %p57
      $region42: #{vit_forward.1} parent=39 // pred_check_branch
        %566 = sbr.rel (%p564) target = $region44
      $region43: #{vit_forward.1} parent=39 // pred_region
        %p567 = scmp.lt.s32.totalorder %s32, 1
        %s568 = scalar_select %p567, %s32, 1
        %s569 = smul.addr %s568, 8
        %s570 = smul.addr %s569, 8
        %s571 = scalar_lea.vmem %s0, %s570
      $region44: #{vit_forward.1} parent=39 // pred_fallthru
        _
      // Predicated region
      $region45: #{vit_forward.1} parent=39 // pred_check
        %p572 = pneg %p125
      $region46: #{vit_forward.1} parent=39 // pred_check_branch
        %574 = sbr.rel (%p572) target = $region48
      $region47: #{vit_forward.1} parent=39 // pred_region
        %p575 = scmp.lt.s32.totalorder %s33, 3
        %s576 = scalar_select %p575, %s33, 3
        %s577 = scalar_lea.vmem %s3, %s576
      $region48: #{vit_forward.1} parent=39 // pred_fallthru
        _
      // Predicated region
      $region49: #{vit_forward.1} parent=39 // pred_check
        %p578 = pneg %p151
      $region50: #{vit_forward.1} parent=39 // pred_check_branch
        %580 = sbr.rel (%p578) target = $region52
      $region51: #{vit_forward.1} parent=39 // pred_region
        %p581 = scmp.lt.s32.totalorder %s33, 3
        %s582 = scalar_select %p581, %s33, 3
        %s583 = scalar_lea.vmem %s4, %s582
      $region52: #{vit_forward.1} parent=39 // pred_fallthru
        _
      // Predicated region
      $region53: #{vit_forward.1} parent=39 // pred_check
        %p584 = pneg %p177
      $region54: #{vit_forward.1} parent=39 // pred_check_branch
        %586 = sbr.rel (%p584) target = $region56
      $region55: #{vit_forward.1} parent=39 // pred_region
        %p587 = scmp.lt.s32.totalorder %s33, 3
        %s588 = scalar_select %p587, %s33, 3
        %s589 = smul.addr %s588, 48
        %s590 = smul.addr %s589, 4
        %s591 = scalar_lea.vmem %s5, %s590
      $region56: #{vit_forward.1} parent=39 // pred_fallthru
        _
      // Predicated region
      $region57: #{vit_forward.1} parent=39 // pred_check
        %p592 = pneg %p203
      $region58: #{vit_forward.1} parent=39 // pred_check_branch
        %594 = sbr.rel (%p592) target = $region60
      $region59: #{vit_forward.1} parent=39 // pred_region
        %p595 = scmp.lt.s32.totalorder %s33, 3
        %s596 = scalar_select %p595, %s33, 3
        %s597 = smul.addr %s596, 3
        %s598 = scalar_lea.vmem %s6, %s597
      $region60: #{vit_forward.1} parent=39 // pred_fallthru
        _
      // Predicated region
      $region61: #{vit_forward.1} parent=39 // pred_check
        %p599 = pneg %p229
      $region62: #{vit_forward.1} parent=39 // pred_check_branch
        %601 = sbr.rel (%p599) target = $region64
      $region63: #{vit_forward.1} parent=39 // pred_region
        %p602 = scmp.lt.s32.totalorder %s33, 3
        %s603 = scalar_select %p602, %s33, 3
        %s604 = smul.addr %s603, 16
        %s605 = smul.addr %s604, 4
        %s606 = scalar_lea.vmem %s7, %s605
      $region64: #{vit_forward.1} parent=39 // pred_fallthru
        _
      // Predicated region
      $region65: #{vit_forward.1} parent=39 // pred_check
        %p607 = pneg %p255
      $region66: #{vit_forward.1} parent=39 // pred_check_branch
        %609 = sbr.rel (%p607) target = $region68
      $region67: #{vit_forward.1} parent=39 // pred_region
        %p610 = scmp.lt.s32.totalorder %s33, 3
        %s611 = scalar_select %p610, %s33, 3
        %s612 = scalar_lea.vmem %s8, %s611
      $region68: #{vit_forward.1} parent=39 // pred_fallthru
        _
      // Predicated region
      $region69: #{vit_forward.1} parent=39 // pred_check
        %p613 = pneg %p281
      $region70: #{vit_forward.1} parent=39 // pred_check_branch
        %615 = sbr.rel (%p613) target = $region72
      $region71: #{vit_forward.1} parent=39 // pred_region
        %p616 = scmp.lt.s32.totalorder %s33, 3
        %s617 = scalar_select %p616, %s33, 3
        %s618 = scalar_lea.vmem %s9, %s617
      $region72: #{vit_forward.1} parent=39 // pred_fallthru
        _
      // Predicated region
      $region73: #{vit_forward.1} parent=39 // pred_check
        %p619 = pneg %p307
      $region74: #{vit_forward.1} parent=39 // pred_check_branch
        %621 = sbr.rel (%p619) target = $region76
      $region75: #{vit_forward.1} parent=39 // pred_region
        %p622 = scmp.lt.s32.totalorder %s33, 3
        %s623 = scalar_select %p622, %s33, 3
        %s624 = scalar_lea.vmem %s10, %s623
      $region76: #{vit_forward.1} parent=39 // pred_fallthru
        _
      // Predicated region
      $region77: #{vit_forward.1} parent=39 // pred_check
        %p625 = pneg %p333
      $region78: #{vit_forward.1} parent=39 // pred_check_branch
        %627 = sbr.rel (%p625) target = $region80
      $region79: #{vit_forward.1} parent=39 // pred_region
        %p628 = scmp.lt.s32.totalorder %s33, 3
        %s629 = scalar_select %p628, %s33, 3
        %s630 = smul.addr %s629, 64
        %s631 = smul.addr %s630, 4
        %s632 = scalar_lea.vmem %s11, %s631
      $region80: #{vit_forward.1} parent=39 // pred_fallthru
        _
      // Predicated region
      $region81: #{vit_forward.1} parent=39 // pred_check
        %p633 = pneg %p359
      $region82: #{vit_forward.1} parent=39 // pred_check_branch
        %635 = sbr.rel (%p633) target = $region84
      $region83: #{vit_forward.1} parent=39 // pred_region
        %p636 = scmp.lt.s32.totalorder %s33, 3
        %s637 = scalar_select %p636, %s33, 3
        %s638 = smul.addr %s637, 4
        %s639 = scalar_lea.vmem %s12, %s638
      $region84: #{vit_forward.1} parent=39 // pred_fallthru
        _
      // Predicated region
      $region85: #{vit_forward.1} parent=39 // pred_check
        %p640 = pneg %p385
      $region86: #{vit_forward.1} parent=39 // pred_check_branch
        %642 = sbr.rel (%p640) target = $region88
      $region87: #{vit_forward.1} parent=39 // pred_region
        %p643 = scmp.lt.s32.totalorder %s33, 3
        %s644 = scalar_select %p643, %s33, 3
        %s645 = smul.addr %s644, 64
        %s646 = smul.addr %s645, 4
        %s647 = scalar_lea.vmem %s13, %s646
      $region88: #{vit_forward.1} parent=39 // pred_fallthru
        _
      // Predicated region
      $region89: #{vit_forward.1} parent=39 // pred_check
        %p648 = pneg %p411
      $region90: #{vit_forward.1} parent=39 // pred_check_branch
        %650 = sbr.rel (%p648) target = $region92
      $region91: #{vit_forward.1} parent=39 // pred_region
        %p651 = scmp.lt.s32.totalorder %s33, 3
        %s652 = scalar_select %p651, %s33, 3
        %s653 = scalar_lea.vmem %s14, %s652
      $region92: #{vit_forward.1} parent=39 // pred_fallthru
        _
    $region40: #{vit_forward.1} parent=5 // pred_fallthru
      _
    %p654 = scmp.le.s32.totalorder 1, %s25
    %p655 = scmp.lt.s32.totalorder %s25, 9
    %p656 = pnand %p654, %p655
    %p657 = pneg %p656
    // Predicated region
    $region93: #{vit_forward.1} parent=5 // pred_check
      _
    $region94: #{vit_forward.1} parent=5 // pred_check_branch
      %659 = sbr.rel (%p656) target = $region96
    $region95: #{vit_forward.1} parent=5 // pred_region
      %s660 = ssub.s32 %s25, 1
      %p661 = scmp.lt.s32.totalorder %s34, 1
      %s662 = scalar_select %p661, %s34, 1
      %s663 = smul.addr %s662, 8
      %s664 = smul.addr %s663, 8
      %s665 = scalar_lea.vmem %s0, %s664
      %p666 = pneg %p63
      %p667 = pneg %p60
      %p668 = pneg %p84
      %p669 = pneg %p81
      %p670 = pneg %p105
      %p671 = pneg %p102
      %p672 = scmp.lt.s32.totalorder %s35, 3
      %s673 = scalar_select %p672, %s35, 3
      %s674 = scalar_lea.vmem %s3, %s673
      %p675 = pneg %p131
      %p676 = pneg %p128
      %p677 = scmp.lt.s32.totalorder %s35, 3
      %s678 = scalar_select %p677, %s35, 3
      %s679 = scalar_lea.vmem %s4, %s678
      %p680 = pneg %p157
      %p681 = pneg %p154
      %p682 = scmp.lt.s32.totalorder %s35, 3
      %s683 = scalar_select %p682, %s35, 3
      %s684 = smul.addr %s683, 48
      %s685 = smul.addr %s684, 4
      %s686 = scalar_lea.vmem %s5, %s685
      %p687 = pneg %p183
      %p688 = pneg %p180
      %p689 = scmp.lt.s32.totalorder %s35, 3
      %s690 = scalar_select %p689, %s35, 3
      %s691 = smul.addr %s690, 3
      %s692 = scalar_lea.vmem %s6, %s691
      %p693 = pneg %p209
      %p694 = pneg %p206
      %p695 = scmp.lt.s32.totalorder %s35, 3
      %s696 = scalar_select %p695, %s35, 3
      %s697 = smul.addr %s696, 16
      %s698 = smul.addr %s697, 4
      %s699 = scalar_lea.vmem %s7, %s698
      %p700 = pneg %p235
      %p701 = pneg %p232
      %p702 = scmp.lt.s32.totalorder %s35, 3
      %s703 = scalar_select %p702, %s35, 3
      %s704 = scalar_lea.vmem %s8, %s703
      %p705 = pneg %p261
      %p706 = pneg %p258
      %p707 = scmp.lt.s32.totalorder %s35, 3
      %s708 = scalar_select %p707, %s35, 3
      %s709 = scalar_lea.vmem %s9, %s708
      %p710 = pneg %p287
      %p711 = pneg %p284
      %p712 = scmp.lt.s32.totalorder %s35, 3
      %s713 = scalar_select %p712, %s35, 3
      %s714 = scalar_lea.vmem %s10, %s713
      %p715 = pneg %p313
      %p716 = pneg %p310
      %p717 = scmp.lt.s32.totalorder %s35, 3
      %s718 = scalar_select %p717, %s35, 3
      %s719 = smul.addr %s718, 64
      %s720 = smul.addr %s719, 4
      %s721 = scalar_lea.vmem %s11, %s720
      %p722 = pneg %p339
      %p723 = pneg %p336
      %p724 = scmp.lt.s32.totalorder %s35, 3
      %s725 = scalar_select %p724, %s35, 3
      %s726 = smul.addr %s725, 4
      %s727 = scalar_lea.vmem %s12, %s726
      %p728 = pneg %p365
      %p729 = pneg %p362
      %p730 = scmp.lt.s32.totalorder %s35, 3
      %s731 = scalar_select %p730, %s35, 3
      %s732 = smul.addr %s731, 64
      %s733 = smul.addr %s732, 4
      %s734 = scalar_lea.vmem %s13, %s733
      %p735 = pneg %p391
      %p736 = pneg %p388
      %p737 = scmp.lt.s32.totalorder %s35, 3
      %s738 = scalar_select %p737, %s35, 3
      %s739 = scalar_lea.vmem %s14, %s738
      %p740 = pneg %p417
      %p741 = pneg %p414
      %p742 = pneg %p438
      %p743 = pneg %p435
      %p744 = pneg %p459
      %p745 = pneg %p456
      %p746 = pneg %p480
      %p747 = pneg %p477
      %p748 = pneg %p501
      %p749 = pneg %p498
      %p750 = pneg %p527
      %p751 = pneg %p524
      %p752 = scmp.lt.s32.totalorder %s34, 1
      %s753 = scalar_select %p752, %s34, 1
      %s754 = scalar_lea.vmem %s19, %s753
      %p755 = scmp.lt.s32.totalorder %s34, 1
      %s756 = scalar_select %p755, %s34, 1
      %s757 = smul.addr %s756, 8
      %s758 = smul.addr %s757, 8
      %s759 = scalar_lea.vmem %s0, %s758
      %p760 = scmp.lt.s32.totalorder %s35, 3
      %s761 = scalar_select %p760, %s35, 3
      %s762 = scalar_lea.vmem %s3, %s761
      %p763 = scmp.lt.s32.totalorder %s35, 3
      %s764 = scalar_select %p763, %s35, 3
      %s765 = scalar_lea.vmem %s4, %s764
      %p766 = scmp.lt.s32.totalorder %s35, 3
      %s767 = scalar_select %p766, %s35, 3
      %s768 = smul.addr %s767, 48
      %s769 = smul.addr %s768, 4
      %s770 = scalar_lea.vmem %s5, %s769
      %p771 = scmp.lt.s32.totalorder %s35, 3
      %s772 = scalar_select %p771, %s35, 3
      %s773 = smul.addr %s772, 3
      %s774 = scalar_lea.vmem %s6, %s773
      %p775 = scmp.lt.s32.totalorder %s35, 3
      %s776 = scalar_select %p775, %s35, 3
      %s777 = smul.addr %s776, 16
      %s778 = smul.addr %s777, 4
      %s779 = scalar_lea.vmem %s7, %s778
      %p780 = scmp.lt.s32.totalorder %s35, 3
      %s781 = scalar_select %p780, %s35, 3
      %s782 = scalar_lea.vmem %s8, %s781
      %p783 = scmp.lt.s32.totalorder %s35, 3
      %s784 = scalar_select %p783, %s35, 3
      %s785 = scalar_lea.vmem %s9, %s784
      %p786 = scmp.lt.s32.totalorder %s35, 3
      %s787 = scalar_select %p786, %s35, 3
      %s788 = scalar_lea.vmem %s10, %s787
      %p789 = scmp.lt.s32.totalorder %s35, 3
      %s790 = scalar_select %p789, %s35, 3
      %s791 = smul.addr %s790, 64
      %s792 = smul.addr %s791, 4
      %s793 = scalar_lea.vmem %s11, %s792
      %p794 = scmp.lt.s32.totalorder %s35, 3
      %s795 = scalar_select %p794, %s35, 3
      %s796 = smul.addr %s795, 4
      %s797 = scalar_lea.vmem %s12, %s796
      %p798 = scmp.lt.s32.totalorder %s35, 3
      %s799 = scalar_select %p798, %s35, 3
      %s800 = smul.addr %s799, 64
      %s801 = smul.addr %s800, 4
      %s802 = scalar_lea.vmem %s13, %s801
      %p803 = scmp.lt.s32.totalorder %s35, 3
      %s804 = scalar_select %p803, %s35, 3
      %s805 = scalar_lea.vmem %s14, %s804
      %p806 = scmp.lt.s32.totalorder %s34, 1
      %s807 = scalar_select %p806, %s34, 1
      %s808 = scalar_lea.vmem %s19, %s807
      %p810 = scmp.eq.s32.totalorder %s35, 0
      // Predicated region
      $region97: #{vit_forward.1} parent=95 // pred_check
        %p811 = pneg %p810
      $region98: #{vit_forward.1} parent=95 // pred_check_branch
        %813 = sbr.rel (%p811) target = $region100
      $region99: #{vit_forward.1} parent=95 // pred_region
        %v814 = vld [vmem:[%s759] sm:$0xff]
        %v815 = vld [vmem:[%s759 + $0x8] sm:$0xff]
        %v816 = vld [vmem:[%s759 + $0x10] sm:$0xff]
        %v817 = vld [vmem:[%s759 + $0x18] sm:$0xff]
        %v818 = vld [vmem:[%s759 + $0x20] sm:$0xff]
        %v819 = vld [vmem:[%s759 + $0x28] sm:$0xff]
        %v820 = vpack.c.bf16 %v816, %v814
        %v821 = vpack.c.bf16 %v817, %v815
        %v822 = vpack.c.bf16 %v818, %v818
        %v823 = vpack.c.bf16 %v819, %v819
        %v824 = vld [vmem:[%s1] sm:$0xf]
        %v825 = vld [vmem:[%s1 + $0x4] sm:$0xf]
        %v826 = vld [vmem:[%s1 + $0x8] sm:$0xf]
        %v827 = vld [vmem:[%s1 + $0xc] sm:$0xf]
        %v828 = vld [vmem:[%s1 + $0x10] sm:$0xf]
        %v829 = vld [vmem:[%s1 + $0x14] sm:$0xf]
        %v830 = vld [vmem:[%s1 + $0x18] sm:$0xf]
        %v831 = vld [vmem:[%s1 + $0x1c] sm:$0xf]
        %v832 = vld [vmem:[%s1 + $0x20] sm:$0xf]
        %v833 = vld [vmem:[%s1 + $0x24] sm:$0xf]
        %v834 = vld [vmem:[%s1 + $0x28] sm:$0xf]
        %v835 = vld [vmem:[%s1 + $0x2c] sm:$0xf]
        %v836 = vld [vmem:[%s1 + $0x30] sm:$0xf]
        %v837 = vld [vmem:[%s1 + $0x34] sm:$0xf]
        %v838 = vld [vmem:[%s1 + $0x38] sm:$0xf]
        %v839 = vld [vmem:[%s1 + $0x3c] sm:$0xf]
        %v840 = vld [vmem:[%s1 + $0x40] sm:$0xf]
        %v841 = vld [vmem:[%s1 + $0x44] sm:$0xf]
        %v842 = vld [vmem:[%s1 + $0x48] sm:$0xf]
        %v843 = vld [vmem:[%s1 + $0x4c] sm:$0xf]
        %v844 = vld [vmem:[%s1 + $0x50] sm:$0xf]
        %v845 = vld [vmem:[%s1 + $0x54] sm:$0xf]
        %v846 = vld [vmem:[%s1 + $0x58] sm:$0xf]
        %v847 = vld [vmem:[%s1 + $0x5c] sm:$0xf]
        %v848 = vld [vmem:[%s1 + $0x60] sm:$0xf]
        %v849 = vld [vmem:[%s1 + $0x64] sm:$0xf]
        %v850 = vld [vmem:[%s1 + $0x68] sm:$0xf]
        %v851 = vld [vmem:[%s1 + $0x6c] sm:$0xf]
        %v852 = vld [vmem:[%s1 + $0x70] sm:$0xf]
        %v853 = vld [vmem:[%s1 + $0x74] sm:$0xf]
        %v854 = vld [vmem:[%s1 + $0x78] sm:$0xf]
        %v855 = vld [vmem:[%s1 + $0x7c] sm:$0xf]
        %v856 = vld [vmem:[%s2] sm:$0xff]
        %v857 = vld [vmem:[%s2 + $0x8] sm:$0xff]
        %v858 = vld [vmem:[%s2 + $0x10] sm:$0xff]
        %v891 = vunpack.c.l.b16 %v824
        %v892 = vunpack.c.l.b16 %v825
        %v893 = vunpack.c.l.b16 %v826
        %v894 = vunpack.c.l.b16 %v827
        %v895 = vunpack.c.l.b16 %v828
        %v896 = vunpack.c.l.b16 %v829
        %v897 = vunpack.c.l.b16 %v830
        %v898 = vunpack.c.l.b16 %v831
        %v899 = vunpack.c.l.b16 %v832
        %v900 = vunpack.c.l.b16 %v833
        %v901 = vunpack.c.l.b16 %v834
        %v902 = vunpack.c.l.b16 %v835
        %v903 = vunpack.c.l.b16 %v836
        %v904 = vunpack.c.l.b16 %v837
        %v905 = vunpack.c.l.b16 %v838
        %v906 = vunpack.c.l.b16 %v839
        %v907 = vunpack.c.l.b16 %v840
        %v908 = vunpack.c.l.b16 %v841
        %v909 = vunpack.c.l.b16 %v842
        %v910 = vunpack.c.l.b16 %v843
        %v911 = vunpack.c.l.b16 %v844
        %v912 = vunpack.c.l.b16 %v845
        %v913 = vunpack.c.l.b16 %v846
        %v914 = vunpack.c.l.b16 %v847
        %v915 = vunpack.c.l.b16 %v848
        %v916 = vunpack.c.l.b16 %v849
        %v917 = vunpack.c.l.b16 %v850
        %v918 = vunpack.c.l.b16 %v851
        %v919 = vunpack.c.l.b16 %v852
        %v920 = vunpack.c.l.b16 %v853
        %v921 = vunpack.c.l.b16 %v854
        %v922 = vunpack.c.l.b16 %v855
        %v923 = vpack.c.b16 %v892, %v891
        %v924 = vpack.c.b16 %v894, %v893
        %v925 = vpack.c.b16 %v896, %v895
        %v926 = vpack.c.b16 %v898, %v897
        %v927 = vpack.c.b16 %v900, %v899
        %v928 = vpack.c.b16 %v902, %v901
        %v929 = vpack.c.b16 %v904, %v903
        %v930 = vpack.c.b16 %v906, %v905
        %v931 = vpack.c.b16 %v908, %v907
        %v932 = vpack.c.b16 %v910, %v909
        %v933 = vpack.c.b16 %v912, %v911
        %v934 = vpack.c.b16 %v914, %v913
        %v935 = vpack.c.b16 %v916, %v915
        %v936 = vpack.c.b16 %v918, %v917
        %v937 = vpack.c.b16 %v920, %v919
        %v938 = vpack.c.b16 %v922, %v921
        %955 = vmatprep.subr.bf16.mxu0 0
        %956 = vmatpush1.bf16.msra.mxu0 %v930
        %957 = vmatprep.subr.bf16.mxu0 0
        %958 = vmatpush1.bf16.msra.mxu0 %v929
        %959 = vmatprep.subr.bf16.mxu0 0
        %960 = vmatpush1.bf16.msra.mxu0 %v928
        %961 = vmatprep.subr.bf16.mxu0 0
        %962 = vmatpush1.bf16.msra.mxu0 %v927
        %963 = vmatprep.subr.bf16.mxu0 0
        %964 = vmatpush1.bf16.msra.mxu0 %v926
        %965 = vmatprep.subr.bf16.mxu0 0
        %966 = vmatpush1.bf16.msra.mxu0 %v925
        %967 = vmatprep.subr.bf16.mxu0 0
        %968 = vmatpush1.bf16.msra.mxu0 %v924
        %969 = vmatprep.subr.bf16.mxu0 0
        %970 = vmatpush1.bf16.msra.mxu0 %v923
        %971 = vmatprep.subr.bf16.mxu0 0
        %972 = vmatpush2.bf16.msra.mxu0 %v938
        %973 = vmatprep.subr.bf16.mxu0 0
        %974 = vmatpush2.bf16.msra.mxu0 %v937
        %975 = vmatprep.subr.bf16.mxu0 0
        %976 = vmatpush2.bf16.msra.mxu0 %v936
        %977 = vmatprep.subr.bf16.mxu0 0
        %978 = vmatpush2.bf16.msra.mxu0 %v935
        %979 = vmatprep.subr.bf16.mxu0 0
        %980 = vmatpush2.bf16.msra.mxu0 %v934
        %981 = vmatprep.subr.bf16.mxu0 0
        %982 = vmatpush2.bf16.msra.mxu0 %v933
        %983 = vmatprep.subr.bf16.mxu0 0
        %984 = vmatpush2.bf16.msra.mxu0 %v932
        %985 = vmatprep.subr.bf16.mxu0 0
        %986 = vmatpush2.bf16.msra.mxu0 %v931
        %987 = vmatprep.mubr.bf16.mxu0 %v821
        %988 = vmatmul.mubr.bf16.gmra.mxu0 %v820
        %v989 = vpop.f32.mrf.mxu0
        %v990 = vadd.f32 %v856, %v989
        %v991 = vpop.f32.mrf.mxu0
        %v992 = vpop.f32.mrf.mxu0
        %v993 = vadd.f32 %v857, %v992
        %v994 = vpop.f32.mrf.mxu0
        %995 = vmatprep.mubr.bf16.mxu0 %v823
        %996 = vmatmul.mubr.bf16.gmra.mxu0 %v822
        %v997 = vpop.f32.mrf.mxu0
        %v998 = vadd.f32 %v858, %v997
        %v999 = vpop.f32.mrf.mxu0
        %v1000 = vpop.f32.mrf.mxu0
        %v1001 = vpop.f32.mrf.mxu0
        %1002 = vdwg.mxu0
        %1003 = vst [vmem:[#allocation2] sm:$0xff] %v990
        %1004 = vst [vmem:[#allocation2 + $0x8] sm:$0xff] %v993
        %1005 = vst [vmem:[#allocation2 + $0x10] sm:$0xff] %v998
      $region100: #{vit_forward.1} parent=95 // pred_fallthru
        _
      %v1006 = vld [vmem:[#allocation2] sm:$0xff]
      %v1007 = vld [vmem:[#allocation2 + $0x8] sm:$0xff]
      %v1008 = vld [vmem:[#allocation2 + $0x10] sm:$0xff]
      %v1009 = vld [vmem:[%s762] sm:$0x1]
      %v1010 = vld [vmem:[%s765] sm:$0x1]
      %1011 = vadd.xlane.f32.xlu0 %v1006
      %v1012 = vpop.xlane.xlu0 %1011
      %1013 = vadd.xlane.f32.xlu0 %v1007
      %v1014 = vpop.xlane.xlu0 %1013
      %1015 = vadd.xlane.f32.xlu0 %v1008
      %v1016 = vpop.xlane.xlu0 %1015
      %v1017 = vrcp.pop 128.0
      %v1018 = vmul.f32 %v1012, %v1017
      %v1019 = vmul.f32 %v1014, %v1017
      %v1020 = vmul.f32 %v1016, %v1017
      %v1021 = vsub.f32 %v1006, %v1018
      %v1022 = vsub.f32 %v1007, %v1019
      %v1023 = vsub.f32 %v1008, %v1020
      %v1024 = vmul.f32 %v1021, %v1021
      %v1025 = vmul.f32 %v1022, %v1022
      %v1026 = vmul.f32 %v1023, %v1023
      %1027 = vadd.xlane.f32.xlu0 %v1024
      %v1028 = vpop.xlane.xlu0 %1027
      %1029 = vadd.xlane.f32.xlu0 %v1025
      %v1030 = vpop.xlane.xlu0 %1029
      %1031 = vadd.xlane.f32.xlu0 %v1026
      %v1032 = vpop.xlane.xlu0 %1031
      %v1033 = vmul.f32 %v1028, %v1017
      %v1034 = vmul.f32 %v1030, %v1017
      %v1035 = vmul.f32 %v1032, %v1017
      %v1036 = vadd.f32 %v1033, 1e-12
      %v1037 = vadd.f32 %v1034, 1e-12
      %v1038 = vadd.f32 %v1035, 1e-12
      %v1039 = vrsqrt.pop %v1036
      %v1040 = vrsqrt.pop %v1037
      %v1041 = vrsqrt.pop %v1038
      %v1042 = vmul.f32 %v1021, %v1039
      %v1043 = vmul.f32 %v1022, %v1040
      %v1044 = vmul.f32 %v1023, %v1041
      %v1046 = vlaneseq
      %v1047 = vshrl.u32 %v1046, 7
      %v1048 = vsub.s32 0, %v1047
      %v1049 = vrot.slane %v1009, %v1048
      %v1051 = vmul.f32 %v1042, %v1049
      %v1052 = vmul.f32 %v1043, %v1049
      %v1053 = vmul.f32 %v1044, %v1049
      %v1055 = vlaneseq
      %v1056 = vshrl.u32 %v1055, 7
      %v1057 = vsub.s32 0, %v1056
      %v1058 = vrot.slane %v1010, %v1057
      %v1060 = vadd.f32 %v1051, %v1058
      %v1061 = vadd.f32 %v1052, %v1058
      %v1062 = vadd.f32 %v1053, %v1058
      %v1063 = vpack.c.bf16 %v1061, %v1060
      %v1064 = vpack.c.bf16 %v1062, %v1062
      %v1065 = vld [vmem:[%s770] sm:$0xff]
      %v1066 = vld [vmem:[%s770 + $0x8] sm:$0xf]
      %v1067 = vld [vmem:[%s770 + $0xc] sm:$0xff]
      %v1068 = vld [vmem:[%s770 + $0x14] sm:$0xf]
      %v1069 = vld [vmem:[%s770 + $0x18] sm:$0xff]
      %v1070 = vld [vmem:[%s770 + $0x20] sm:$0xf]
      %v1071 = vld [vmem:[%s770 + $0x24] sm:$0xff]
      %v1072 = vld [vmem:[%s770 + $0x2c] sm:$0xf]
      %v1073 = vld [vmem:[%s770 + $0x30] sm:$0xff]
      %v1074 = vld [vmem:[%s770 + $0x38] sm:$0xf]
      %v1075 = vld [vmem:[%s770 + $0x3c] sm:$0xff]
      %v1076 = vld [vmem:[%s770 + $0x44] sm:$0xf]
      %v1077 = vld [vmem:[%s770 + $0x48] sm:$0xff]
      %v1078 = vld [vmem:[%s770 + $0x50] sm:$0xf]
      %v1079 = vld [vmem:[%s770 + $0x54] sm:$0xff]
      %v1080 = vld [vmem:[%s770 + $0x5c] sm:$0xf]
      %v1081 = vld [vmem:[%s770 + $0x60] sm:$0xff]
      %v1082 = vld [vmem:[%s770 + $0x68] sm:$0xf]
      %v1083 = vld [vmem:[%s770 + $0x6c] sm:$0xff]
      %v1084 = vld [vmem:[%s770 + $0x74] sm:$0xf]
      %v1085 = vld [vmem:[%s770 + $0x78] sm:$0xff]
      %v1086 = vld [vmem:[%s770 + $0x80] sm:$0xf]
      %v1087 = vld [vmem:[%s770 + $0x84] sm:$0xff]
      %v1088 = vld [vmem:[%s770 + $0x8c] sm:$0xf]
      %v1089 = vld [vmem:[%s770 + $0x90] sm:$0xff]
      %v1090 = vld [vmem:[%s770 + $0x98] sm:$0xf]
      %v1091 = vld [vmem:[%s770 + $0x9c] sm:$0xff]
      %v1092 = vld [vmem:[%s770 + $0xa4] sm:$0xf]
      %v1093 = vld [vmem:[%s770 + $0xa8] sm:$0xff]
      %v1094 = vld [vmem:[%s770 + $0xb0] sm:$0xf]
      %v1095 = vld [vmem:[%s770 + $0xb4] sm:$0xff]
      %v1096 = vld [vmem:[%s770 + $0xbc] sm:$0xf]
      %v1097 = vld [vmem:[%s774] sm:$0x7]
      %v1099 = vlaneseq
      %v1100 = vshrl.u32 %v1099, 7
      %v1101 = vsub.s32 0, %v1100
      %v1102 = vrot.slane %v1097, %v1101
      %v1103 = vlaneseq
      %v1104 = vshrl.u32 %v1103, 7
      %v1105 = vsub.s32 1, %v1104
      %v1106 = vrot.slane %v1097, %v1105
      %v1107 = vlaneseq
      %v1108 = vshrl.u32 %v1107, 7
      %v1109 = vsub.s32 2, %v1108
      %v1110 = vrot.slane %v1097, %v1109
      %v1146 = vunpack.c.l.b16 %v1065
      %v1147 = vunpack.c.h.b16 %v1065
      %v1148 = vunpack.c.l.b16 %v1066
      %v1149 = vunpack.c.l.b16 %v1067
      %v1150 = vunpack.c.h.b16 %v1067
      %v1151 = vunpack.c.l.b16 %v1068
      %v1152 = vunpack.c.l.b16 %v1069
      %v1153 = vunpack.c.h.b16 %v1069
      %v1154 = vunpack.c.l.b16 %v1070
      %v1155 = vunpack.c.l.b16 %v1071
      %v1156 = vunpack.c.h.b16 %v1071
      %v1157 = vunpack.c.l.b16 %v1072
      %v1158 = vunpack.c.l.b16 %v1073
      %v1159 = vunpack.c.h.b16 %v1073
      %v1160 = vunpack.c.l.b16 %v1074
      %v1161 = vunpack.c.l.b16 %v1075
      %v1162 = vunpack.c.h.b16 %v1075
      %v1163 = vunpack.c.l.b16 %v1076
      %v1164 = vunpack.c.l.b16 %v1077
      %v1165 = vunpack.c.h.b16 %v1077
      %v1166 = vunpack.c.l.b16 %v1078
      %v1167 = vunpack.c.l.b16 %v1079
      %v1168 = vunpack.c.h.b16 %v1079
      %v1169 = vunpack.c.l.b16 %v1080
      %v1170 = vunpack.c.l.b16 %v1081
      %v1171 = vunpack.c.h.b16 %v1081
      %v1172 = vunpack.c.l.b16 %v1082
      %v1173 = vunpack.c.l.b16 %v1083
      %v1174 = vunpack.c.h.b16 %v1083
      %v1175 = vunpack.c.l.b16 %v1084
      %v1176 = vunpack.c.l.b16 %v1085
      %v1177 = vunpack.c.h.b16 %v1085
      %v1178 = vunpack.c.l.b16 %v1086
      %v1179 = vunpack.c.l.b16 %v1087
      %v1180 = vunpack.c.h.b16 %v1087
      %v1181 = vunpack.c.l.b16 %v1088
      %v1182 = vunpack.c.l.b16 %v1089
      %v1183 = vunpack.c.h.b16 %v1089
      %v1184 = vunpack.c.l.b16 %v1090
      %v1185 = vunpack.c.l.b16 %v1091
      %v1186 = vunpack.c.h.b16 %v1091
      %v1187 = vunpack.c.l.b16 %v1092
      %v1188 = vunpack.c.l.b16 %v1093
      %v1189 = vunpack.c.h.b16 %v1093
      %v1190 = vunpack.c.l.b16 %v1094
      %v1191 = vunpack.c.l.b16 %v1095
      %v1192 = vunpack.c.h.b16 %v1095
      %v1193 = vunpack.c.l.b16 %v1096
      %v1194 = vpack.c.b16 %v1149, %v1146
      %v1195 = vpack.c.b16 %v1150, %v1147
      %v1196 = vpack.c.b16 %v1151, %v1148
      %v1197 = vpack.c.b16 %v1155, %v1152
      %v1198 = vpack.c.b16 %v1156, %v1153
      %v1199 = vpack.c.b16 %v1157, %v1154
      %v1200 = vpack.c.b16 %v1161, %v1158
      %v1201 = vpack.c.b16 %v1162, %v1159
      %v1202 = vpack.c.b16 %v1163, %v1160
      %v1203 = vpack.c.b16 %v1167, %v1164
      %v1204 = vpack.c.b16 %v1168, %v1165
      %v1205 = vpack.c.b16 %v1169, %v1166
      %v1206 = vpack.c.b16 %v1173, %v1170
      %v1207 = vpack.c.b16 %v1174, %v1171
      %v1208 = vpack.c.b16 %v1175, %v1172
      %v1209 = vpack.c.b16 %v1179, %v1176
      %v1210 = vpack.c.b16 %v1180, %v1177
      %v1211 = vpack.c.b16 %v1181, %v1178
      %v1212 = vpack.c.b16 %v1185, %v1182
      %v1213 = vpack.c.b16 %v1186, %v1183
      %v1214 = vpack.c.b16 %v1187, %v1184
      %v1215 = vpack.c.b16 %v1191, %v1188
      %v1216 = vpack.c.b16 %v1192, %v1189
      %v1217 = vpack.c.b16 %v1193, %v1190
      %1242 = vmatprep.subr.bf16.mxu0 %v1216
      %1243 = vmatpush1.bf16.msra.mxu0 %v1215
      %1244 = vmatprep.subr.bf16.mxu0 %v1213
      %1245 = vmatpush1.bf16.msra.mxu0 %v1212
      %1246 = vmatprep.subr.bf16.mxu0 %v1210
      %1247 = vmatpush1.bf16.msra.mxu0 %v1209
      %1248 = vmatprep.subr.bf16.mxu0 %v1207
      %1249 = vmatpush1.bf16.msra.mxu0 %v1206
      %1250 = vmatprep.subr.bf16.mxu0 %v1204
      %1251 = vmatpush1.bf16.msra.mxu0 %v1203
      %1252 = vmatprep.subr.bf16.mxu0 %v1201
      %1253 = vmatpush1.bf16.msra.mxu0 %v1200
      %1254 = vmatprep.subr.bf16.mxu0 %v1198
      %1255 = vmatpush1.bf16.msra.mxu0 %v1197
      %1256 = vmatprep.subr.bf16.mxu0 %v1195
      %1257 = vmatpush1.bf16.msra.mxu0 %v1194
      %1258 = vmatprep.subr.bf16.mxu0 0
      %1259 = vmatpush2.bf16.msra.mxu0 0
      %1260 = vmatprep.subr.bf16.mxu0 0
      %1261 = vmatpush2.bf16.msra.mxu0 0
      %1262 = vmatprep.subr.bf16.mxu0 0
      %1263 = vmatpush2.bf16.msra.mxu0 0
      %1264 = vmatprep.subr.bf16.mxu0 0
      %1265 = vmatpush2.bf16.msra.mxu0 0
      %1266 = vmatprep.subr.bf16.mxu0 0
      %1267 = vmatpush2.bf16.msra.mxu0 0
      %1268 = vmatprep.subr.bf16.mxu0 0
      %1269 = vmatpush2.bf16.msra.mxu0 0
      %1270 = vmatprep.subr.bf16.mxu0 0
      %1271 = vmatpush2.bf16.msra.mxu0 0
      %1272 = vmatprep.subr.bf16.mxu0 0
      %1273 = vmatpush2.bf16.msra.mxu0 0
      %1274 = vmatprep.mubr.bf16.mxu0 0
      %1275 = vmatmul.mubr.bf16.gmra.mxu0 %v1063
      %v1276 = vpop.f32.mrf.mxu0
      %v1277 = vadd.f32 %v1102, %v1276
      %v1278 = vpop.f32.mrf.mxu0
      %v1279 = vadd.f32 %v1106, %v1278
      %v1280 = vpop.f32.mrf.mxu0
      %v1281 = vadd.f32 %v1102, %v1280
      %v1282 = vpop.f32.mrf.mxu0
      %v1283 = vadd.f32 %v1106, %v1282
      %1284 = vmatprep.mubr.bf16.mxu0 0
      %1285 = vmatmul.mubr.bf16.gmra.mxu0 %v1064
      %v1286 = vpop.f32.mrf.mxu0
      %v1287 = vadd.f32 %v1102, %v1286
      %v1288 = vpop.f32.mrf.mxu0
      %v1289 = vadd.f32 %v1106, %v1288
      %v1290 = vpop.f32.mrf.mxu0
      %v1291 = vpop.f32.mrf.mxu0
      %1292 = vdwg.mxu0
      %1293 = vmatprep.subr.bf16.mxu0 0
      %1294 = vmatpush1.bf16.msra.mxu0 %v1217
      %1295 = vmatprep.subr.bf16.mxu0 0
      %1296 = vmatpush1.bf16.msra.mxu0 %v1214
      %1297 = vmatprep.subr.bf16.mxu0 0
      %1298 = vmatpush1.bf16.msra.mxu0 %v1211
      %1299 = vmatprep.subr.bf16.mxu0 0
      %1300 = vmatpush1.bf16.msra.mxu0 %v1208
      %1301 = vmatprep.subr.bf16.mxu0 0
      %1302 = vmatpush1.bf16.msra.mxu0 %v1205
      %1303 = vmatprep.subr.bf16.mxu0 0
      %1304 = vmatpush1.bf16.msra.mxu0 %v1202
      %1305 = vmatprep.subr.bf16.mxu0 0
      %1306 = vmatpush1.bf16.msra.mxu0 %v1199
      %1307 = vmatprep.subr.bf16.mxu0 0
      %1308 = vmatpush1.bf16.msra.mxu0 %v1196
      %1309 = vmatprep.subr.bf16.mxu0 0
      %1310 = vmatpush2.bf16.msra.mxu0 0
      %1311 = vmatprep.subr.bf16.mxu0 0
      %1312 = vmatpush2.bf16.msra.mxu0 0
      %1313 = vmatprep.subr.bf16.mxu0 0
      %1314 = vmatpush2.bf16.msra.mxu0 0
      %1315 = vmatprep.subr.bf16.mxu0 0
      %1316 = vmatpush2.bf16.msra.mxu0 0
      %1317 = vmatprep.subr.bf16.mxu0 0
      %1318 = vmatpush2.bf16.msra.mxu0 0
      %1319 = vmatprep.subr.bf16.mxu0 0
      %1320 = vmatpush2.bf16.msra.mxu0 0
      %1321 = vmatprep.subr.bf16.mxu0 0
      %1322 = vmatpush2.bf16.msra.mxu0 0
      %1323 = vmatprep.subr.bf16.mxu0 0
      %1324 = vmatpush2.bf16.msra.mxu0 0
      %1325 = vmatprep.mubr.bf16.mxu0 0
      %1326 = vmatmul.mubr.bf16.gmra.mxu0 %v1063
      %v1327 = vpop.f32.mrf.mxu0
      %v1328 = vadd.f32 %v1110, %v1327
      %v1329 = vpop.f32.mrf.mxu0
      %v1330 = vpop.f32.mrf.mxu0
      %v1331 = vadd.f32 %v1110, %v1330
      %v1332 = vpop.f32.mrf.mxu0
      %1333 = vmatprep.mubr.bf16.mxu0 0
      %1334 = vmatmul.mubr.bf16.gmra.mxu0 %v1064
      %v1335 = vpop.f32.mrf.mxu0
      %v1336 = vadd.f32 %v1110, %v1335
      %v1337 = vpop.f32.mrf.mxu0
      %v1338 = vpop.f32.mrf.mxu0
      %v1339 = vpop.f32.mrf.mxu0
      %1340 = vdwg.mxu0
      %v1341 = vlaneseq
      %v1342 = vand.u32 %v1341, 127
      %vm1343 = vcmp.lt.s32.totalorder %v1342, 17
      %v1344 = vsel %vm1343, 0.0, -1e+30
      %v1345 = vmul.f32 %v1277, 0.17677669
      %v1346 = vmul.f32 %v1281, 0.17677669
      %v1347 = vmul.f32 %v1287, 0.17677669
      %v1348 = vpack.c.bf16 %v1346, %v1345
      %v1349 = vpack.c.bf16 %v1347, %v1347
      %v1350 = vpack.c.bf16 %v1283, %v1279
      %v1351 = vpack.c.bf16 %v1289, %v1289
      %v1352 = vpack.c.bf16 %v1331, %v1328
      %v1353 = vpack.c.bf16 %v1336, %v1336
      %vm1354 = vcmask 261120
      %v1356 = vsel %vm1354, %v1348, 0
      %v1359 = vsel %vm1354, %v1349, 0
      %v1362 = vsel %vm1354, %v1350, 0
      %v1365 = vsel %vm1354, %v1351, 0
      %1367 = vmatprep.subr.bf16.mxu0 0
      %1368 = vmatpush1.bf16.xpose.msra.mxu0 0
      %1369 = vmatprep.subr.bf16.mxu0 0
      %1370 = vmatpush1.bf16.xpose.msra.mxu0 0
      %1371 = vmatprep.subr.bf16.mxu0 0
      %1372 = vmatpush1.bf16.xpose.msra.mxu0 0
      %1373 = vmatprep.subr.bf16.mxu0 0
      %1374 = vmatpush1.bf16.xpose.msra.mxu0 0
      %1375 = vmatprep.subr.bf16.mxu0 0
      %1376 = vmatpush1.bf16.xpose.msra.mxu0 0
      %1377 = vmatprep.subr.bf16.mxu0 0
      %1378 = vmatpush1.bf16.xpose.msra.mxu0 0
      %1379 = vmatprep.subr.bf16.mxu0 0
      %1380 = vmatpush1.bf16.xpose.msra.mxu0 %v1365
      %1381 = vmatprep.subr.bf16.mxu0 0
      %1382 = vmatpush1.bf16.xpose.msra.mxu0 %v1362
      %1383 = vmatprep.subr.bf16.mxu0 0
      %1384 = vmatpush2.bf16.xpose.msra.mxu0 0
      %1385 = vmatprep.subr.bf16.mxu0 0
      %1386 = vmatpush2.bf16.xpose.msra.mxu0 0
      %1387 = vmatprep.subr.bf16.mxu0 0
      %1388 = vmatpush2.bf16.xpose.msra.mxu0 0
      %1389 = vmatprep.subr.bf16.mxu0 0
      %1390 = vmatpush2.bf16.xpose.msra.mxu0 0
      %1391 = vmatprep.subr.bf16.mxu0 0
      %1392 = vmatpush2.bf16.xpose.msra.mxu0 0
      %1393 = vmatprep.subr.bf16.mxu0 0
      %1394 = vmatpush2.bf16.xpose.msra.mxu0 0
      %1395 = vmatprep.subr.bf16.mxu0 0
      %1396 = vmatpush2.bf16.xpose.msra.mxu0 0
      %1397 = vmatprep.subr.bf16.mxu0 0
      %1398 = vmatpush2.bf16.xpose.msra.mxu0 0
      %1399 = vmatprep.mubr.bf16.mxu0 0
      %1400 = vmatmul.mubr.bf16.gmra.mxu0 %v1356
      %v1401 = vpop.f32.mrf.mxu0
      %v1402 = vadd.f32 %v1344, %v1401
      %v1403 = vpop.f32.mrf.mxu0
      %v1404 = vpop.f32.mrf.mxu0
      %v1405 = vadd.f32 %v1344, %v1404
      %v1406 = vpop.f32.mrf.mxu0
      %1407 = vmatprep.mubr.bf16.mxu0 0
      %1408 = vmatmul.mubr.bf16.gmra.mxu0 %v1359
      %v1409 = vpop.f32.mrf.mxu0
      %v1410 = vadd.f32 %v1344, %v1409
      %v1411 = vpop.f32.mrf.mxu0
      %v1412 = vpop.f32.mrf.mxu0
      %v1413 = vpop.f32.mrf.mxu0
      %1414 = vdwg.mxu0
      %vm1415 = vcmask 195584
      %v1416 = vsel %vm1415, %v1402, -inf
      %1417 = vmax.xlane.f32.xlu0 %v1416
      %v1418 = vpop.xlane.xlu0 %1417
      %v1419 = vsel %vm1415, %v1405, -inf
      %1420 = vmax.xlane.f32.xlu0 %v1419
      %v1421 = vpop.xlane.xlu0 %1420
      %v1422 = vsel %vm1415, %v1410, -inf
      %1423 = vmax.xlane.f32.xlu0 %v1422
      %v1424 = vpop.xlane.xlu0 %1423
      %v1425 = vsub.f32 %v1402, %v1418
      %v1426 = vsub.f32 %v1405, %v1421
      %v1427 = vsub.f32 %v1410, %v1424
      %v1428 = vmul.f32 %v1425, 1.442695
      %v1429 = vpow.pop %v1428
      %v1430 = vmul.f32 %v1426, 1.442695
      %v1431 = vpow.pop %v1430
      %v1432 = vmul.f32 %v1427, 1.442695
      %v1433 = vpow.pop %v1432
      %v1434 = vsel %vm1415, %v1429, 0.0
      %1435 = vadd.xlane.f32.xlu0 %v1434
      %v1436 = vpop.xlane.xlu0 %1435
      %v1437 = vsel %vm1415, %v1431, 0.0
      %1438 = vadd.xlane.f32.xlu0 %v1437
      %v1439 = vpop.xlane.xlu0 %1438
      %v1440 = vsel %vm1415, %v1433, 0.0
      %1441 = vadd.xlane.f32.xlu0 %v1440
      %v1442 = vpop.xlane.xlu0 %1441
      %v1443 = vrcp.pop %v1436
      %v1444 = vrcp.pop %v1439
      %v1445 = vrcp.pop %v1442
      %v1446 = vpack.c.bf16 %v1431, %v1429
      %v1447 = vpack.c.bf16 %v1433, %v1433
      %v1449 = vsel %vm1415, %v1446, 0
      %v1452 = vsel %vm1415, %v1447, 0
      %vm1454 = vcmask 1043456
      %v1456 = vsel %vm1454, %v1353, 0
      %1458 = vmatprep.subr.bf16.mxu0 0
      %1459 = vmatpush1.bf16.msra.mxu0 0
      %1460 = vmatprep.subr.bf16.mxu0 0
      %1461 = vmatpush1.bf16.msra.mxu0 0
      %1462 = vmatprep.subr.bf16.mxu0 0
      %1463 = vmatpush1.bf16.msra.mxu0 0
      %1464 = vmatprep.subr.bf16.mxu0 0
      %1465 = vmatpush1.bf16.msra.mxu0 0
      %1466 = vmatprep.subr.bf16.mxu0 0
      %1467 = vmatpush1.bf16.msra.mxu0 0
      %1468 = vmatprep.subr.bf16.mxu0 0
      %1469 = vmatpush1.bf16.msra.mxu0 0
      %1470 = vmatprep.subr.bf16.mxu0 0
      %1471 = vmatpush1.bf16.msra.mxu0 %v1456
      %1472 = vmatprep.subr.bf16.mxu0 0
      %1473 = vmatpush1.bf16.msra.mxu0 %v1352
      %1474 = vmatprep.subr.bf16.mxu0 0
      %1475 = vmatpush2.bf16.msra.mxu0 0
      %1476 = vmatprep.subr.bf16.mxu0 0
      %1477 = vmatpush2.bf16.msra.mxu0 0
      %1478 = vmatprep.subr.bf16.mxu0 0
      %1479 = vmatpush2.bf16.msra.mxu0 0
      %1480 = vmatprep.subr.bf16.mxu0 0
      %1481 = vmatpush2.bf16.msra.mxu0 0
      %1482 = vmatprep.subr.bf16.mxu0 0
      %1483 = vmatpush2.bf16.msra.mxu0 0
      %1484 = vmatprep.subr.bf16.mxu0 0
      %1485 = vmatpush2.bf16.msra.mxu0 0
      %1486 = vmatprep.subr.bf16.mxu0 0
      %1487 = vmatpush2.bf16.msra.mxu0 0
      %1488 = vmatprep.subr.bf16.mxu0 0
      %1489 = vmatpush2.bf16.msra.mxu0 0
      %1490 = vmatprep.mubr.bf16.mxu0 0
      %1491 = vmatmul.mubr.bf16.gmra.mxu0 %v1449
      %v1492 = vpop.f32.mrf.mxu0
      %v1493 = vadd.f32 0.0, %v1492
      %v1494 = vpop.f32.mrf.mxu0
      %v1495 = vpop.f32.mrf.mxu0
      %v1496 = vadd.f32 0.0, %v1495
      %v1497 = vpop.f32.mrf.mxu0
      %1498 = vmatprep.mubr.bf16.mxu0 0
      %1499 = vmatmul.mubr.bf16.gmra.mxu0 %v1452
      %v1500 = vpop.f32.mrf.mxu0
      %v1501 = vadd.f32 0.0, %v1500
      %v1502 = vpop.f32.mrf.mxu0
      %v1503 = vpop.f32.mrf.mxu0
      %v1504 = vpop.f32.mrf.mxu0
      %1505 = vdwg.mxu0
      %v1506 = vmul.f32 %v1493, %v1443
      %v1507 = vmul.f32 %v1496, %v1444
      %v1508 = vmul.f32 %v1501, %v1445
      %v1509 = vpack.c.bf16 %v1507, %v1506
      %v1510 = vpack.c.bf16 %v1508, %v1508
      %v1511 = vld [vmem:[%s779] sm:$0xf]
      %v1512 = vld [vmem:[%s779 + $0x4] sm:$0xf]
      %v1513 = vld [vmem:[%s779 + $0x8] sm:$0xf]
      %v1514 = vld [vmem:[%s779 + $0xc] sm:$0xf]
      %1517 = vrot.lane.b32.xlu0 %v1348, 96
      %v1518 = vpop.permute.xlu0 %1517
      %1519 = vrot.lane.b32.xlu0 %v1349, 96
      %v1520 = vpop.permute.xlu0 %1519
      %1523 = vrot.lane.b32.xlu0 %v1350, 96
      %v1524 = vpop.permute.xlu0 %1523
      %1525 = vrot.lane.b32.xlu0 %v1351, 96
      %v1526 = vpop.permute.xlu0 %1525
      %v1528 = vsel %vm1354, %v1518, 0
      %v1531 = vsel %vm1354, %v1520, 0
      %v1534 = vsel %vm1354, %v1524, 0
      %v1537 = vsel %vm1354, %v1526, 0
      %1539 = vmatprep.subr.bf16.mxu0 0
      %1540 = vmatpush1.bf16.xpose.msra.mxu0 0
      %1541 = vmatprep.subr.bf16.mxu0 0
      %1542 = vmatpush1.bf16.xpose.msra.mxu0 0
      %1543 = vmatprep.subr.bf16.mxu0 0
      %1544 = vmatpush1.bf16.xpose.msra.mxu0 0
      %1545 = vmatprep.subr.bf16.mxu0 0
      %1546 = vmatpush1.bf16.xpose.msra.mxu0 0
      %1547 = vmatprep.subr.bf16.mxu0 0
      %1548 = vmatpush1.bf16.xpose.msra.mxu0 0
      %1549 = vmatprep.subr.bf16.mxu0 0
      %1550 = vmatpush1.bf16.xpose.msra.mxu0 0
      %1551 = vmatprep.subr.bf16.mxu0 0
      %1552 = vmatpush1.bf16.xpose.msra.mxu0 %v1537
      %1553 = vmatprep.subr.bf16.mxu0 0
      %1554 = vmatpush1.bf16.xpose.msra.mxu0 %v1534
      %1555 = vmatprep.subr.bf16.mxu0 0
      %1556 = vmatpush2.bf16.xpose.msra.mxu0 0
      %1557 = vmatprep.subr.bf16.mxu0 0
      %1558 = vmatpush2.bf16.xpose.msra.mxu0 0
      %1559 = vmatprep.subr.bf16.mxu0 0
      %1560 = vmatpush2.bf16.xpose.msra.mxu0 0
      %1561 = vmatprep.subr.bf16.mxu0 0
      %1562 = vmatpush2.bf16.xpose.msra.mxu0 0
      %1563 = vmatprep.subr.bf16.mxu0 0
      %1564 = vmatpush2.bf16.xpose.msra.mxu0 0
      %1565 = vmatprep.subr.bf16.mxu0 0
      %1566 = vmatpush2.bf16.xpose.msra.mxu0 0
      %1567 = vmatprep.subr.bf16.mxu0 0
      %1568 = vmatpush2.bf16.xpose.msra.mxu0 0
      %1569 = vmatprep.subr.bf16.mxu0 0
      %1570 = vmatpush2.bf16.xpose.msra.mxu0 0
      %1571 = vmatprep.mubr.bf16.mxu0 0
      %1572 = vmatmul.mubr.bf16.gmra.mxu0 %v1528
      %v1573 = vpop.f32.mrf.mxu0
      %v1574 = vadd.f32 %v1344, %v1573
      %v1575 = vpop.f32.mrf.mxu0
      %v1576 = vpop.f32.mrf.mxu0
      %v1577 = vadd.f32 %v1344, %v1576
      %v1578 = vpop.f32.mrf.mxu0
      %1579 = vmatprep.mubr.bf16.mxu0 0
      %1580 = vmatmul.mubr.bf16.gmra.mxu0 %v1531
      %v1581 = vpop.f32.mrf.mxu0
      %v1582 = vadd.f32 %v1344, %v1581
      %v1583 = vpop.f32.mrf.mxu0
      %v1584 = vpop.f32.mrf.mxu0
      %v1585 = vpop.f32.mrf.mxu0
      %1586 = vdwg.mxu0
      %v1587 = vsel %vm1415, %v1574, -inf
      %1588 = vmax.xlane.f32.xlu0 %v1587
      %v1589 = vpop.xlane.xlu0 %1588
      %v1590 = vsel %vm1415, %v1577, -inf
      %1591 = vmax.xlane.f32.xlu0 %v1590
      %v1592 = vpop.xlane.xlu0 %1591
      %v1593 = vsel %vm1415, %v1582, -inf
      %1594 = vmax.xlane.f32.xlu0 %v1593
      %v1595 = vpop.xlane.xlu0 %1594
      %v1596 = vsub.f32 %v1574, %v1589
      %v1597 = vsub.f32 %v1577, %v1592
      %v1598 = vsub.f32 %v1582, %v1595
      %v1599 = vmul.f32 %v1596, 1.442695
      %v1600 = vpow.pop %v1599
      %v1601 = vmul.f32 %v1597, 1.442695
      %v1602 = vpow.pop %v1601
      %v1603 = vmul.f32 %v1598, 1.442695
      %v1604 = vpow.pop %v1603
      %v1605 = vsel %vm1415, %v1600, 0.0
      %1606 = vadd.xlane.f32.xlu0 %v1605
      %v1607 = vpop.xlane.xlu0 %1606
      %v1608 = vsel %vm1415, %v1602, 0.0
      %1609 = vadd.xlane.f32.xlu0 %v1608
      %v1610 = vpop.xlane.xlu0 %1609
      %v1611 = vsel %vm1415, %v1604, 0.0
      %1612 = vadd.xlane.f32.xlu0 %v1611
      %v1613 = vpop.xlane.xlu0 %1612
      %v1614 = vrcp.pop %v1607
      %v1615 = vrcp.pop %v1610
      %v1616 = vrcp.pop %v1613
      %v1617 = vpack.c.bf16 %v1602, %v1600
      %v1618 = vpack.c.bf16 %v1604, %v1604
      %1621 = vrot.lane.b32.xlu0 %v1352, 96
      %v1622 = vpop.permute.xlu0 %1621
      %1623 = vrot.lane.b32.xlu0 %v1353, 96
      %v1624 = vpop.permute.xlu0 %1623
      %v1627 = vsel %vm1415, %v1617, 0
      %v1630 = vsel %vm1415, %v1618, 0
      %v1633 = vsel %vm1454, %v1624, 0
      %1635 = vmatprep.subr.bf16.mxu0 0
      %1636 = vmatpush1.bf16.msra.mxu0 0
      %1637 = vmatprep.subr.bf16.mxu0 0
      %1638 = vmatpush1.bf16.msra.mxu0 0
      %1639 = vmatprep.subr.bf16.mxu0 0
      %1640 = vmatpush1.bf16.msra.mxu0 0
      %1641 = vmatprep.subr.bf16.mxu0 0
      %1642 = vmatpush1.bf16.msra.mxu0 0
      %1643 = vmatprep.subr.bf16.mxu0 0
      %1644 = vmatpush1.bf16.msra.mxu0 0
      %1645 = vmatprep.subr.bf16.mxu0 0
      %1646 = vmatpush1.bf16.msra.mxu0 0
      %1647 = vmatprep.subr.bf16.mxu0 0
      %1648 = vmatpush1.bf16.msra.mxu0 %v1633
      %1649 = vmatprep.subr.bf16.mxu0 0
      %1650 = vmatpush1.bf16.msra.mxu0 %v1622
      %1651 = vmatprep.subr.bf16.mxu0 0
      %1652 = vmatpush2.bf16.msra.mxu0 0
      %1653 = vmatprep.subr.bf16.mxu0 0
      %1654 = vmatpush2.bf16.msra.mxu0 0
      %1655 = vmatprep.subr.bf16.mxu0 0
      %1656 = vmatpush2.bf16.msra.mxu0 0
      %1657 = vmatprep.subr.bf16.mxu0 0
      %1658 = vmatpush2.bf16.msra.mxu0 0
      %1659 = vmatprep.subr.bf16.mxu0 0
      %1660 = vmatpush2.bf16.msra.mxu0 0
      %1661 = vmatprep.subr.bf16.mxu0 0
      %1662 = vmatpush2.bf16.msra.mxu0 0
      %1663 = vmatprep.subr.bf16.mxu0 0
      %1664 = vmatpush2.bf16.msra.mxu0 0
      %1665 = vmatprep.subr.bf16.mxu0 0
      %1666 = vmatpush2.bf16.msra.mxu0 0
      %1667 = vmatprep.mubr.bf16.mxu0 0
      %1668 = vmatmul.mubr.bf16.gmra.mxu0 %v1627
      %v1669 = vpop.f32.mrf.mxu0
      %v1670 = vadd.f32 0.0, %v1669
      %v1671 = vpop.f32.mrf.mxu0
      %v1672 = vpop.f32.mrf.mxu0
      %v1673 = vadd.f32 0.0, %v1672
      %v1674 = vpop.f32.mrf.mxu0
      %1675 = vmatprep.mubr.bf16.mxu0 0
      %1676 = vmatmul.mubr.bf16.gmra.mxu0 %v1630
      %v1677 = vpop.f32.mrf.mxu0
      %v1678 = vadd.f32 0.0, %v1677
      %v1679 = vpop.f32.mrf.mxu0
      %v1680 = vpop.f32.mrf.mxu0
      %v1681 = vpop.f32.mrf.mxu0
      %1682 = vdwg.mxu0
      %v1683 = vmul.f32 %v1670, %v1614
      %v1684 = vmul.f32 %v1673, %v1615
      %v1685 = vmul.f32 %v1678, %v1616
      %v1686 = vpack.c.bf16 %v1684, %v1683
      %v1687 = vpack.c.bf16 %v1685, %v1685
      %v1688 = vld [vmem:[%s779 + $0x10] sm:$0xf]
      %v1689 = vld [vmem:[%s779 + $0x14] sm:$0xf]
      %v1690 = vld [vmem:[%s779 + $0x18] sm:$0xf]
      %v1691 = vld [vmem:[%s779 + $0x1c] sm:$0xf]
      %v1696 = vunpack.c.l.b16 %v1688
      %v1697 = vunpack.c.l.b16 %v1689
      %v1698 = vunpack.c.l.b16 %v1690
      %v1699 = vunpack.c.l.b16 %v1691
      %v1700 = vpack.c.b16 %v1697, %v1696
      %v1701 = vpack.c.b16 %v1699, %v1698
      %v1705 = vsel %vm1354, %v1686, 0
      %v1708 = vsel %vm1354, %v1687, 0
      %1710 = vmatprep.subr.bf16.mxu0 0
      %1711 = vmatpush1.bf16.msra.mxu0 0
      %1712 = vmatprep.subr.bf16.mxu0 0
      %1713 = vmatpush1.bf16.msra.mxu0 0
      %1714 = vmatprep.subr.bf16.mxu0 0
      %1715 = vmatpush1.bf16.msra.mxu0 0
      %1716 = vmatprep.subr.bf16.mxu0 0
      %1717 = vmatpush1.bf16.msra.mxu0 0
      %1718 = vmatprep.subr.bf16.mxu0 0
      %1719 = vmatpush1.bf16.msra.mxu0 0
      %1720 = vmatprep.subr.bf16.mxu0 0
      %1721 = vmatpush1.bf16.msra.mxu0 0
      %1722 = vmatprep.subr.bf16.mxu0 0
      %1723 = vmatpush1.bf16.msra.mxu0 %v1701
      %1724 = vmatprep.subr.bf16.mxu0 0
      %1725 = vmatpush1.bf16.msra.mxu0 %v1700
      %1726 = vmatprep.subr.bf16.mxu0 0
      %1727 = vmatpush2.bf16.msra.mxu0 0
      %1728 = vmatprep.subr.bf16.mxu0 0
      %1729 = vmatpush2.bf16.msra.mxu0 0
      %1730 = vmatprep.subr.bf16.mxu0 0
      %1731 = vmatpush2.bf16.msra.mxu0 0
      %1732 = vmatprep.subr.bf16.mxu0 0
      %1733 = vmatpush2.bf16.msra.mxu0 0
      %1734 = vmatprep.subr.bf16.mxu0 0
      %1735 = vmatpush2.bf16.msra.mxu0 0
      %1736 = vmatprep.subr.bf16.mxu0 0
      %1737 = vmatpush2.bf16.msra.mxu0 0
      %1738 = vmatprep.subr.bf16.mxu0 0
      %1739 = vmatpush2.bf16.msra.mxu0 0
      %1740 = vmatprep.subr.bf16.mxu0 0
      %1741 = vmatpush2.bf16.msra.mxu0 0
      %1742 = vmatprep.mubr.bf16.mxu0 0
      %1743 = vmatmul.mubr.bf16.gmra.mxu0 %v1705
      %v1744 = vpop.f32.mrf.mxu0
      %v1745 = vadd.f32 0.0, %v1744
      %v1746 = vpop.f32.mrf.mxu0
      %v1747 = vpop.f32.mrf.mxu0
      %v1748 = vadd.f32 0.0, %v1747
      %v1749 = vpop.f32.mrf.mxu0
      %1750 = vmatprep.mubr.bf16.mxu0 0
      %1751 = vmatmul.mubr.bf16.gmra.mxu0 %v1708
      %v1752 = vpop.f32.mrf.mxu0
      %v1753 = vadd.f32 0.0, %v1752
      %v1754 = vpop.f32.mrf.mxu0
      %v1755 = vpop.f32.mrf.mxu0
      %v1756 = vpop.f32.mrf.mxu0
      %1757 = vdwg.mxu0
      %v1762 = vunpack.c.l.b16 %v1511
      %v1763 = vunpack.c.l.b16 %v1512
      %v1764 = vunpack.c.l.b16 %v1513
      %v1765 = vunpack.c.l.b16 %v1514
      %v1766 = vpack.c.b16 %v1763, %v1762
      %v1767 = vpack.c.b16 %v1765, %v1764
      %v1771 = vsel %vm1354, %v1509, 0
      %v1774 = vsel %vm1354, %v1510, 0
      %1776 = vmatprep.subr.bf16.mxu0 0
      %1777 = vmatpush1.bf16.msra.mxu0 0
      %1778 = vmatprep.subr.bf16.mxu0 0
      %1779 = vmatpush1.bf16.msra.mxu0 0
      %1780 = vmatprep.subr.bf16.mxu0 0
      %1781 = vmatpush1.bf16.msra.mxu0 0
      %1782 = vmatprep.subr.bf16.mxu0 0
      %1783 = vmatpush1.bf16.msra.mxu0 0
      %1784 = vmatprep.subr.bf16.mxu0 0
      %1785 = vmatpush1.bf16.msra.mxu0 0
      %1786 = vmatprep.subr.bf16.mxu0 0
      %1787 = vmatpush1.bf16.msra.mxu0 0
      %1788 = vmatprep.subr.bf16.mxu0 0
      %1789 = vmatpush1.bf16.msra.mxu0 %v1767
      %1790 = vmatprep.subr.bf16.mxu0 0
      %1791 = vmatpush1.bf16.msra.mxu0 %v1766
      %1792 = vmatprep.subr.bf16.mxu0 0
      %1793 = vmatpush2.bf16.msra.mxu0 0
      %1794 = vmatprep.subr.bf16.mxu0 0
      %1795 = vmatpush2.bf16.msra.mxu0 0
      %1796 = vmatprep.subr.bf16.mxu0 0
      %1797 = vmatpush2.bf16.msra.mxu0 0
      %1798 = vmatprep.subr.bf16.mxu0 0
      %1799 = vmatpush2.bf16.msra.mxu0 0
      %1800 = vmatprep.subr.bf16.mxu0 0
      %1801 = vmatpush2.bf16.msra.mxu0 0
      %1802 = vmatprep.subr.bf16.mxu0 0
      %1803 = vmatpush2.bf16.msra.mxu0 0
      %1804 = vmatprep.subr.bf16.mxu0 0
      %1805 = vmatpush2.bf16.msra.mxu0 0
      %1806 = vmatprep.subr.bf16.mxu0 0
      %1807 = vmatpush2.bf16.msra.mxu0 0
      %1808 = vmatprep.mubr.bf16.mxu0 0
      %1809 = vmatmul.mubr.bf16.gmra.mxu0 %v1771
      %v1810 = vpop.f32.mrf.mxu0
      %v1811 = vadd.f32 %v1745, %v1810
      %v1812 = vpop.f32.mrf.mxu0
      %v1813 = vpop.f32.mrf.mxu0
      %v1814 = vadd.f32 %v1748, %v1813
      %v1815 = vpop.f32.mrf.mxu0
      %1816 = vmatprep.mubr.bf16.mxu0 0
      %1817 = vmatmul.mubr.bf16.gmra.mxu0 %v1774
      %v1818 = vpop.f32.mrf.mxu0
      %v1819 = vadd.f32 %v1753, %v1818
      %v1820 = vpop.f32.mrf.mxu0
      %v1821 = vpop.f32.mrf.mxu0
      %v1822 = vpop.f32.mrf.mxu0
      %1823 = vdwg.mxu0
      %1824 = vrot.lane.b32.xlu0 %v1348, 64
      %v1825 = vpop.permute.xlu0 %1824
      %1826 = vrot.lane.b32.xlu0 %v1349, 64
      %v1827 = vpop.permute.xlu0 %1826
      %1828 = vrot.lane.b32.xlu0 %v1350, 64
      %v1829 = vpop.permute.xlu0 %1828
      %1830 = vrot.lane.b32.xlu0 %v1351, 64
      %v1831 = vpop.permute.xlu0 %1830
      %v1833 = vsel %vm1354, %v1825, 0
      %v1836 = vsel %vm1354, %v1827, 0
      %v1839 = vsel %vm1354, %v1829, 0
      %v1842 = vsel %vm1354, %v1831, 0
      %1844 = vmatprep.subr.bf16.mxu0 0
      %1845 = vmatpush1.bf16.xpose.msra.mxu0 0
      %1846 = vmatprep.subr.bf16.mxu0 0
      %1847 = vmatpush1.bf16.xpose.msra.mxu0 0
      %1848 = vmatprep.subr.bf16.mxu0 0
      %1849 = vmatpush1.bf16.xpose.msra.mxu0 0
      %1850 = vmatprep.subr.bf16.mxu0 0
      %1851 = vmatpush1.bf16.xpose.msra.mxu0 0
      %1852 = vmatprep.subr.bf16.mxu0 0
      %1853 = vmatpush1.bf16.xpose.msra.mxu0 0
      %1854 = vmatprep.subr.bf16.mxu0 0
      %1855 = vmatpush1.bf16.xpose.msra.mxu0 0
      %1856 = vmatprep.subr.bf16.mxu0 0
      %1857 = vmatpush1.bf16.xpose.msra.mxu0 %v1842
      %1858 = vmatprep.subr.bf16.mxu0 0
      %1859 = vmatpush1.bf16.xpose.msra.mxu0 %v1839
      %1860 = vmatprep.subr.bf16.mxu0 0
      %1861 = vmatpush2.bf16.xpose.msra.mxu0 0
      %1862 = vmatprep.subr.bf16.mxu0 0
      %1863 = vmatpush2.bf16.xpose.msra.mxu0 0
      %1864 = vmatprep.subr.bf16.mxu0 0
      %1865 = vmatpush2.bf16.xpose.msra.mxu0 0
      %1866 = vmatprep.subr.bf16.mxu0 0
      %1867 = vmatpush2.bf16.xpose.msra.mxu0 0
      %1868 = vmatprep.subr.bf16.mxu0 0
      %1869 = vmatpush2.bf16.xpose.msra.mxu0 0
      %1870 = vmatprep.subr.bf16.mxu0 0
      %1871 = vmatpush2.bf16.xpose.msra.mxu0 0
      %1872 = vmatprep.subr.bf16.mxu0 0
      %1873 = vmatpush2.bf16.xpose.msra.mxu0 0
      %1874 = vmatprep.subr.bf16.mxu0 0
      %1875 = vmatpush2.bf16.xpose.msra.mxu0 0
      %1876 = vmatprep.mubr.bf16.mxu0 0
      %1877 = vmatmul.mubr.bf16.gmra.mxu0 %v1833
      %v1878 = vpop.f32.mrf.mxu0
      %v1879 = vadd.f32 %v1344, %v1878
      %v1880 = vpop.f32.mrf.mxu0
      %v1881 = vpop.f32.mrf.mxu0
      %v1882 = vadd.f32 %v1344, %v1881
      %v1883 = vpop.f32.mrf.mxu0
      %1884 = vmatprep.mubr.bf16.mxu0 0
      %1885 = vmatmul.mubr.bf16.gmra.mxu0 %v1836
      %v1886 = vpop.f32.mrf.mxu0
      %v1887 = vadd.f32 %v1344, %v1886
      %v1888 = vpop.f32.mrf.mxu0
      %v1889 = vpop.f32.mrf.mxu0
      %v1890 = vpop.f32.mrf.mxu0
      %1891 = vdwg.mxu0
      %v1892 = vsel %vm1415, %v1879, -inf
      %1893 = vmax.xlane.f32.xlu0 %v1892
      %v1894 = vpop.xlane.xlu0 %1893
      %v1895 = vsel %vm1415, %v1882, -inf
      %1896 = vmax.xlane.f32.xlu0 %v1895
      %v1897 = vpop.xlane.xlu0 %1896
      %v1898 = vsel %vm1415, %v1887, -inf
      %1899 = vmax.xlane.f32.xlu0 %v1898
      %v1900 = vpop.xlane.xlu0 %1899
      %v1901 = vsub.f32 %v1879, %v1894
      %v1902 = vsub.f32 %v1882, %v1897
      %v1903 = vsub.f32 %v1887, %v1900
      %v1904 = vmul.f32 %v1901, 1.442695
      %v1905 = vpow.pop %v1904
      %v1906 = vmul.f32 %v1902, 1.442695
      %v1907 = vpow.pop %v1906
      %v1908 = vmul.f32 %v1903, 1.442695
      %v1909 = vpow.pop %v1908
      %v1910 = vsel %vm1415, %v1905, 0.0
      %1911 = vadd.xlane.f32.xlu0 %v1910
      %v1912 = vpop.xlane.xlu0 %1911
      %v1913 = vsel %vm1415, %v1907, 0.0
      %1914 = vadd.xlane.f32.xlu0 %v1913
      %v1915 = vpop.xlane.xlu0 %1914
      %v1916 = vsel %vm1415, %v1909, 0.0
      %1917 = vadd.xlane.f32.xlu0 %v1916
      %v1918 = vpop.xlane.xlu0 %1917
      %v1919 = vrcp.pop %v1912
      %v1920 = vrcp.pop %v1915
      %v1921 = vrcp.pop %v1918
      %v1922 = vpack.c.bf16 %v1907, %v1905
      %v1923 = vpack.c.bf16 %v1909, %v1909
      %1924 = vrot.lane.b32.xlu0 %v1352, 64
      %v1925 = vpop.permute.xlu0 %1924
      %1926 = vrot.lane.b32.xlu0 %v1353, 64
      %v1927 = vpop.permute.xlu0 %1926
      %v1930 = vsel %vm1415, %v1922, 0
      %v1933 = vsel %vm1415, %v1923, 0
      %v1936 = vsel %vm1454, %v1927, 0
      %1938 = vmatprep.subr.bf16.mxu0 0
      %1939 = vmatpush1.bf16.msra.mxu0 0
      %1940 = vmatprep.subr.bf16.mxu0 0
      %1941 = vmatpush1.bf16.msra.mxu0 0
      %1942 = vmatprep.subr.bf16.mxu0 0
      %1943 = vmatpush1.bf16.msra.mxu0 0
      %1944 = vmatprep.subr.bf16.mxu0 0
      %1945 = vmatpush1.bf16.msra.mxu0 0
      %1946 = vmatprep.subr.bf16.mxu0 0
      %1947 = vmatpush1.bf16.msra.mxu0 0
      %1948 = vmatprep.subr.bf16.mxu0 0
      %1949 = vmatpush1.bf16.msra.mxu0 0
      %1950 = vmatprep.subr.bf16.mxu0 0
      %1951 = vmatpush1.bf16.msra.mxu0 %v1936
      %1952 = vmatprep.subr.bf16.mxu0 0
      %1953 = vmatpush1.bf16.msra.mxu0 %v1925
      %1954 = vmatprep.subr.bf16.mxu0 0
      %1955 = vmatpush2.bf16.msra.mxu0 0
      %1956 = vmatprep.subr.bf16.mxu0 0
      %1957 = vmatpush2.bf16.msra.mxu0 0
      %1958 = vmatprep.subr.bf16.mxu0 0
      %1959 = vmatpush2.bf16.msra.mxu0 0
      %1960 = vmatprep.subr.bf16.mxu0 0
      %1961 = vmatpush2.bf16.msra.mxu0 0
      %1962 = vmatprep.subr.bf16.mxu0 0
      %1963 = vmatpush2.bf16.msra.mxu0 0
      %1964 = vmatprep.subr.bf16.mxu0 0
      %1965 = vmatpush2.bf16.msra.mxu0 0
      %1966 = vmatprep.subr.bf16.mxu0 0
      %1967 = vmatpush2.bf16.msra.mxu0 0
      %1968 = vmatprep.subr.bf16.mxu0 0
      %1969 = vmatpush2.bf16.msra.mxu0 0
      %1970 = vmatprep.mubr.bf16.mxu0 0
      %1971 = vmatmul.mubr.bf16.gmra.mxu0 %v1930
      %v1972 = vpop.f32.mrf.mxu0
      %v1973 = vadd.f32 0.0, %v1972
      %v1974 = vpop.f32.mrf.mxu0
      %v1975 = vpop.f32.mrf.mxu0
      %v1976 = vadd.f32 0.0, %v1975
      %v1977 = vpop.f32.mrf.mxu0
      %1978 = vmatprep.mubr.bf16.mxu0 0
      %1979 = vmatmul.mubr.bf16.gmra.mxu0 %v1933
      %v1980 = vpop.f32.mrf.mxu0
      %v1981 = vadd.f32 0.0, %v1980
      %v1982 = vpop.f32.mrf.mxu0
      %v1983 = vpop.f32.mrf.mxu0
      %v1984 = vpop.f32.mrf.mxu0
      %1985 = vdwg.mxu0
      %v1986 = vmul.f32 %v1973, %v1919
      %v1987 = vmul.f32 %v1976, %v1920
      %v1988 = vmul.f32 %v1981, %v1921
      %v1989 = vpack.c.bf16 %v1987, %v1986
      %v1990 = vpack.c.bf16 %v1988, %v1988
      %v1991 = vld [vmem:[%s779 + $0x20] sm:$0xf]
      %v1992 = vld [vmem:[%s779 + $0x24] sm:$0xf]
      %v1993 = vld [vmem:[%s779 + $0x28] sm:$0xf]
      %v1994 = vld [vmem:[%s779 + $0x2c] sm:$0xf]
      %v1999 = vunpack.c.l.b16 %v1991
      %v2000 = vunpack.c.l.b16 %v1992
      %v2001 = vunpack.c.l.b16 %v1993
      %v2002 = vunpack.c.l.b16 %v1994
      %v2003 = vpack.c.b16 %v2000, %v1999
      %v2004 = vpack.c.b16 %v2002, %v2001
      %v2008 = vsel %vm1354, %v1989, 0
      %v2011 = vsel %vm1354, %v1990, 0
      %2013 = vmatprep.subr.bf16.mxu0 0
      %2014 = vmatpush1.bf16.msra.mxu0 0
      %2015 = vmatprep.subr.bf16.mxu0 0
      %2016 = vmatpush1.bf16.msra.mxu0 0
      %2017 = vmatprep.subr.bf16.mxu0 0
      %2018 = vmatpush1.bf16.msra.mxu0 0
      %2019 = vmatprep.subr.bf16.mxu0 0
      %2020 = vmatpush1.bf16.msra.mxu0 0
      %2021 = vmatprep.subr.bf16.mxu0 0
      %2022 = vmatpush1.bf16.msra.mxu0 0
      %2023 = vmatprep.subr.bf16.mxu0 0
      %2024 = vmatpush1.bf16.msra.mxu0 0
      %2025 = vmatprep.subr.bf16.mxu0 0
      %2026 = vmatpush1.bf16.msra.mxu0 %v2004
      %2027 = vmatprep.subr.bf16.mxu0 0
      %2028 = vmatpush1.bf16.msra.mxu0 %v2003
      %2029 = vmatprep.subr.bf16.mxu0 0
      %2030 = vmatpush2.bf16.msra.mxu0 0
      %2031 = vmatprep.subr.bf16.mxu0 0
      %2032 = vmatpush2.bf16.msra.mxu0 0
      %2033 = vmatprep.subr.bf16.mxu0 0
      %2034 = vmatpush2.bf16.msra.mxu0 0
      %2035 = vmatprep.subr.bf16.mxu0 0
      %2036 = vmatpush2.bf16.msra.mxu0 0
      %2037 = vmatprep.subr.bf16.mxu0 0
      %2038 = vmatpush2.bf16.msra.mxu0 0
      %2039 = vmatprep.subr.bf16.mxu0 0
      %2040 = vmatpush2.bf16.msra.mxu0 0
      %2041 = vmatprep.subr.bf16.mxu0 0
      %2042 = vmatpush2.bf16.msra.mxu0 0
      %2043 = vmatprep.subr.bf16.mxu0 0
      %2044 = vmatpush2.bf16.msra.mxu0 0
      %2045 = vmatprep.mubr.bf16.mxu0 0
      %2046 = vmatmul.mubr.bf16.gmra.mxu0 %v2008
      %v2047 = vpop.f32.mrf.mxu0
      %v2048 = vadd.f32 0.0, %v2047
      %v2049 = vpop.f32.mrf.mxu0
      %v2050 = vpop.f32.mrf.mxu0
      %v2051 = vadd.f32 0.0, %v2050
      %v2052 = vpop.f32.mrf.mxu0
      %2053 = vmatprep.mubr.bf16.mxu0 0
      %2054 = vmatmul.mubr.bf16.gmra.mxu0 %v2011
      %v2055 = vpop.f32.mrf.mxu0
      %v2056 = vadd.f32 0.0, %v2055
      %v2057 = vpop.f32.mrf.mxu0
      %v2058 = vpop.f32.mrf.mxu0
      %v2059 = vpop.f32.mrf.mxu0
      %2060 = vdwg.mxu0
      %v2061 = vadd.f32 %v1811, %v2048
      %v2062 = vadd.f32 %v1814, %v2051
      %v2063 = vadd.f32 %v1819, %v2056
      %2064 = vrot.lane.b32.xlu0 %v1348, 32
      %v2065 = vpop.permute.xlu0 %2064
      %2066 = vrot.lane.b32.xlu0 %v1349, 32
      %v2067 = vpop.permute.xlu0 %2066
      %2068 = vrot.lane.b32.xlu0 %v1350, 32
      %v2069 = vpop.permute.xlu0 %2068
      %2070 = vrot.lane.b32.xlu0 %v1351, 32
      %v2071 = vpop.permute.xlu0 %2070
      %v2073 = vsel %vm1354, %v2065, 0
      %v2076 = vsel %vm1354, %v2067, 0
      %v2079 = vsel %vm1354, %v2069, 0
      %v2082 = vsel %vm1354, %v2071, 0
      %2084 = vmatprep.subr.bf16.mxu0 0
      %2085 = vmatpush1.bf16.xpose.msra.mxu0 0
      %2086 = vmatprep.subr.bf16.mxu0 0
      %2087 = vmatpush1.bf16.xpose.msra.mxu0 0
      %2088 = vmatprep.subr.bf16.mxu0 0
      %2089 = vmatpush1.bf16.xpose.msra.mxu0 0
      %2090 = vmatprep.subr.bf16.mxu0 0
      %2091 = vmatpush1.bf16.xpose.msra.mxu0 0
      %2092 = vmatprep.subr.bf16.mxu0 0
      %2093 = vmatpush1.bf16.xpose.msra.mxu0 0
      %2094 = vmatprep.subr.bf16.mxu0 0
      %2095 = vmatpush1.bf16.xpose.msra.mxu0 0
      %2096 = vmatprep.subr.bf16.mxu0 0
      %2097 = vmatpush1.bf16.xpose.msra.mxu0 %v2082
      %2098 = vmatprep.subr.bf16.mxu0 0
      %2099 = vmatpush1.bf16.xpose.msra.mxu0 %v2079
      %2100 = vmatprep.subr.bf16.mxu0 0
      %2101 = vmatpush2.bf16.xpose.msra.mxu0 0
      %2102 = vmatprep.subr.bf16.mxu0 0
      %2103 = vmatpush2.bf16.xpose.msra.mxu0 0
      %2104 = vmatprep.subr.bf16.mxu0 0
      %2105 = vmatpush2.bf16.xpose.msra.mxu0 0
      %2106 = vmatprep.subr.bf16.mxu0 0
      %2107 = vmatpush2.bf16.xpose.msra.mxu0 0
      %2108 = vmatprep.subr.bf16.mxu0 0
      %2109 = vmatpush2.bf16.xpose.msra.mxu0 0
      %2110 = vmatprep.subr.bf16.mxu0 0
      %2111 = vmatpush2.bf16.xpose.msra.mxu0 0
      %2112 = vmatprep.subr.bf16.mxu0 0
      %2113 = vmatpush2.bf16.xpose.msra.mxu0 0
      %2114 = vmatprep.subr.bf16.mxu0 0
      %2115 = vmatpush2.bf16.xpose.msra.mxu0 0
      %2116 = vmatprep.mubr.bf16.mxu0 0
      %2117 = vmatmul.mubr.bf16.gmra.mxu0 %v2073
      %v2118 = vpop.f32.mrf.mxu0
      %v2119 = vadd.f32 %v1344, %v2118
      %v2120 = vpop.f32.mrf.mxu0
      %v2121 = vpop.f32.mrf.mxu0
      %v2122 = vadd.f32 %v1344, %v2121
      %v2123 = vpop.f32.mrf.mxu0
      %2124 = vmatprep.mubr.bf16.mxu0 0
      %2125 = vmatmul.mubr.bf16.gmra.mxu0 %v2076
      %v2126 = vpop.f32.mrf.mxu0
      %v2127 = vadd.f32 %v1344, %v2126
      %v2128 = vpop.f32.mrf.mxu0
      %v2129 = vpop.f32.mrf.mxu0
      %v2130 = vpop.f32.mrf.mxu0
      %2131 = vdwg.mxu0
      %v2132 = vsel %vm1415, %v2119, -inf
      %2133 = vmax.xlane.f32.xlu0 %v2132
      %v2134 = vpop.xlane.xlu0 %2133
      %v2135 = vsel %vm1415, %v2122, -inf
      %2136 = vmax.xlane.f32.xlu0 %v2135
      %v2137 = vpop.xlane.xlu0 %2136
      %v2138 = vsel %vm1415, %v2127, -inf
      %2139 = vmax.xlane.f32.xlu0 %v2138
      %v2140 = vpop.xlane.xlu0 %2139
      %v2141 = vsub.f32 %v2119, %v2134
      %v2142 = vsub.f32 %v2122, %v2137
      %v2143 = vsub.f32 %v2127, %v2140
      %v2144 = vmul.f32 %v2141, 1.442695
      %v2145 = vpow.pop %v2144
      %v2146 = vmul.f32 %v2142, 1.442695
      %v2147 = vpow.pop %v2146
      %v2148 = vmul.f32 %v2143, 1.442695
      %v2149 = vpow.pop %v2148
      %v2150 = vsel %vm1415, %v2145, 0.0
      %2151 = vadd.xlane.f32.xlu0 %v2150
      %v2152 = vpop.xlane.xlu0 %2151
      %v2153 = vsel %vm1415, %v2147, 0.0
      %2154 = vadd.xlane.f32.xlu0 %v2153
      %v2155 = vpop.xlane.xlu0 %2154
      %v2156 = vsel %vm1415, %v2149, 0.0
      %2157 = vadd.xlane.f32.xlu0 %v2156
      %v2158 = vpop.xlane.xlu0 %2157
      %v2159 = vrcp.pop %v2152
      %v2160 = vrcp.pop %v2155
      %v2161 = vrcp.pop %v2158
      %v2162 = vpack.c.bf16 %v2147, %v2145
      %v2163 = vpack.c.bf16 %v2149, %v2149
      %2164 = vrot.lane.b32.xlu0 %v1352, 32
      %v2165 = vpop.permute.xlu0 %2164
      %2166 = vrot.lane.b32.xlu0 %v1353, 32
      %v2167 = vpop.permute.xlu0 %2166
      %v2170 = vsel %vm1415, %v2162, 0
      %v2173 = vsel %vm1415, %v2163, 0
      %v2176 = vsel %vm1454, %v2167, 0
      %2178 = vmatprep.subr.bf16.mxu0 0
      %2179 = vmatpush1.bf16.msra.mxu0 0
      %2180 = vmatprep.subr.bf16.mxu0 0
      %2181 = vmatpush1.bf16.msra.mxu0 0
      %2182 = vmatprep.subr.bf16.mxu0 0
      %2183 = vmatpush1.bf16.msra.mxu0 0
      %2184 = vmatprep.subr.bf16.mxu0 0
      %2185 = vmatpush1.bf16.msra.mxu0 0
      %2186 = vmatprep.subr.bf16.mxu0 0
      %2187 = vmatpush1.bf16.msra.mxu0 0
      %2188 = vmatprep.subr.bf16.mxu0 0
      %2189 = vmatpush1.bf16.msra.mxu0 0
      %2190 = vmatprep.subr.bf16.mxu0 0
      %2191 = vmatpush1.bf16.msra.mxu0 %v2176
      %2192 = vmatprep.subr.bf16.mxu0 0
      %2193 = vmatpush1.bf16.msra.mxu0 %v2165
      %2194 = vmatprep.subr.bf16.mxu0 0
      %2195 = vmatpush2.bf16.msra.mxu0 0
      %2196 = vmatprep.subr.bf16.mxu0 0
      %2197 = vmatpush2.bf16.msra.mxu0 0
      %2198 = vmatprep.subr.bf16.mxu0 0
      %2199 = vmatpush2.bf16.msra.mxu0 0
      %2200 = vmatprep.subr.bf16.mxu0 0
      %2201 = vmatpush2.bf16.msra.mxu0 0
      %2202 = vmatprep.subr.bf16.mxu0 0
      %2203 = vmatpush2.bf16.msra.mxu0 0
      %2204 = vmatprep.subr.bf16.mxu0 0
      %2205 = vmatpush2.bf16.msra.mxu0 0
      %2206 = vmatprep.subr.bf16.mxu0 0
      %2207 = vmatpush2.bf16.msra.mxu0 0
      %2208 = vmatprep.subr.bf16.mxu0 0
      %2209 = vmatpush2.bf16.msra.mxu0 0
      %2210 = vmatprep.mubr.bf16.mxu0 0
      %2211 = vmatmul.mubr.bf16.gmra.mxu0 %v2170
      %v2212 = vpop.f32.mrf.mxu0
      %v2213 = vadd.f32 0.0, %v2212
      %v2214 = vpop.f32.mrf.mxu0
      %v2215 = vpop.f32.mrf.mxu0
      %v2216 = vadd.f32 0.0, %v2215
      %v2217 = vpop.f32.mrf.mxu0
      %2218 = vmatprep.mubr.bf16.mxu0 0
      %2219 = vmatmul.mubr.bf16.gmra.mxu0 %v2173
      %v2220 = vpop.f32.mrf.mxu0
      %v2221 = vadd.f32 0.0, %v2220
      %v2222 = vpop.f32.mrf.mxu0
      %v2223 = vpop.f32.mrf.mxu0
      %v2224 = vpop.f32.mrf.mxu0
      %2225 = vdwg.mxu0
      %v2226 = vmul.f32 %v2213, %v2159
      %v2227 = vmul.f32 %v2216, %v2160
      %v2228 = vmul.f32 %v2221, %v2161
      %v2229 = vpack.c.bf16 %v2227, %v2226
      %v2230 = vpack.c.bf16 %v2228, %v2228
      %v2231 = vld [vmem:[%s779 + $0x30] sm:$0xf]
      %v2232 = vld [vmem:[%s779 + $0x34] sm:$0xf]
      %v2233 = vld [vmem:[%s779 + $0x38] sm:$0xf]
      %v2234 = vld [vmem:[%s779 + $0x3c] sm:$0xf]
      %v2239 = vunpack.c.l.b16 %v2231
      %v2240 = vunpack.c.l.b16 %v2232
      %v2241 = vunpack.c.l.b16 %v2233
      %v2242 = vunpack.c.l.b16 %v2234
      %v2243 = vpack.c.b16 %v2240, %v2239
      %v2244 = vpack.c.b16 %v2242, %v2241
      %v2248 = vsel %vm1354, %v2229, 0
      %v2251 = vsel %vm1354, %v2230, 0
      %2253 = vmatprep.subr.bf16.mxu0 0
      %2254 = vmatpush1.bf16.msra.mxu0 0
      %2255 = vmatprep.subr.bf16.mxu0 0
      %2256 = vmatpush1.bf16.msra.mxu0 0
      %2257 = vmatprep.subr.bf16.mxu0 0
      %2258 = vmatpush1.bf16.msra.mxu0 0
      %2259 = vmatprep.subr.bf16.mxu0 0
      %2260 = vmatpush1.bf16.msra.mxu0 0
      %2261 = vmatprep.subr.bf16.mxu0 0
      %2262 = vmatpush1.bf16.msra.mxu0 0
      %2263 = vmatprep.subr.bf16.mxu0 0
      %2264 = vmatpush1.bf16.msra.mxu0 0
      %2265 = vmatprep.subr.bf16.mxu0 0
      %2266 = vmatpush1.bf16.msra.mxu0 %v2244
      %2267 = vmatprep.subr.bf16.mxu0 0
      %2268 = vmatpush1.bf16.msra.mxu0 %v2243
      %2269 = vmatprep.subr.bf16.mxu0 0
      %2270 = vmatpush2.bf16.msra.mxu0 0
      %2271 = vmatprep.subr.bf16.mxu0 0
      %2272 = vmatpush2.bf16.msra.mxu0 0
      %2273 = vmatprep.subr.bf16.mxu0 0
      %2274 = vmatpush2.bf16.msra.mxu0 0
      %2275 = vmatprep.subr.bf16.mxu0 0
      %2276 = vmatpush2.bf16.msra.mxu0 0
      %2277 = vmatprep.subr.bf16.mxu0 0
      %2278 = vmatpush2.bf16.msra.mxu0 0
      %2279 = vmatprep.subr.bf16.mxu0 0
      %2280 = vmatpush2.bf16.msra.mxu0 0
      %2281 = vmatprep.subr.bf16.mxu0 0
      %2282 = vmatpush2.bf16.msra.mxu0 0
      %2283 = vmatprep.subr.bf16.mxu0 0
      %2284 = vmatpush2.bf16.msra.mxu0 0
      %2285 = vmatprep.mubr.bf16.mxu0 0
      %2286 = vmatmul.mubr.bf16.gmra.mxu0 %v2248
      %v2287 = vpop.f32.mrf.mxu0
      %v2288 = vadd.f32 0.0, %v2287
      %v2289 = vpop.f32.mrf.mxu0
      %v2290 = vpop.f32.mrf.mxu0
      %v2291 = vadd.f32 0.0, %v2290
      %v2292 = vpop.f32.mrf.mxu0
      %2293 = vmatprep.mubr.bf16.mxu0 0
      %2294 = vmatmul.mubr.bf16.gmra.mxu0 %v2251
      %v2295 = vpop.f32.mrf.mxu0
      %v2296 = vadd.f32 0.0, %v2295
      %v2297 = vpop.f32.mrf.mxu0
      %v2298 = vpop.f32.mrf.mxu0
      %v2299 = vpop.f32.mrf.mxu0
      %2300 = vdwg.mxu0
      %v2301 = vadd.f32 %v2061, %v2288
      %v2302 = vadd.f32 %v2062, %v2291
      %v2303 = vadd.f32 %v2063, %v2296
      %v2304 = vadd.f32 %v1006, %v2301
      %v2305 = vadd.f32 %v1007, %v2302
      %v2306 = vadd.f32 %v1008, %v2303
      %v2307 = vld [vmem:[%s782] sm:$0x1]
      %v2309 = vlaneseq
      %v2310 = vshrl.u32 %v2309, 7
      %v2311 = vsub.s32 0, %v2310
      %v2312 = vrot.slane %v2307, %v2311
      %v2314 = vadd.f32 %v2304, %v2312
      %v2315 = vadd.f32 %v2305, %v2312
      %v2316 = vadd.f32 %v2306, %v2312
      %v2317 = vld [vmem:[%s785] sm:$0x1]
      %v2318 = vld [vmem:[%s788] sm:$0x1]
      %2319 = vadd.xlane.f32.xlu0 %v2314
      %v2320 = vpop.xlane.xlu0 %2319
      %2321 = vadd.xlane.f32.xlu0 %v2315
      %v2322 = vpop.xlane.xlu0 %2321
      %2323 = vadd.xlane.f32.xlu0 %v2316
      %v2324 = vpop.xlane.xlu0 %2323
      %v2325 = vmul.f32 %v2320, %v1017
      %v2326 = vmul.f32 %v2322, %v1017
      %v2327 = vmul.f32 %v2324, %v1017
      %v2328 = vsub.f32 %v2314, %v2325
      %v2329 = vsub.f32 %v2315, %v2326
      %v2330 = vsub.f32 %v2316, %v2327
      %v2331 = vmul.f32 %v2328, %v2328
      %v2332 = vmul.f32 %v2329, %v2329
      %v2333 = vmul.f32 %v2330, %v2330
      %2334 = vadd.xlane.f32.xlu0 %v2331
      %v2335 = vpop.xlane.xlu0 %2334
      %2336 = vadd.xlane.f32.xlu0 %v2332
      %v2337 = vpop.xlane.xlu0 %2336
      %2338 = vadd.xlane.f32.xlu0 %v2333
      %v2339 = vpop.xlane.xlu0 %2338
      %v2340 = vmul.f32 %v2335, %v1017
      %v2341 = vmul.f32 %v2337, %v1017
      %v2342 = vmul.f32 %v2339, %v1017
      %v2343 = vadd.f32 %v2340, 1e-12
      %v2344 = vadd.f32 %v2341, 1e-12
      %v2345 = vadd.f32 %v2342, 1e-12
      %v2346 = vrsqrt.pop %v2343
      %v2347 = vrsqrt.pop %v2344
      %v2348 = vrsqrt.pop %v2345
      %v2349 = vmul.f32 %v2328, %v2346
      %v2350 = vmul.f32 %v2329, %v2347
      %v2351 = vmul.f32 %v2330, %v2348
      %v2353 = vlaneseq
      %v2354 = vshrl.u32 %v2353, 7
      %v2355 = vsub.s32 0, %v2354
      %v2356 = vrot.slane %v2317, %v2355
      %v2358 = vmul.f32 %v2349, %v2356
      %v2359 = vmul.f32 %v2350, %v2356
      %v2360 = vmul.f32 %v2351, %v2356
      %v2362 = vlaneseq
      %v2363 = vshrl.u32 %v2362, 7
      %v2364 = vsub.s32 0, %v2363
      %v2365 = vrot.slane %v2318, %v2364
      %v2367 = vadd.f32 %v2358, %v2365
      %v2368 = vadd.f32 %v2359, %v2365
      %v2369 = vadd.f32 %v2360, %v2365
      %v2370 = vpack.c.bf16 %v2368, %v2367
      %v2371 = vpack.c.bf16 %v2369, %v2369
      %v2372 = vld [vmem:[%s793] sm:$0xff]
      %v2373 = vld [vmem:[%s793 + $0x8] sm:$0xff]
      %v2374 = vld [vmem:[%s793 + $0x10] sm:$0xff]
      %v2375 = vld [vmem:[%s793 + $0x18] sm:$0xff]
      %v2376 = vld [vmem:[%s793 + $0x20] sm:$0xff]
      %v2377 = vld [vmem:[%s793 + $0x28] sm:$0xff]
      %v2378 = vld [vmem:[%s793 + $0x30] sm:$0xff]
      %v2379 = vld [vmem:[%s793 + $0x38] sm:$0xff]
      %v2380 = vld [vmem:[%s793 + $0x40] sm:$0xff]
      %v2381 = vld [vmem:[%s793 + $0x48] sm:$0xff]
      %v2382 = vld [vmem:[%s793 + $0x50] sm:$0xff]
      %v2383 = vld [vmem:[%s793 + $0x58] sm:$0xff]
      %v2384 = vld [vmem:[%s793 + $0x60] sm:$0xff]
      %v2385 = vld [vmem:[%s793 + $0x68] sm:$0xff]
      %v2386 = vld [vmem:[%s793 + $0x70] sm:$0xff]
      %v2387 = vld [vmem:[%s793 + $0x78] sm:$0xff]
      %v2388 = vld [vmem:[%s793 + $0x80] sm:$0xff]
      %v2389 = vld [vmem:[%s793 + $0x88] sm:$0xff]
      %v2390 = vld [vmem:[%s793 + $0x90] sm:$0xff]
      %v2391 = vld [vmem:[%s793 + $0x98] sm:$0xff]
      %v2392 = vld [vmem:[%s793 + $0xa0] sm:$0xff]
      %v2393 = vld [vmem:[%s793 + $0xa8] sm:$0xff]
      %v2394 = vld [vmem:[%s793 + $0xb0] sm:$0xff]
      %v2395 = vld [vmem:[%s793 + $0xb8] sm:$0xff]
      %v2396 = vld [vmem:[%s793 + $0xc0] sm:$0xff]
      %v2397 = vld [vmem:[%s793 + $0xc8] sm:$0xff]
      %v2398 = vld [vmem:[%s793 + $0xd0] sm:$0xff]
      %v2399 = vld [vmem:[%s793 + $0xd8] sm:$0xff]
      %v2400 = vld [vmem:[%s793 + $0xe0] sm:$0xff]
      %v2401 = vld [vmem:[%s793 + $0xe8] sm:$0xff]
      %v2402 = vld [vmem:[%s793 + $0xf0] sm:$0xff]
      %v2403 = vld [vmem:[%s793 + $0xf8] sm:$0xff]
      %v2404 = vld [vmem:[%s797] sm:$0xf]
      %v2406 = vlaneseq
      %v2407 = vshrl.u32 %v2406, 7
      %v2408 = vsub.s32 0, %v2407
      %v2409 = vrot.slane %v2404, %v2408
      %v2410 = vlaneseq
      %v2411 = vshrl.u32 %v2410, 7
      %v2412 = vsub.s32 1, %v2411
      %v2413 = vrot.slane %v2404, %v2412
      %v2414 = vlaneseq
      %v2415 = vshrl.u32 %v2414, 7
      %v2416 = vsub.s32 2, %v2415
      %v2417 = vrot.slane %v2404, %v2416
      %v2418 = vlaneseq
      %v2419 = vshrl.u32 %v2418, 7
      %v2420 = vsub.s32 3, %v2419
      %v2421 = vrot.slane %v2404, %v2420
      %v2458 = vunpack.c.l.b16 %v2372
      %v2459 = vunpack.c.h.b16 %v2372
      %v2460 = vunpack.c.l.b16 %v2373
      %v2461 = vunpack.c.h.b16 %v2373
      %v2462 = vunpack.c.l.b16 %v2374
      %v2463 = vunpack.c.h.b16 %v2374
      %v2464 = vunpack.c.l.b16 %v2375
      %v2465 = vunpack.c.h.b16 %v2375
      %v2466 = vunpack.c.l.b16 %v2376
      %v2467 = vunpack.c.h.b16 %v2376
      %v2468 = vunpack.c.l.b16 %v2377
      %v2469 = vunpack.c.h.b16 %v2377
      %v2470 = vunpack.c.l.b16 %v2378
      %v2471 = vunpack.c.h.b16 %v2378
      %v2472 = vunpack.c.l.b16 %v2379
      %v2473 = vunpack.c.h.b16 %v2379
      %v2474 = vunpack.c.l.b16 %v2380
      %v2475 = vunpack.c.h.b16 %v2380
      %v2476 = vunpack.c.l.b16 %v2381
      %v2477 = vunpack.c.h.b16 %v2381
      %v2478 = vunpack.c.l.b16 %v2382
      %v2479 = vunpack.c.h.b16 %v2382
      %v2480 = vunpack.c.l.b16 %v2383
      %v2481 = vunpack.c.h.b16 %v2383
      %v2482 = vunpack.c.l.b16 %v2384
      %v2483 = vunpack.c.h.b16 %v2384
      %v2484 = vunpack.c.l.b16 %v2385
      %v2485 = vunpack.c.h.b16 %v2385
      %v2486 = vunpack.c.l.b16 %v2386
      %v2487 = vunpack.c.h.b16 %v2386
      %v2488 = vunpack.c.l.b16 %v2387
      %v2489 = vunpack.c.h.b16 %v2387
      %v2490 = vunpack.c.l.b16 %v2388
      %v2491 = vunpack.c.h.b16 %v2388
      %v2492 = vunpack.c.l.b16 %v2389
      %v2493 = vunpack.c.h.b16 %v2389
      %v2494 = vunpack.c.l.b16 %v2390
      %v2495 = vunpack.c.h.b16 %v2390
      %v2496 = vunpack.c.l.b16 %v2391
      %v2497 = vunpack.c.h.b16 %v2391
      %v2498 = vunpack.c.l.b16 %v2392
      %v2499 = vunpack.c.h.b16 %v2392
      %v2500 = vunpack.c.l.b16 %v2393
      %v2501 = vunpack.c.h.b16 %v2393
      %v2502 = vunpack.c.l.b16 %v2394
      %v2503 = vunpack.c.h.b16 %v2394
      %v2504 = vunpack.c.l.b16 %v2395
      %v2505 = vunpack.c.h.b16 %v2395
      %v2506 = vunpack.c.l.b16 %v2396
      %v2507 = vunpack.c.h.b16 %v2396
      %v2508 = vunpack.c.l.b16 %v2397
      %v2509 = vunpack.c.h.b16 %v2397
      %v2510 = vunpack.c.l.b16 %v2398
      %v2511 = vunpack.c.h.b16 %v2398
      %v2512 = vunpack.c.l.b16 %v2399
      %v2513 = vunpack.c.h.b16 %v2399
      %v2514 = vunpack.c.l.b16 %v2400
      %v2515 = vunpack.c.h.b16 %v2400
      %v2516 = vunpack.c.l.b16 %v2401
      %v2517 = vunpack.c.h.b16 %v2401
      %v2518 = vunpack.c.l.b16 %v2402
      %v2519 = vunpack.c.h.b16 %v2402
      %v2520 = vunpack.c.l.b16 %v2403
      %v2521 = vunpack.c.h.b16 %v2403
      %v2522 = vpack.c.b16 %v2462, %v2458
      %v2523 = vpack.c.b16 %v2463, %v2459
      %v2524 = vpack.c.b16 %v2464, %v2460
      %v2525 = vpack.c.b16 %v2465, %v2461
      %v2526 = vpack.c.b16 %v2470, %v2466
      %v2527 = vpack.c.b16 %v2471, %v2467
      %v2528 = vpack.c.b16 %v2472, %v2468
      %v2529 = vpack.c.b16 %v2473, %v2469
      %v2530 = vpack.c.b16 %v2478, %v2474
      %v2531 = vpack.c.b16 %v2479, %v2475
      %v2532 = vpack.c.b16 %v2480, %v2476
      %v2533 = vpack.c.b16 %v2481, %v2477
      %v2534 = vpack.c.b16 %v2486, %v2482
      %v2535 = vpack.c.b16 %v2487, %v2483
      %v2536 = vpack.c.b16 %v2488, %v2484
      %v2537 = vpack.c.b16 %v2489, %v2485
      %v2538 = vpack.c.b16 %v2494, %v2490
      %v2539 = vpack.c.b16 %v2495, %v2491
      %v2540 = vpack.c.b16 %v2496, %v2492
      %v2541 = vpack.c.b16 %v2497, %v2493
      %v2542 = vpack.c.b16 %v2502, %v2498
      %v2543 = vpack.c.b16 %v2503, %v2499
      %v2544 = vpack.c.b16 %v2504, %v2500
      %v2545 = vpack.c.b16 %v2505, %v2501
      %v2546 = vpack.c.b16 %v2510, %v2506
      %v2547 = vpack.c.b16 %v2511, %v2507
      %v2548 = vpack.c.b16 %v2512, %v2508
      %v2549 = vpack.c.b16 %v2513, %v2509
      %v2550 = vpack.c.b16 %v2518, %v2514
      %v2551 = vpack.c.b16 %v2519, %v2515
      %v2552 = vpack.c.b16 %v2520, %v2516
      %v2553 = vpack.c.b16 %v2521, %v2517
      %2586 = vmatprep.subr.bf16.mxu0 %v2551
      %2587 = vmatpush1.bf16.msra.mxu0 %v2550
      %2588 = vmatprep.subr.bf16.mxu0 %v2547
      %2589 = vmatpush1.bf16.msra.mxu0 %v2546
      %2590 = vmatprep.subr.bf16.mxu0 %v2543
      %2591 = vmatpush1.bf16.msra.mxu0 %v2542
      %2592 = vmatprep.subr.bf16.mxu0 %v2539
      %2593 = vmatpush1.bf16.msra.mxu0 %v2538
      %2594 = vmatprep.subr.bf16.mxu0 %v2535
      %2595 = vmatpush1.bf16.msra.mxu0 %v2534
      %2596 = vmatprep.subr.bf16.mxu0 %v2531
      %2597 = vmatpush1.bf16.msra.mxu0 %v2530
      %2598 = vmatprep.subr.bf16.mxu0 %v2527
      %2599 = vmatpush1.bf16.msra.mxu0 %v2526
      %2600 = vmatprep.subr.bf16.mxu0 %v2523
      %2601 = vmatpush1.bf16.msra.mxu0 %v2522
      %2602 = vmatprep.subr.bf16.mxu0 0
      %2603 = vmatpush2.bf16.msra.mxu0 0
      %2604 = vmatprep.subr.bf16.mxu0 0
      %2605 = vmatpush2.bf16.msra.mxu0 0
      %2606 = vmatprep.subr.bf16.mxu0 0
      %2607 = vmatpush2.bf16.msra.mxu0 0
      %2608 = vmatprep.subr.bf16.mxu0 0
      %2609 = vmatpush2.bf16.msra.mxu0 0
      %2610 = vmatprep.subr.bf16.mxu0 0
      %2611 = vmatpush2.bf16.msra.mxu0 0
      %2612 = vmatprep.subr.bf16.mxu0 0
      %2613 = vmatpush2.bf16.msra.mxu0 0
      %2614 = vmatprep.subr.bf16.mxu0 0
      %2615 = vmatpush2.bf16.msra.mxu0 0
      %2616 = vmatprep.subr.bf16.mxu0 0
      %2617 = vmatpush2.bf16.msra.mxu0 0
      %2618 = vmatprep.mubr.bf16.mxu0 0
      %2619 = vmatmul.mubr.bf16.gmra.mxu0 %v2370
      %v2620 = vpop.f32.mrf.mxu0
      %v2621 = vadd.f32 %v2409, %v2620
      %v2622 = vpop.f32.mrf.mxu0
      %v2623 = vadd.f32 %v2413, %v2622
      %v2624 = vpop.f32.mrf.mxu0
      %v2625 = vadd.f32 %v2409, %v2624
      %v2626 = vpop.f32.mrf.mxu0
      %v2627 = vadd.f32 %v2413, %v2626
      %2628 = vmatprep.mubr.bf16.mxu0 0
      %2629 = vmatmul.mubr.bf16.gmra.mxu0 %v2371
      %v2630 = vpop.f32.mrf.mxu0
      %v2631 = vadd.f32 %v2409, %v2630
      %v2632 = vpop.f32.mrf.mxu0
      %v2633 = vadd.f32 %v2413, %v2632
      %v2634 = vpop.f32.mrf.mxu0
      %v2635 = vpop.f32.mrf.mxu0
      %2636 = vdwg.mxu0
      %2637 = vmatprep.subr.bf16.mxu0 %v2553
      %2638 = vmatpush1.bf16.msra.mxu0 %v2552
      %2639 = vmatprep.subr.bf16.mxu0 %v2549
      %2640 = vmatpush1.bf16.msra.mxu0 %v2548
      %2641 = vmatprep.subr.bf16.mxu0 %v2545
      %2642 = vmatpush1.bf16.msra.mxu0 %v2544
      %2643 = vmatprep.subr.bf16.mxu0 %v2541
      %2644 = vmatpush1.bf16.msra.mxu0 %v2540
      %2645 = vmatprep.subr.bf16.mxu0 %v2537
      %2646 = vmatpush1.bf16.msra.mxu0 %v2536
      %2647 = vmatprep.subr.bf16.mxu0 %v2533
      %2648 = vmatpush1.bf16.msra.mxu0 %v2532
      %2649 = vmatprep.subr.bf16.mxu0 %v2529
      %2650 = vmatpush1.bf16.msra.mxu0 %v2528
      %2651 = vmatprep.subr.bf16.mxu0 %v2525
      %2652 = vmatpush1.bf16.msra.mxu0 %v2524
      %2653 = vmatprep.subr.bf16.mxu0 0
      %2654 = vmatpush2.bf16.msra.mxu0 0
      %2655 = vmatprep.subr.bf16.mxu0 0
      %2656 = vmatpush2.bf16.msra.mxu0 0
      %2657 = vmatprep.subr.bf16.mxu0 0
      %2658 = vmatpush2.bf16.msra.mxu0 0
      %2659 = vmatprep.subr.bf16.mxu0 0
      %2660 = vmatpush2.bf16.msra.mxu0 0
      %2661 = vmatprep.subr.bf16.mxu0 0
      %2662 = vmatpush2.bf16.msra.mxu0 0
      %2663 = vmatprep.subr.bf16.mxu0 0
      %2664 = vmatpush2.bf16.msra.mxu0 0
      %2665 = vmatprep.subr.bf16.mxu0 0
      %2666 = vmatpush2.bf16.msra.mxu0 0
      %2667 = vmatprep.subr.bf16.mxu0 0
      %2668 = vmatpush2.bf16.msra.mxu0 0
      %2669 = vmatprep.mubr.bf16.mxu0 0
      %2670 = vmatmul.mubr.bf16.gmra.mxu0 %v2370
      %v2671 = vpop.f32.mrf.mxu0
      %v2672 = vadd.f32 %v2417, %v2671
      %v2673 = vpop.f32.mrf.mxu0
      %v2674 = vadd.f32 %v2421, %v2673
      %v2675 = vpop.f32.mrf.mxu0
      %v2676 = vadd.f32 %v2417, %v2675
      %v2677 = vpop.f32.mrf.mxu0
      %v2678 = vadd.f32 %v2421, %v2677
      %2679 = vmatprep.mubr.bf16.mxu0 0
      %2680 = vmatmul.mubr.bf16.gmra.mxu0 %v2371
      %v2681 = vpop.f32.mrf.mxu0
      %v2682 = vadd.f32 %v2417, %v2681
      %v2683 = vpop.f32.mrf.mxu0
      %v2684 = vadd.f32 %v2421, %v2683
      %v2685 = vpop.f32.mrf.mxu0
      %v2686 = vpop.f32.mrf.mxu0
      %2687 = vdwg.mxu0
      %v2688 = vmul.f32 %v2621, %v2621
      %v2689 = vmul.f32 %v2623, %v2623
      %v2690 = vmul.f32 %v2672, %v2672
      %v2691 = vmul.f32 %v2674, %v2674
      %v2692 = vmul.f32 %v2625, %v2625
      %v2693 = vmul.f32 %v2627, %v2627
      %v2694 = vmul.f32 %v2676, %v2676
      %v2695 = vmul.f32 %v2678, %v2678
      %v2696 = vmul.f32 %v2631, %v2631
      %v2697 = vmul.f32 %v2633, %v2633
      %v2698 = vmul.f32 %v2682, %v2682
      %v2699 = vmul.f32 %v2684, %v2684
      %v2700 = vmul.f32 %v2621, %v2688
      %v2701 = vmul.f32 %v2623, %v2689
      %v2702 = vmul.f32 %v2672, %v2690
      %v2703 = vmul.f32 %v2674, %v2691
      %v2704 = vmul.f32 %v2625, %v2692
      %v2705 = vmul.f32 %v2627, %v2693
      %v2706 = vmul.f32 %v2676, %v2694
      %v2707 = vmul.f32 %v2678, %v2695
      %v2708 = vmul.f32 %v2631, %v2696
      %v2709 = vmul.f32 %v2633, %v2697
      %v2710 = vmul.f32 %v2682, %v2698
      %v2711 = vmul.f32 %v2684, %v2699
      %v2712 = vmul.f32 %v2700, 0.044715
      %v2713 = vmul.f32 %v2701, 0.044715
      %v2714 = vmul.f32 %v2702, 0.044715
      %v2715 = vmul.f32 %v2703, 0.044715
      %v2716 = vmul.f32 %v2704, 0.044715
      %v2717 = vmul.f32 %v2705, 0.044715
      %v2718 = vmul.f32 %v2706, 0.044715
      %v2719 = vmul.f32 %v2707, 0.044715
      %v2720 = vmul.f32 %v2708, 0.044715
      %v2721 = vmul.f32 %v2709, 0.044715
      %v2722 = vmul.f32 %v2710, 0.044715
      %v2723 = vmul.f32 %v2711, 0.044715
      %v2724 = vadd.f32 %v2621, %v2712
      %v2725 = vadd.f32 %v2623, %v2713
      %v2726 = vadd.f32 %v2672, %v2714
      %v2727 = vadd.f32 %v2674, %v2715
      %v2728 = vadd.f32 %v2625, %v2716
      %v2729 = vadd.f32 %v2627, %v2717
      %v2730 = vadd.f32 %v2676, %v2718
      %v2731 = vadd.f32 %v2678, %v2719
      %v2732 = vadd.f32 %v2631, %v2720
      %v2733 = vadd.f32 %v2633, %v2721
      %v2734 = vadd.f32 %v2682, %v2722
      %v2735 = vadd.f32 %v2684, %v2723
      %v2736 = vmul.f32 %v2724, 0.7978846
      %v2737 = vmul.f32 %v2725, 0.7978846
      %v2738 = vmul.f32 %v2726, 0.7978846
      %v2739 = vmul.f32 %v2727, 0.7978846
      %v2740 = vmul.f32 %v2728, 0.7978846
      %v2741 = vmul.f32 %v2729, 0.7978846
      %v2742 = vmul.f32 %v2730, 0.7978846
      %v2743 = vmul.f32 %v2731, 0.7978846
      %v2744 = vmul.f32 %v2732, 0.7978846
      %v2745 = vmul.f32 %v2733, 0.7978846
      %v2746 = vmul.f32 %v2734, 0.7978846
      %v2747 = vmul.f32 %v2735, 0.7978846
      %v2748 = vtanh.pop %v2736
      %v2749 = vtanh.pop %v2737
      %v2750 = vtanh.pop %v2738
      %v2751 = vtanh.pop %v2739
      %v2752 = vtanh.pop %v2740
      %v2753 = vtanh.pop %v2741
      %v2754 = vtanh.pop %v2742
      %v2755 = vtanh.pop %v2743
      %v2756 = vtanh.pop %v2744
      %v2757 = vtanh.pop %v2745
      %v2758 = vtanh.pop %v2746
      %v2759 = vtanh.pop %v2747
      %v2760 = vadd.f32 %v2748, 1.0
      %v2761 = vadd.f32 %v2749, 1.0
      %v2762 = vadd.f32 %v2750, 1.0
      %v2763 = vadd.f32 %v2751, 1.0
      %v2764 = vadd.f32 %v2752, 1.0
      %v2765 = vadd.f32 %v2753, 1.0
      %v2766 = vadd.f32 %v2754, 1.0
      %v2767 = vadd.f32 %v2755, 1.0
      %v2768 = vadd.f32 %v2756, 1.0
      %v2769 = vadd.f32 %v2757, 1.0
      %v2770 = vadd.f32 %v2758, 1.0
      %v2771 = vadd.f32 %v2759, 1.0
      %v2772 = vmul.f32 %v2760, 0.5
      %v2773 = vmul.f32 %v2761, 0.5
      %v2774 = vmul.f32 %v2762, 0.5
      %v2775 = vmul.f32 %v2763, 0.5
      %v2776 = vmul.f32 %v2764, 0.5
      %v2777 = vmul.f32 %v2765, 0.5
      %v2778 = vmul.f32 %v2766, 0.5
      %v2779 = vmul.f32 %v2767, 0.5
      %v2780 = vmul.f32 %v2768, 0.5
      %v2781 = vmul.f32 %v2769, 0.5
      %v2782 = vmul.f32 %v2770, 0.5
      %v2783 = vmul.f32 %v2771, 0.5
      %v2784 = vmul.f32 %v2621, %v2772
      %v2785 = vmul.f32 %v2623, %v2773
      %v2786 = vmul.f32 %v2672, %v2774
      %v2787 = vmul.f32 %v2674, %v2775
      %v2788 = vmul.f32 %v2625, %v2776
      %v2789 = vmul.f32 %v2627, %v2777
      %v2790 = vmul.f32 %v2676, %v2778
      %v2791 = vmul.f32 %v2678, %v2779
      %v2792 = vmul.f32 %v2631, %v2780
      %v2793 = vmul.f32 %v2633, %v2781
      %v2794 = vmul.f32 %v2682, %v2782
      %v2795 = vmul.f32 %v2684, %v2783
      %v2796 = vpack.c.bf16 %v2788, %v2784
      %v2797 = vpack.c.bf16 %v2789, %v2785
      %v2798 = vpack.c.bf16 %v2790, %v2786
      %v2799 = vpack.c.bf16 %v2791, %v2787
      %v2800 = vpack.c.bf16 %v2792, %v2792
      %v2801 = vpack.c.bf16 %v2793, %v2793
      %v2802 = vpack.c.bf16 %v2794, %v2794
      %v2803 = vpack.c.bf16 %v2795, %v2795
      %v2804 = vld [vmem:[%s802] sm:$0xf]
      %v2805 = vld [vmem:[%s802 + $0x4] sm:$0xf]
      %v2806 = vld [vmem:[%s802 + $0x8] sm:$0xf]
      %v2807 = vld [vmem:[%s802 + $0xc] sm:$0xf]
      %v2808 = vld [vmem:[%s802 + $0x10] sm:$0xf]
      %v2809 = vld [vmem:[%s802 + $0x14] sm:$0xf]
      %v2810 = vld [vmem:[%s802 + $0x18] sm:$0xf]
      %v2811 = vld [vmem:[%s802 + $0x1c] sm:$0xf]
      %v2812 = vld [vmem:[%s802 + $0x20] sm:$0xf]
      %v2813 = vld [vmem:[%s802 + $0x24] sm:$0xf]
      %v2814 = vld [vmem:[%s802 + $0x28] sm:$0xf]
      %v2815 = vld [vmem:[%s802 + $0x2c] sm:$0xf]
      %v2816 = vld [vmem:[%s802 + $0x30] sm:$0xf]
      %v2817 = vld [vmem:[%s802 + $0x34] sm:$0xf]
      %v2818 = vld [vmem:[%s802 + $0x38] sm:$0xf]
      %v2819 = vld [vmem:[%s802 + $0x3c] sm:$0xf]
      %v2820 = vld [vmem:[%s802 + $0x40] sm:$0xf]
      %v2821 = vld [vmem:[%s802 + $0x44] sm:$0xf]
      %v2822 = vld [vmem:[%s802 + $0x48] sm:$0xf]
      %v2823 = vld [vmem:[%s802 + $0x4c] sm:$0xf]
      %v2824 = vld [vmem:[%s802 + $0x50] sm:$0xf]
      %v2825 = vld [vmem:[%s802 + $0x54] sm:$0xf]
      %v2826 = vld [vmem:[%s802 + $0x58] sm:$0xf]
      %v2827 = vld [vmem:[%s802 + $0x5c] sm:$0xf]
      %v2828 = vld [vmem:[%s802 + $0x60] sm:$0xf]
      %v2829 = vld [vmem:[%s802 + $0x64] sm:$0xf]
      %v2830 = vld [vmem:[%s802 + $0x68] sm:$0xf]
      %v2831 = vld [vmem:[%s802 + $0x6c] sm:$0xf]
      %v2832 = vld [vmem:[%s802 + $0x70] sm:$0xf]
      %v2833 = vld [vmem:[%s802 + $0x74] sm:$0xf]
      %v2834 = vld [vmem:[%s802 + $0x78] sm:$0xf]
      %v2835 = vld [vmem:[%s802 + $0x7c] sm:$0xf]
      %v2836 = vld [vmem:[%s802 + $0x80] sm:$0xf]
      %v2837 = vld [vmem:[%s802 + $0x84] sm:$0xf]
      %v2838 = vld [vmem:[%s802 + $0x88] sm:$0xf]
      %v2839 = vld [vmem:[%s802 + $0x8c] sm:$0xf]
      %v2840 = vld [vmem:[%s802 + $0x90] sm:$0xf]
      %v2841 = vld [vmem:[%s802 + $0x94] sm:$0xf]
      %v2842 = vld [vmem:[%s802 + $0x98] sm:$0xf]
      %v2843 = vld [vmem:[%s802 + $0x9c] sm:$0xf]
      %v2844 = vld [vmem:[%s802 + $0xa0] sm:$0xf]
      %v2845 = vld [vmem:[%s802 + $0xa4] sm:$0xf]
      %v2846 = vld [vmem:[%s802 + $0xa8] sm:$0xf]
      %v2847 = vld [vmem:[%s802 + $0xac] sm:$0xf]
      %v2848 = vld [vmem:[%s802 + $0xb0] sm:$0xf]
      %v2849 = vld [vmem:[%s802 + $0xb4] sm:$0xf]
      %v2850 = vld [vmem:[%s802 + $0xb8] sm:$0xf]
      %v2851 = vld [vmem:[%s802 + $0xbc] sm:$0xf]
      %v2852 = vld [vmem:[%s802 + $0xc0] sm:$0xf]
      %v2853 = vld [vmem:[%s802 + $0xc4] sm:$0xf]
      %v2854 = vld [vmem:[%s802 + $0xc8] sm:$0xf]
      %v2855 = vld [vmem:[%s802 + $0xcc] sm:$0xf]
      %v2856 = vld [vmem:[%s802 + $0xd0] sm:$0xf]
      %v2857 = vld [vmem:[%s802 + $0xd4] sm:$0xf]
      %v2858 = vld [vmem:[%s802 + $0xd8] sm:$0xf]
      %v2859 = vld [vmem:[%s802 + $0xdc] sm:$0xf]
      %v2860 = vld [vmem:[%s802 + $0xe0] sm:$0xf]
      %v2861 = vld [vmem:[%s802 + $0xe4] sm:$0xf]
      %v2862 = vld [vmem:[%s802 + $0xe8] sm:$0xf]
      %v2863 = vld [vmem:[%s802 + $0xec] sm:$0xf]
      %v2864 = vld [vmem:[%s802 + $0xf0] sm:$0xf]
      %v2865 = vld [vmem:[%s802 + $0xf4] sm:$0xf]
      %v2866 = vld [vmem:[%s802 + $0xf8] sm:$0xf]
      %v2867 = vld [vmem:[%s802 + $0xfc] sm:$0xf]
      %v2932 = vunpack.c.l.b16 %v2804
      %v2933 = vunpack.c.l.b16 %v2805
      %v2934 = vunpack.c.l.b16 %v2806
      %v2935 = vunpack.c.l.b16 %v2807
      %v2936 = vunpack.c.l.b16 %v2808
      %v2937 = vunpack.c.l.b16 %v2809
      %v2938 = vunpack.c.l.b16 %v2810
      %v2939 = vunpack.c.l.b16 %v2811
      %v2940 = vunpack.c.l.b16 %v2812
      %v2941 = vunpack.c.l.b16 %v2813
      %v2942 = vunpack.c.l.b16 %v2814
      %v2943 = vunpack.c.l.b16 %v2815
      %v2944 = vunpack.c.l.b16 %v2816
      %v2945 = vunpack.c.l.b16 %v2817
      %v2946 = vunpack.c.l.b16 %v2818
      %v2947 = vunpack.c.l.b16 %v2819
      %v2948 = vunpack.c.l.b16 %v2820
      %v2949 = vunpack.c.l.b16 %v2821
      %v2950 = vunpack.c.l.b16 %v2822
      %v2951 = vunpack.c.l.b16 %v2823
      %v2952 = vunpack.c.l.b16 %v2824
      %v2953 = vunpack.c.l.b16 %v2825
      %v2954 = vunpack.c.l.b16 %v2826
      %v2955 = vunpack.c.l.b16 %v2827
      %v2956 = vunpack.c.l.b16 %v2828
      %v2957 = vunpack.c.l.b16 %v2829
      %v2958 = vunpack.c.l.b16 %v2830
      %v2959 = vunpack.c.l.b16 %v2831
      %v2960 = vunpack.c.l.b16 %v2832
      %v2961 = vunpack.c.l.b16 %v2833
      %v2962 = vunpack.c.l.b16 %v2834
      %v2963 = vunpack.c.l.b16 %v2835
      %v2964 = vunpack.c.l.b16 %v2836
      %v2965 = vunpack.c.l.b16 %v2837
      %v2966 = vunpack.c.l.b16 %v2838
      %v2967 = vunpack.c.l.b16 %v2839
      %v2968 = vunpack.c.l.b16 %v2840
      %v2969 = vunpack.c.l.b16 %v2841
      %v2970 = vunpack.c.l.b16 %v2842
      %v2971 = vunpack.c.l.b16 %v2843
      %v2972 = vunpack.c.l.b16 %v2844
      %v2973 = vunpack.c.l.b16 %v2845
      %v2974 = vunpack.c.l.b16 %v2846
      %v2975 = vunpack.c.l.b16 %v2847
      %v2976 = vunpack.c.l.b16 %v2848
      %v2977 = vunpack.c.l.b16 %v2849
      %v2978 = vunpack.c.l.b16 %v2850
      %v2979 = vunpack.c.l.b16 %v2851
      %v2980 = vunpack.c.l.b16 %v2852
      %v2981 = vunpack.c.l.b16 %v2853
      %v2982 = vunpack.c.l.b16 %v2854
      %v2983 = vunpack.c.l.b16 %v2855
      %v2984 = vunpack.c.l.b16 %v2856
      %v2985 = vunpack.c.l.b16 %v2857
      %v2986 = vunpack.c.l.b16 %v2858
      %v2987 = vunpack.c.l.b16 %v2859
      %v2988 = vunpack.c.l.b16 %v2860
      %v2989 = vunpack.c.l.b16 %v2861
      %v2990 = vunpack.c.l.b16 %v2862
      %v2991 = vunpack.c.l.b16 %v2863
      %v2992 = vunpack.c.l.b16 %v2864
      %v2993 = vunpack.c.l.b16 %v2865
      %v2994 = vunpack.c.l.b16 %v2866
      %v2995 = vunpack.c.l.b16 %v2867
      %v2996 = vpack.c.b16 %v2933, %v2932
      %v2997 = vpack.c.b16 %v2935, %v2934
      %v2998 = vpack.c.b16 %v2937, %v2936
      %v2999 = vpack.c.b16 %v2939, %v2938
      %v3000 = vpack.c.b16 %v2941, %v2940
      %v3001 = vpack.c.b16 %v2943, %v2942
      %v3002 = vpack.c.b16 %v2945, %v2944
      %v3003 = vpack.c.b16 %v2947, %v2946
      %v3004 = vpack.c.b16 %v2949, %v2948
      %v3005 = vpack.c.b16 %v2951, %v2950
      %v3006 = vpack.c.b16 %v2953, %v2952
      %v3007 = vpack.c.b16 %v2955, %v2954
      %v3008 = vpack.c.b16 %v2957, %v2956
      %v3009 = vpack.c.b16 %v2959, %v2958
      %v3010 = vpack.c.b16 %v2961, %v2960
      %v3011 = vpack.c.b16 %v2963, %v2962
      %v3012 = vpack.c.b16 %v2965, %v2964
      %v3013 = vpack.c.b16 %v2967, %v2966
      %v3014 = vpack.c.b16 %v2969, %v2968
      %v3015 = vpack.c.b16 %v2971, %v2970
      %v3016 = vpack.c.b16 %v2973, %v2972
      %v3017 = vpack.c.b16 %v2975, %v2974
      %v3018 = vpack.c.b16 %v2977, %v2976
      %v3019 = vpack.c.b16 %v2979, %v2978
      %v3020 = vpack.c.b16 %v2981, %v2980
      %v3021 = vpack.c.b16 %v2983, %v2982
      %v3022 = vpack.c.b16 %v2985, %v2984
      %v3023 = vpack.c.b16 %v2987, %v2986
      %v3024 = vpack.c.b16 %v2989, %v2988
      %v3025 = vpack.c.b16 %v2991, %v2990
      %v3026 = vpack.c.b16 %v2993, %v2992
      %v3027 = vpack.c.b16 %v2995, %v2994
      %3060 = vmatprep.subr.bf16.mxu0 0
      %3061 = vmatpush1.bf16.msra.mxu0 %v3003
      %3062 = vmatprep.subr.bf16.mxu0 0
      %3063 = vmatpush1.bf16.msra.mxu0 %v3002
      %3064 = vmatprep.subr.bf16.mxu0 0
      %3065 = vmatpush1.bf16.msra.mxu0 %v3001
      %3066 = vmatprep.subr.bf16.mxu0 0
      %3067 = vmatpush1.bf16.msra.mxu0 %v3000
      %3068 = vmatprep.subr.bf16.mxu0 0
      %3069 = vmatpush1.bf16.msra.mxu0 %v2999
      %3070 = vmatprep.subr.bf16.mxu0 0
      %3071 = vmatpush1.bf16.msra.mxu0 %v2998
      %3072 = vmatprep.subr.bf16.mxu0 0
      %3073 = vmatpush1.bf16.msra.mxu0 %v2997
      %3074 = vmatprep.subr.bf16.mxu0 0
      %3075 = vmatpush1.bf16.msra.mxu0 %v2996
      %3076 = vmatprep.subr.bf16.mxu0 0
      %3077 = vmatpush2.bf16.msra.mxu0 %v3011
      %3078 = vmatprep.subr.bf16.mxu0 0
      %3079 = vmatpush2.bf16.msra.mxu0 %v3010
      %3080 = vmatprep.subr.bf16.mxu0 0
      %3081 = vmatpush2.bf16.msra.mxu0 %v3009
      %3082 = vmatprep.subr.bf16.mxu0 0
      %3083 = vmatpush2.bf16.msra.mxu0 %v3008
      %3084 = vmatprep.subr.bf16.mxu0 0
      %3085 = vmatpush2.bf16.msra.mxu0 %v3007
      %3086 = vmatprep.subr.bf16.mxu0 0
      %3087 = vmatpush2.bf16.msra.mxu0 %v3006
      %3088 = vmatprep.subr.bf16.mxu0 0
      %3089 = vmatpush2.bf16.msra.mxu0 %v3005
      %3090 = vmatprep.subr.bf16.mxu0 0
      %3091 = vmatpush2.bf16.msra.mxu0 %v3004
      %3092 = vmatprep.mubr.bf16.mxu0 %v2797
      %3093 = vmatmul.mubr.bf16.gmra.mxu0 %v2796
      %v3094 = vpop.f32.mrf.mxu0
      %v3095 = vadd.f32 0.0, %v3094
      %v3096 = vpop.f32.mrf.mxu0
      %v3097 = vpop.f32.mrf.mxu0
      %v3098 = vadd.f32 0.0, %v3097
      %v3099 = vpop.f32.mrf.mxu0
      %3100 = vmatprep.mubr.bf16.mxu0 %v2801
      %3101 = vmatmul.mubr.bf16.gmra.mxu0 %v2800
      %v3102 = vpop.f32.mrf.mxu0
      %v3103 = vadd.f32 0.0, %v3102
      %v3104 = vpop.f32.mrf.mxu0
      %v3105 = vpop.f32.mrf.mxu0
      %v3106 = vpop.f32.mrf.mxu0
      %3107 = vdwg.mxu0
      %3108 = vmatprep.subr.bf16.mxu0 0
      %3109 = vmatpush1.bf16.msra.mxu0 %v3019
      %3110 = vmatprep.subr.bf16.mxu0 0
      %3111 = vmatpush1.bf16.msra.mxu0 %v3018
      %3112 = vmatprep.subr.bf16.mxu0 0
      %3113 = vmatpush1.bf16.msra.mxu0 %v3017
      %3114 = vmatprep.subr.bf16.mxu0 0
      %3115 = vmatpush1.bf16.msra.mxu0 %v3016
      %3116 = vmatprep.subr.bf16.mxu0 0
      %3117 = vmatpush1.bf16.msra.mxu0 %v3015
      %3118 = vmatprep.subr.bf16.mxu0 0
      %3119 = vmatpush1.bf16.msra.mxu0 %v3014
      %3120 = vmatprep.subr.bf16.mxu0 0
      %3121 = vmatpush1.bf16.msra.mxu0 %v3013
      %3122 = vmatprep.subr.bf16.mxu0 0
      %3123 = vmatpush1.bf16.msra.mxu0 %v3012
      %3124 = vmatprep.subr.bf16.mxu0 0
      %3125 = vmatpush2.bf16.msra.mxu0 %v3027
      %3126 = vmatprep.subr.bf16.mxu0 0
      %3127 = vmatpush2.bf16.msra.mxu0 %v3026
      %3128 = vmatprep.subr.bf16.mxu0 0
      %3129 = vmatpush2.bf16.msra.mxu0 %v3025
      %3130 = vmatprep.subr.bf16.mxu0 0
      %3131 = vmatpush2.bf16.msra.mxu0 %v3024
      %3132 = vmatprep.subr.bf16.mxu0 0
      %3133 = vmatpush2.bf16.msra.mxu0 %v3023
      %3134 = vmatprep.subr.bf16.mxu0 0
      %3135 = vmatpush2.bf16.msra.mxu0 %v3022
      %3136 = vmatprep.subr.bf16.mxu0 0
      %3137 = vmatpush2.bf16.msra.mxu0 %v3021
      %3138 = vmatprep.subr.bf16.mxu0 0
      %3139 = vmatpush2.bf16.msra.mxu0 %v3020
      %3140 = vmatprep.mubr.bf16.mxu0 %v2799
      %3141 = vmatmul.mubr.bf16.gmra.mxu0 %v2798
      %v3142 = vpop.f32.mrf.mxu0
      %v3143 = vadd.f32 %v3095, %v3142
      %v3144 = vpop.f32.mrf.mxu0
      %v3145 = vpop.f32.mrf.mxu0
      %v3146 = vadd.f32 %v3098, %v3145
      %v3147 = vpop.f32.mrf.mxu0
      %3148 = vmatprep.mubr.bf16.mxu0 %v2803
      %3149 = vmatmul.mubr.bf16.gmra.mxu0 %v2802
      %v3150 = vpop.f32.mrf.mxu0
      %v3151 = vadd.f32 %v3103, %v3150
      %v3152 = vpop.f32.mrf.mxu0
      %v3153 = vpop.f32.mrf.mxu0
      %v3154 = vpop.f32.mrf.mxu0
      %3155 = vdwg.mxu0
      %v3156 = vadd.f32 %v2314, %v3143
      %v3157 = vadd.f32 %v2315, %v3146
      %v3158 = vadd.f32 %v2316, %v3151
      %v3159 = vld [vmem:[%s805] sm:$0x1]
      %v3161 = vlaneseq
      %v3162 = vshrl.u32 %v3161, 7
      %v3163 = vsub.s32 0, %v3162
      %v3164 = vrot.slane %v3159, %v3163
      %v3166 = vadd.f32 %v3156, %v3164
      %v3167 = vadd.f32 %v3157, %v3164
      %v3168 = vadd.f32 %v3158, %v3164
      %3169 = vst [vmem:[#allocation2] sm:$0xff] %v3166
      %3170 = vst [vmem:[#allocation2 + $0x8] sm:$0xff] %v3167
      %3171 = vst [vmem:[#allocation2 + $0x10] sm:$0xff] %v3168
      %p3172 = scmp.eq.s32.totalorder %s35, 3
      // Predicated region
      $region101: #{vit_forward.1} parent=95 // pred_check
        %p3173 = pneg %p3172
      $region102: #{vit_forward.1} parent=95 // pred_check_branch
        %3175 = sbr.rel (%p3173) target = $region104
      $region103: #{vit_forward.1} parent=95 // pred_region
        %v3176 = vld [vmem:[%s15] sm:$0x1]
        %v3177 = vld [vmem:[%s16] sm:$0x1]
        %vm3178 = vcmask 1040384
        %v3179 = vsel %vm3178, %v3166, 0.0
        %3180 = vadd.xlane.f32.xlu0 %v3179
        %v3181 = vpop.xlane.xlu0 %3180
        %v3182 = vmul.f32 %v3181, %v1017
        %v3183 = vsub.f32 %v3166, %v3182
        %v3184 = vmul.f32 %v3183, %v3183
        %v3185 = vsel %vm3178, %v3184, 0.0
        %3186 = vadd.xlane.f32.xlu0 %v3185
        %v3187 = vpop.xlane.xlu0 %3186
        %v3188 = vmul.f32 %v3187, %v1017
        %v3189 = vadd.f32 %v3188, 1e-12
        %v3190 = vrsqrt.pop %v3189
        %v3191 = vmul.f32 %v3183, %v3190
        %v3192 = vmul.f32 %v3191, %v3176
        %v3193 = vadd.f32 %v3192, %v3177
        %v3194 = vpack.c.bf16 %v3193, %v3193
        %v3195 = vld [vmem:[%s17] sm:$0xf]
        %v3196 = vld [vmem:[%s17 + $0x4] sm:$0xf]
        %v3197 = vld [vmem:[%s17 + $0x8] sm:$0xf]
        %v3198 = vld [vmem:[%s17 + $0xc] sm:$0xf]
        %v3199 = vld [vmem:[%s17 + $0x10] sm:$0xf]
        %v3200 = vld [vmem:[%s17 + $0x14] sm:$0xf]
        %v3201 = vld [vmem:[%s17 + $0x18] sm:$0xf]
        %v3202 = vld [vmem:[%s17 + $0x1c] sm:$0xf]
        %v3203 = vld [vmem:[%s17 + $0x20] sm:$0xf]
        %v3204 = vld [vmem:[%s17 + $0x24] sm:$0xf]
        %v3205 = vld [vmem:[%s17 + $0x28] sm:$0xf]
        %v3206 = vld [vmem:[%s17 + $0x2c] sm:$0xf]
        %v3207 = vld [vmem:[%s17 + $0x30] sm:$0xf]
        %v3208 = vld [vmem:[%s17 + $0x34] sm:$0xf]
        %v3209 = vld [vmem:[%s17 + $0x38] sm:$0xf]
        %v3210 = vld [vmem:[%s17 + $0x3c] sm:$0xf]
        %v3211 = vld [vmem:[%s18] sm:$0x1]
        %v3228 = vunpack.c.l.b16 %v3195
        %v3229 = vunpack.c.l.b16 %v3196
        %v3230 = vunpack.c.l.b16 %v3197
        %v3231 = vunpack.c.l.b16 %v3198
        %v3232 = vunpack.c.l.b16 %v3199
        %v3233 = vunpack.c.l.b16 %v3200
        %v3234 = vunpack.c.l.b16 %v3201
        %v3235 = vunpack.c.l.b16 %v3202
        %v3236 = vunpack.c.l.b16 %v3203
        %v3237 = vunpack.c.l.b16 %v3204
        %v3238 = vunpack.c.l.b16 %v3205
        %v3239 = vunpack.c.l.b16 %v3206
        %v3240 = vunpack.c.l.b16 %v3207
        %v3241 = vunpack.c.l.b16 %v3208
        %v3242 = vunpack.c.l.b16 %v3209
        %v3243 = vunpack.c.l.b16 %v3210
        %v3244 = vpack.c.b16 %v3229, %v3228
        %v3245 = vpack.c.b16 %v3231, %v3230
        %v3246 = vpack.c.b16 %v3233, %v3232
        %v3247 = vpack.c.b16 %v3235, %v3234
        %v3248 = vpack.c.b16 %v3237, %v3236
        %v3249 = vpack.c.b16 %v3239, %v3238
        %v3250 = vpack.c.b16 %v3241, %v3240
        %v3251 = vpack.c.b16 %v3243, %v3242
        %3260 = vmatprep.subr.bf16.mxu0 0
        %3261 = vmatpush1.bf16.msra.mxu0 %v3251
        %3262 = vmatprep.subr.bf16.mxu0 0
        %3263 = vmatpush1.bf16.msra.mxu0 %v3250
        %3264 = vmatprep.subr.bf16.mxu0 0
        %3265 = vmatpush1.bf16.msra.mxu0 %v3249
        %3266 = vmatprep.subr.bf16.mxu0 0
        %3267 = vmatpush1.bf16.msra.mxu0 %v3248
        %3268 = vmatprep.subr.bf16.mxu0 0
        %3269 = vmatpush1.bf16.msra.mxu0 %v3247
        %3270 = vmatprep.subr.bf16.mxu0 0
        %3271 = vmatpush1.bf16.msra.mxu0 %v3246
        %3272 = vmatprep.subr.bf16.mxu0 0
        %3273 = vmatpush1.bf16.msra.mxu0 %v3245
        %3274 = vmatprep.subr.bf16.mxu0 0
        %3275 = vmatpush1.bf16.msra.mxu0 %v3244
        %3276 = vmatprep.subr.bf16.mxu0 0
        %3277 = vmatpush2.bf16.msra.mxu0 0
        %3278 = vmatprep.subr.bf16.mxu0 0
        %3279 = vmatpush2.bf16.msra.mxu0 0
        %3280 = vmatprep.subr.bf16.mxu0 0
        %3281 = vmatpush2.bf16.msra.mxu0 0
        %3282 = vmatprep.subr.bf16.mxu0 0
        %3283 = vmatpush2.bf16.msra.mxu0 0
        %3284 = vmatprep.subr.bf16.mxu0 0
        %3285 = vmatpush2.bf16.msra.mxu0 0
        %3286 = vmatprep.subr.bf16.mxu0 0
        %3287 = vmatpush2.bf16.msra.mxu0 0
        %3288 = vmatprep.subr.bf16.mxu0 0
        %3289 = vmatpush2.bf16.msra.mxu0 0
        %3290 = vmatprep.subr.bf16.mxu0 0
        %3291 = vmatpush2.bf16.msra.mxu0 0
        %3292 = vmatprep.mubr.bf16.mxu0 0
        %3293 = vmatmul.mubr.bf16.gmra.mxu0 %v3194
        %v3294 = vpop.f32.mrf.mxu0
        %v3295 = vadd.f32 %v3211, %v3294
        %v3296 = vpop.f32.mrf.mxu0
        %v3297 = vpop.f32.mrf.mxu0
        %v3298 = vpop.f32.mrf.mxu0
        %3299 = vdwg.mxu0
        %v3300 = vxor.u32 %v3295, 2147483648
        %v3301 = vmul.f32 %v3300, 1.442695
        %v3302 = vpow.pop %v3301
        %v3303 = vadd.f32 %v3302, 1.0
        %v3304 = vrcp.pop %v3303
        %v3305 = vmul.f32 1.0, %v3304
        %v3306 = vmul.f32 %v3305, 224.0
        %vm3307 = vcmask 57344
        %3308 = vst.msk [vmem:[%s808] sm:$0x1] %vm3307, %v3306
      $region104: #{vit_forward.1} parent=95 // pred_fallthru
        _
      %p3309 = scmp.lt.s32.totalorder %s34, 1
      %s3310 = scalar_select %p3309, %s34, 1
      %s3311 = scalar_lea.vmem %s19, %s3310
      // Predicated region
      $region105: #{vit_forward.1} parent=95 // pred_check
        %p3312 = pneg %p524
      $region106: #{vit_forward.1} parent=95 // pred_check_branch
        %3314 = sbr.rel (%p3312) target = $region108
      $region107: #{vit_forward.1} parent=95 // pred_region
        _
      $region108: #{vit_forward.1} parent=95 // pred_fallthru
        _
    $region96: #{vit_forward.1} parent=5 // pred_fallthru
      _
    %p3315 = scmp.le.s32.totalorder 2, %s25
    // Predicated region
    $region109: #{vit_forward.1} parent=5 // pred_check
      %p3316 = pneg %p3315
    $region110: #{vit_forward.1} parent=5 // pred_check_branch
      %3318 = sbr.rel (%p3316) target = $region112
    $region111: #{vit_forward.1} parent=5 // pred_region
      %s3319 = ssub.s32 %s25, 2
      // Predicated region
      $region113: #{vit_forward.1} parent=111 // pred_check
        %p3320 = pneg %p530
      $region114: #{vit_forward.1} parent=111 // pred_check_branch
        %3322 = sbr.rel (%p3320) target = $region116
      $region115: #{vit_forward.1} parent=111 // pred_region
        %p3323 = scmp.lt.s32.totalorder %s36, 1
        %s3324 = scalar_select %p3323, %s36, 1
        %s3325 = scalar_lea.vmem %s19, %s3324
      $region116: #{vit_forward.1} parent=111 // pred_fallthru
        _
    $region112: #{vit_forward.1} parent=5 // pred_fallthru
      _
  $region6: #{vit_forward.1} parent=0 // loop_footer
    %s29 = sadd.s32 1, %s25
  $region7: #{vit_forward.1} parent=0 // loop_footer_branch
    %24 = sbr.rel target = $region3
  $region8: #{vit_forward.1} parent=0 // loop_exit
    _

</llo_original>
